<compile_context>
chip_gen: v6e
topology: v6e:2x2x1
jax: 0.10.0
libtpu: 0.0.40
codegen_flags: <defaults>
</compile_context>

<pallas_src>
import functools

import jax
import jax.numpy as jnp
import numpy as np
from jax.experimental import pallas as pl
from jax.experimental.pallas import tpu as pltpu


def _round_up(x, m):
    return ((x + m - 1) // m) * m


def _vmem_capacity_bytes():
    try:
        return int(pltpu.get_tpu_info().vmem_capacity_bytes)
    except Exception:
        return 64 << 20          # conservative fallback (v7x per-core VMEM)


def make_lstm_kernel(num_layers, hidden_pad, t_chunk, b_tile,
                     n_valid_steps, n_total_steps):
    L = num_layers
    Hp = hidden_pad
    needs_mask = (n_valid_steps != n_total_steps)

    # Explicit unroll of the time loop (LLO visibility across steps).
    if t_chunk <= 8:
        unroll = t_chunk
    elif t_chunk % 4 == 0:
        unroll = 4
    elif t_chunk % 2 == 0:
        unroll = 2
    else:
        unroll = 1
    n_outer = t_chunk // unroll

    def kernel(*refs):
        x_ref = refs[0]
        idx = 1
        w_ih, w_hh, b_g = [], [], []
        for _ in range(L):
            w_ih.append(refs[idx])
            w_hh.append(refs[idx + 1])
            b_g.append(refs[idx + 2])
            idx += 3
        w_fc1_ref, b_fc1_ref, w_fc2_ref, b_fc2_ref = refs[idx:idx + 4]
        idx += 4
        out_ref = refs[idx]
        idx += 1
        xproj_sc = refs[idx]
        idx += 1
        h_sc = list(refs[idx:idx + L])
        idx += L
        c_sc = list(refs[idx:idx + L])

        t_blk = pl.program_id(1)
        last_blk = pl.num_programs(1) - 1

        # New batch tile -> zero the recurrent state.
        @pl.when(t_blk == 0)
        def _():
            for l in range(L):
                h_sc[l][...] = jnp.zeros_like(h_sc[l])
                c_sc[l][...] = jnp.zeros_like(c_sc[l])

        # ---- layer-0 input projection, hoisted out of the recurrence -------
        # One big MXU GEMM per chunk; bias folded in; staged in bf16 VMEM.
        proj = jnp.dot(x_ref[...], w_ih[0][...],
                       preferred_element_type=jnp.float32) + b_g[0][...]
        xproj_sc[...] = proj.astype(xproj_sc.dtype)

        hs = tuple(h_sc[l][...] for l in range(L))   # bf16
        cs = tuple(c_sc[l][...] for l in range(L))   # f32

        def step(t, carry):
            hs, cs = carry
            if needs_mask:
                valid = (t_blk * t_chunk + t) < n_valid_steps
            off = pl.multiple_of(t * b_tile, b_tile)
            new_h, new_c = [], []
            inp = None
            for l in range(L):
                if l == 0:
                    gates = (xproj_sc[pl.ds(off, b_tile), :].astype(jnp.float32)
                             + jnp.dot(hs[0], w_hh[0][...],
                                       preferred_element_type=jnp.float32))
                else:
                    gates = (jnp.dot(inp, w_ih[l][...],
                                     preferred_element_type=jnp.float32)
                             + jnp.dot(hs[l], w_hh[l][...],
                                       preferred_element_type=jnp.float32)
                             + b_g[l][...])
                # Whole-vreg gate slices (Hp is a multiple of 128).
                i_g = jax.nn.sigmoid(gates[:, 0:Hp])
                f_g = jax.nn.sigmoid(gates[:, Hp:2 * Hp])
                g_g = jnp.tanh(gates[:, 2 * Hp:3 * Hp])
                o_g = jax.nn.sigmoid(gates[:, 3 * Hp:4 * Hp])
                c_new = f_g * cs[l] + i_g * g_g
                h_new = (o_g * jnp.tanh(c_new)).astype(jnp.bfloat16)
                if needs_mask:
                    h_new = jnp.where(valid, h_new, hs[l])
                    c_new = jnp.where(valid, c_new, cs[l])
                new_h.append(h_new)
                new_c.append(c_new)
                inp = h_new
            return tuple(new_h), tuple(new_c)

        def unrolled(i, carry):
            for j in range(unroll):
                carry = step(i * unroll + j, carry)
            return carry

        hs, cs = jax.lax.fori_loop(0, n_outer, unrolled, (hs, cs))

        # Persist recurrent state for the next time chunk.
        for l in range(L):
            h_sc[l][...] = hs[l]
            c_sc[l][...] = cs[l]

        # fc head only on the last time chunk; output is lane-dense (padded).
        @pl.when(t_blk == last_blk)
        def _():
            top = hs[L - 1]                                  # (b_tile, Hp) bf16
            fc1 = jnp.maximum(
                jnp.dot(top, w_fc1_ref[...],
                        preferred_element_type=jnp.float32) + b_fc1_ref[...],
                0.0)
            out = (jnp.dot(fc1.astype(jnp.bfloat16), w_fc2_ref[...],
                           preferred_element_type=jnp.float32)
                   + b_fc2_ref[...])
            out_ref[...] = out.astype(out_ref.dtype)

    return kernel


def init_params(key, input_dim, hidden_dim, output_dim, num_layers):
    """Deterministic PyTorch-style uniform(-1/sqrt(H), 1/sqrt(H)) init."""
    H = hidden_dim
    bound = 1.0 / np.sqrt(H)
    params = {"layers": []}
    for l in range(num_layers):
        d_in = input_dim if l == 0 else H
        key, k1, k2, k3, k4 = jax.random.split(key, 5)
        w_ih = jax.random.uniform(k1, (4 * H, d_in), jnp.float32, -bound, bound)
        w_hh = jax.random.uniform(k2, (4 * H, H), jnp.float32, -bound, bound)
        b_ih = jax.random.uniform(k3, (4 * H,), jnp.float32, -bound, bound)
        b_hh = jax.random.uniform(k4, (4 * H,), jnp.float32, -bound, bound)
        params["layers"].append(
            (w_ih.T, w_hh.T, (b_ih + b_hh).reshape(1, 4 * H)))
    key, k1, k2, k3, k4 = jax.random.split(key, 5)
    b1 = 1.0 / np.sqrt(H)
    w_fc1 = jax.random.uniform(k1, (H, H), jnp.float32, -b1, b1)
    b_fc1 = jax.random.uniform(k2, (H,), jnp.float32, -b1, b1)
    w_fc2 = jax.random.uniform(k3, (output_dim, H), jnp.float32, -b1, b1)
    b_fc2 = jax.random.uniform(k4, (output_dim,), jnp.float32, -b1, b1)
    params["w_fc1_t"] = w_fc1.T
    params["b_fc1"] = b_fc1.reshape(1, H)
    params["w_fc2_t"] = w_fc2.T
    params["b_fc2"] = b_fc2.reshape(1, output_dim)
    return params


def prepare_kernel_params(params, hidden_dim, output_dim):
    """Pad each gate block to Hp=round_up(H,128) lanes, keep W_ih / W_hh
    separate (no concat), cast MXU operands to bf16, biases f32, pad the fc
    head to 128-lane-dense shapes."""
    H = hidden_dim
    Hp = _round_up(H, 128)
    out_pad = _round_up(output_dim, 128)

    def pad_gate_cols(w):                        # (R, 4H) -> (R, 4Hp)
        r = w.shape[0]
        w4 = w.reshape(r, 4, H)
        return (jnp.zeros((r, 4, Hp), w.dtype).at[:, :, :H].set(w4)
                .reshape(r, 4 * Hp))

    def pad_rows(w, rows):                       # (r, C) -> (rows, C)
        return jnp.zeros((rows, w.shape[1]), w.dtype).at[:w.shape[0], :].set(w)

    kp = []
    for l, (w_ih_t, w_hh_t, b) in enumerate(params["layers"]):
        w_ih_p = pad_gate_cols(w_ih_t)
        if l > 0:
            w_ih_p = pad_rows(w_ih_p, Hp)        # hidden input is lane-padded
        w_hh_p = pad_rows(pad_gate_cols(w_hh_t), Hp)
        kp.append(w_ih_p.astype(jnp.bfloat16))   # (D_l or Hp, 4Hp) bf16
        kp.append(w_hh_p.astype(jnp.bfloat16))   # (Hp, 4Hp) bf16
        kp.append(pad_gate_cols(b).astype(jnp.float32))   # (1, 4Hp) f32
    w_fc1_p = jnp.zeros((Hp, Hp), jnp.float32).at[:H, :H].set(params["w_fc1_t"])
    b_fc1_p = jnp.zeros((1, Hp), jnp.float32).at[:, :H].set(params["b_fc1"])
    w_fc2_p = jnp.zeros((Hp, out_pad), jnp.float32).at[:H, :output_dim].set(
        params["w_fc2_t"])
    b_fc2_p = jnp.zeros((1, out_pad), jnp.float32).at[:, :output_dim].set(
        params["b_fc2"])
    kp.append(w_fc1_p.astype(jnp.bfloat16))      # (Hp, Hp) bf16
    kp.append(b_fc1_p)                           # (1, Hp) f32
    kp.append(w_fc2_p.astype(jnp.bfloat16))      # (Hp, out_pad) bf16
    kp.append(b_fc2_p)                           # (1, out_pad) f32
    return tuple(kp)


@functools.partial(jax.jit,
                   static_argnames=("hidden_dim", "num_layers", "output_dim"))
def lstm_forward(x, kernel_params, *, hidden_dim, num_layers, output_dim):
    B, T, D = x.shape
    L = num_layers
    Hp = _round_up(hidden_dim, 128)
    out_pad = kernel_params[-1].shape[1]
    vmem_cap = _vmem_capacity_bytes()

    # Batch tile: multiple of 16 (bf16 sublane packing), <= 128 rows.
    # TODO(synk): on v7x prefer nb >= 2 (e.g. B=128 -> two 64-row tiles) so the
    # "parallel" batch axis feeds both TensorCores.
    b_tile = min(128, _round_up(B, 16))
    b_pad = _round_up(B, b_tile)
    nb = b_pad // b_tile

    # Time chunk: large (amortizes ~0.35us/grid-step), shrunk only if the f32
    # projection transient + bf16 staging scratch would crowd VMEM.
    t_chunk = min(T, 128)
    while t_chunk > 8 and t_chunk * b_tile * 4 * Hp * 6 > vmem_cap // 4:
        t_chunk = max(8, (t_chunk + 1) // 2)
    t_pad = _round_up(T, t_chunk)
    nt = t_pad // t_chunk

    # Pad batch/time, then lay x out as (nb, T_pad*b_tile, D): each chunk DMA
    # is ONE contiguous run of t_chunk*b_tile*D elements, even when nb > 1.
    xp = x
    if b_pad != B or t_pad != T:
        xp = jnp.pad(xp, ((0, b_pad - B), (0, t_pad - T), (0, 0)))
    xt = (xp.reshape(nb, b_tile, t_pad, D)
          .transpose(0, 2, 1, 3)                  # (nb, T_pad, b_tile, D)
          .reshape(nb, t_pad * b_tile, D)
          .astype(jnp.bfloat16))

    in_specs = [pl.BlockSpec((None, t_chunk * b_tile, D),
                             lambda b, t: (b, t, 0))]
    for p in kernel_params:
        # Full-array blocks, constant index map -> weights stay VMEM-resident.
        # TODO(synk): pipeline_mode=pl.Buffered(1) would halve the resident
        # weight footprint on v7x (64 MiB VMEM); left default for portability.
        in_specs.append(pl.BlockSpec(p.shape, lambda b, t: (0, 0)))
    out_specs = pl.BlockSpec((b_tile, out_pad), lambda b, t: (b, 0))

    scratch_shapes = (
        [pltpu.VMEM((t_chunk * b_tile, 4 * Hp), jnp.bfloat16)]          # xproj
        + [pltpu.VMEM((b_tile, Hp), jnp.bfloat16) for _ in range(L)]    # h
        + [pltpu.VMEM((b_tile, Hp), jnp.float32) for _ in range(L)])    # c

    weight_bytes = sum(int(np.prod(p.shape)) * p.dtype.itemsize
                       for p in kernel_params)
    est = (2 * t_chunk * b_tile * D * 2          # double-buffered x chunk
           + t_chunk * b_tile * 4 * Hp * 6       # f32 proj transient + bf16 stage
           + 2 * weight_bytes                    # resident weights (2 bufs)
           + L * b_tile * Hp * 6                 # h (bf16) + c (f32) scratch
           + 2 * b_tile * out_pad * 4            # output block
           + (8 << 20))                          # headroom
    vmem_limit = int(min(max(est, 32 << 20), int(vmem_cap * 0.78)))

    kernel = make_lstm_kernel(L, Hp, t_chunk, b_tile, T, t_pad)
    out = pl.pallas_call(
        kernel,
        out_shape=jax.ShapeDtypeStruct((b_pad, out_pad), jnp.float32),
        grid=(nb, nt),
        in_specs=in_specs,
        out_specs=out_specs,
        scratch_shapes=scratch_shapes,
        compiler_params=pltpu.CompilerParams(
            dimension_semantics=("parallel", "arbitrary"),
            vmem_limit_bytes=vmem_limit),
    )(xt, *kernel_params)
    return out[:B, :output_dim]


def reference_forward(x, params, hidden_dim, num_layers, seq_len, output_dim):
    """Pure-JAX f32 reference (same math) for a sanity check."""
    B = x.shape[0]
    H = hidden_dim
    h = jnp.zeros((num_layers, B, H), jnp.float32)
    c = jnp.zeros((num_layers, B, H), jnp.float32)
    for t in range(seq_len):
        inp = x[:, t, :]
        new_h, new_c = [], []
        for l in range(num_layers):
            w_ih_t, w_hh_t, b = params["layers"][l]
            g = inp @ w_ih_t + h[l] @ w_hh_t + b
            i_g = jax.nn.sigmoid(g[:, :H])
            f_g = jax.nn.sigmoid(g[:, H:2 * H])
            g_g = jnp.tanh(g[:, 2 * H:3 * H])
            o_g = jax.nn.sigmoid(g[:, 3 * H:])
            cn = f_g * c[l] + i_g * g_g
            hn = o_g * jnp.tanh(cn)
            new_h.append(hn)
            new_c.append(cn)
            inp = hn
        h = jnp.stack(new_h, 0)
        c = jnp.stack(new_c, 0)
    top = h[-1]
    fc1 = jnp.maximum(top @ params["w_fc1_t"] + params["b_fc1"], 0.0)
    return fc1 @ params["w_fc2_t"] + params["b_fc2"]


if __name__ == "__main__":
    # Small shapes consistent with the module's forward.
    batch, seq_len = 2, 8
    input_dim, hidden_dim, output_dim, num_layers = 4, 32, 4, 2

    key = jax.random.PRNGKey(0)
    key, kx = jax.random.split(key)
    x = jax.random.normal(kx, (batch, seq_len, input_dim), jnp.float32)

    params = init_params(key, input_dim, hidden_dim, output_dim, num_layers)
    kparams = prepare_kernel_params(params, hidden_dim, output_dim)

    out = lstm_forward(
        x, kparams,
        hidden_dim=hidden_dim, num_layers=num_layers, output_dim=output_dim,
    )
    out = jax.block_until_ready(out)

    ref = reference_forward(x, params, hidden_dim, num_layers, seq_len,
                            output_dim)
    # bf16 MXU operands / bf16 h state (f32 accumulation) -> small drift vs f32.
    np.testing.assert_allclose(np.asarray(out), np.asarray(ref),
                               rtol=3e-2, atol=3e-2)

    print("KERNEL_OK")
</pallas_src>

<mosaic_0001>
module attributes {stable_mosaic.version = 11 : i64} {
  func.func @kernel(%arg0: i32, %arg1: i32, %arg2: memref<1x128x4xbf16, #tpu.memory_space<vmem>>, %arg3: memref<4x512xbf16, #tpu.memory_space<vmem>>, %arg4: memref<128x512xbf16, #tpu.memory_space<vmem>>, %arg5: memref<1x512xf32, #tpu.memory_space<vmem>>, %arg6: memref<128x512xbf16, #tpu.memory_space<vmem>>, %arg7: memref<128x512xbf16, #tpu.memory_space<vmem>>, %arg8: memref<1x512xf32, #tpu.memory_space<vmem>>, %arg9: memref<128x128xbf16, #tpu.memory_space<vmem>>, %arg10: memref<1x128xf32, #tpu.memory_space<vmem>>, %arg11: memref<128x128xbf16, #tpu.memory_space<vmem>>, %arg12: memref<1x128xf32, #tpu.memory_space<vmem>>, %arg13: memref<16x128xf32, #tpu.memory_space<vmem>>, %arg14: memref<128x512xbf16, #tpu.memory_space<vmem>>, %arg15: memref<16x128xbf16, #tpu.memory_space<vmem>>, %arg16: memref<16x128xbf16, #tpu.memory_space<vmem>>, %arg17: memref<16x128xf32, #tpu.memory_space<vmem>>, %arg18: memref<16x128xf32, #tpu.memory_space<vmem>>) attributes {dimension_semantics = [#tpu.dimension_semantics<parallel>, #tpu.dimension_semantics<arbitrary>], iteration_bounds = array<i64: 1, 1>, scalar_prefetch = 0 : i64, scratch_operands = 5 : i64, tpu.core_type = #tpu.core_type<tc>, window_params = [{transform_indices = @transform_0, window_bounds = array<i64: 1, 128, 4>}, {pipeline_mode = #tpu.pipeline_mode<synchronous>, transform_indices = @transform_1, window_bounds = array<i64: 4, 512>}, {pipeline_mode = #tpu.pipeline_mode<synchronous>, transform_indices = @transform_2, window_bounds = array<i64: 128, 512>}, {pipeline_mode = #tpu.pipeline_mode<synchronous>, transform_indices = @transform_3, window_bounds = array<i64: 1, 512>}, {pipeline_mode = #tpu.pipeline_mode<synchronous>, transform_indices = @transform_4, window_bounds = array<i64: 128, 512>}, {pipeline_mode = #tpu.pipeline_mode<synchronous>, transform_indices = @transform_5, window_bounds = array<i64: 128, 512>}, {pipeline_mode = #tpu.pipeline_mode<synchronous>, transform_indices = @transform_6, window_bounds = array<i64: 1, 512>}, {pipeline_mode = #tpu.pipeline_mode<synchronous>, transform_indices = @transform_7, window_bounds = array<i64: 128, 128>}, {pipeline_mode = #tpu.pipeline_mode<synchronous>, transform_indices = @transform_8, window_bounds = array<i64: 1, 128>}, {pipeline_mode = #tpu.pipeline_mode<synchronous>, transform_indices = @transform_9, window_bounds = array<i64: 128, 128>}, {pipeline_mode = #tpu.pipeline_mode<synchronous>, transform_indices = @transform_10, window_bounds = array<i64: 1, 128>}, {transform_indices = @transform_11, window_bounds = array<i64: 16, 128>}]} {
    %c0_i32 = arith.constant 0 : i32
    %0 = arith.cmpi eq, %arg1, %c0_i32 : i32
    %1 = arith.extui %0 : i1 to i32
    %c0_i32_0 = arith.constant 0 : i32
    %2 = arith.cmpi ne, %1, %c0_i32_0 : i32
    scf.if %2 {
      %cst_188 = arith.constant 0.000000e+00 : bf16
      %583 = vector.broadcast %cst_188 : bf16 to vector<16x128xbf16>
      %c0_189 = arith.constant 0 : index
      %c0_190 = arith.constant 0 : index
      %584 = vector.load %arg15[%c0_189, %c0_190] : memref<16x128xbf16, #tpu.memory_space<vmem>>, vector<16x128xbf16>
      tpu.vector_store %arg15[%c0_189, %c0_190], %583 {strides = array<i32>} : memref<16x128xbf16, #tpu.memory_space<vmem>>, vector<16x128xbf16>,
      %cst_191 = arith.constant 0.000000e+00 : f32
      %585 = vector.broadcast %cst_191 : f32 to vector<16x128xf32>
      %c0_192 = arith.constant 0 : index
      %c0_193 = arith.constant 0 : index
      %586 = vector.load %arg17[%c0_192, %c0_193] : memref<16x128xf32, #tpu.memory_space<vmem>>, vector<16x128xf32>
      tpu.vector_store %arg17[%c0_192, %c0_193], %585 {strides = array<i32>} : memref<16x128xf32, #tpu.memory_space<vmem>>, vector<16x128xf32>,
      %cst_194 = arith.constant 0.000000e+00 : bf16
      %587 = vector.broadcast %cst_194 : bf16 to vector<16x128xbf16>
      %c0_195 = arith.constant 0 : index
      %c0_196 = arith.constant 0 : index
      %588 = vector.load %arg16[%c0_195, %c0_196] : memref<16x128xbf16, #tpu.memory_space<vmem>>, vector<16x128xbf16>
      tpu.vector_store %arg16[%c0_195, %c0_196], %587 {strides = array<i32>} : memref<16x128xbf16, #tpu.memory_space<vmem>>, vector<16x128xbf16>,
      %cst_197 = arith.constant 0.000000e+00 : f32
      %589 = vector.broadcast %cst_197 : f32 to vector<16x128xf32>
      %c0_198 = arith.constant 0 : index
      %c0_199 = arith.constant 0 : index
      %590 = vector.load %arg18[%c0_198, %c0_199] : memref<16x128xf32, #tpu.memory_space<vmem>>, vector<16x128xf32>
      tpu.vector_store %arg18[%c0_198, %c0_199], %589 {strides = array<i32>} : memref<16x128xf32, #tpu.memory_space<vmem>>, vector<16x128xf32>,
    } else {
    }
    %c0 = arith.constant 0 : index
    %c0_1 = arith.constant 0 : index
    %c0_2 = arith.constant 0 : index
    %3 = vector.load %arg2[%c0, %c0_1, %c0_2] : memref<1x128x4xbf16, #tpu.memory_space<vmem>>, vector<1x128x4xbf16>
    %4 = vector.shape_cast %3 : vector<1x128x4xbf16> to vector<128x4xbf16>
    %c0_3 = arith.constant 0 : index
    %c0_4 = arith.constant 0 : index
    %5 = vector.load %arg3[%c0_3, %c0_4] : memref<4x512xbf16, #tpu.memory_space<vmem>>, vector<4x512xbf16>
    %cst = arith.constant dense<0.000000e+00> : vector<128x512xf32>
    %6 = tpu.matmul %4, %5, %cst {dimension_numbers = #tpu.dot_dimension_numbers<[1], [0], [0], [1], [0, 0, 1, 1], [], []>} : vector<128x4xbf16>, vector<4x512xbf16>, vector<128x512xf32> -> vector<128x512xf32>
    %c0_5 = arith.constant 0 : index
    %c0_6 = arith.constant 0 : index
    %7 = vector.load %arg5[%c0_5, %c0_6] : memref<1x512xf32, #tpu.memory_space<vmem>>, vector<1x512xf32>
    %8 = vector.broadcast %7 : vector<1x512xf32> to vector<128x512xf32>
    %9 = arith.addf %6, %8 : vector<128x512xf32>
    %10 = arith.truncf %9 : vector<128x512xf32> to vector<128x512xbf16>
    %c0_7 = arith.constant 0 : index
    %c0_8 = arith.constant 0 : index
    %11 = vector.load %arg14[%c0_7, %c0_8] : memref<128x512xbf16, #tpu.memory_space<vmem>>, vector<128x512xbf16>
    tpu.vector_store %arg14[%c0_7, %c0_8], %10 {strides = array<i32>} : memref<128x512xbf16, #tpu.memory_space<vmem>>, vector<128x512xbf16>,
    %c0_9 = arith.constant 0 : index
    %c0_10 = arith.constant 0 : index
    %12 = vector.load %arg15[%c0_9, %c0_10] : memref<16x128xbf16, #tpu.memory_space<vmem>>, vector<16x128xbf16>
    %c0_11 = arith.constant 0 : index
    %c0_12 = arith.constant 0 : index
    %13 = vector.load %arg16[%c0_11, %c0_12] : memref<16x128xbf16, #tpu.memory_space<vmem>>, vector<16x128xbf16>
    %c0_13 = arith.constant 0 : index
    %c0_14 = arith.constant 0 : index
    %14 = vector.load %arg17[%c0_13, %c0_14] : memref<16x128xf32, #tpu.memory_space<vmem>>, vector<16x128xf32>
    %c0_15 = arith.constant 0 : index
    %c0_16 = arith.constant 0 : index
    %15 = vector.load %arg18[%c0_15, %c0_16] : memref<16x128xf32, #tpu.memory_space<vmem>>, vector<16x128xf32>
    %c0_i32_17 = arith.constant 0 : i32
    %c8_i32 = arith.constant 8 : i32
    %16 = arith.muli %c0_i32_17, %c8_i32 : i32
    %c0_i32_18 = arith.constant 0 : i32
    %17 = arith.addi %16, %c0_i32_18 : i32
    %c16_i32 = arith.constant 16 : i32
    %18 = arith.muli %17, %c16_i32 : i32
    %19 = tpu.assume_multiple %18, 16 : i32
    %20 = arith.index_cast %19 : i32 to index
    %c0_19 = arith.constant 0 : index
    %21 = vector.load %arg14[%20, %c0_19] : memref<128x512xbf16, #tpu.memory_space<vmem>>, vector<16x512xbf16>
    %22 = arith.extf %21 : vector<16x512xbf16> to vector<16x512xf32>
    %c0_20 = arith.constant 0 : index
    %c0_21 = arith.constant 0 : index
    %23 = vector.load %arg4[%c0_20, %c0_21] : memref<128x512xbf16, #tpu.memory_space<vmem>>, vector<128x512xbf16>
    %cst_22 = arith.constant dense<0.000000e+00> : vector<16x512xf32>
    %24 = tpu.matmul %12, %23, %cst_22 {dimension_numbers = #tpu.dot_dimension_numbers<[1], [0], [0], [1], [0, 0, 1, 1], [], []>} : vector<16x128xbf16>, vector<128x512xbf16>, vector<16x512xf32> -> vector<16x512xf32>
    %25 = arith.addf %22, %24 : vector<16x512xf32>
    %26 = vector.extract_strided_slice %25 {offsets = [0, 0], sizes = [16, 128], strides = [1, 1]} : vector<16x512xf32> to vector<16x128xf32>
    %27 = arith.negf %26 : vector<16x128xf32>
    %28 = math.exp %27 : vector<16x128xf32>
    %cst_23 = arith.constant 1.000000e+00 : f32
    %29 = vector.broadcast %cst_23 : f32 to vector<16x128xf32>
    %30 = arith.addf %29, %28 : vector<16x128xf32>
    %31 = arith.divf %29, %30 : vector<16x128xf32>
    %32 = vector.extract_strided_slice %25 {offsets = [0, 128], sizes = [16, 128], strides = [1, 1]} : vector<16x512xf32> to vector<16x128xf32>
    %33 = arith.negf %32 : vector<16x128xf32>
    %34 = math.exp %33 : vector<16x128xf32>
    %cst_24 = arith.constant 1.000000e+00 : f32
    %35 = vector.broadcast %cst_24 : f32 to vector<16x128xf32>
    %36 = arith.addf %35, %34 : vector<16x128xf32>
    %37 = arith.divf %35, %36 : vector<16x128xf32>
    %38 = vector.extract_strided_slice %25 {offsets = [0, 256], sizes = [16, 128], strides = [1, 1]} : vector<16x512xf32> to vector<16x128xf32>
    %39 = math.tanh %38 : vector<16x128xf32>
    %40 = vector.extract_strided_slice %25 {offsets = [0, 384], sizes = [16, 128], strides = [1, 1]} : vector<16x512xf32> to vector<16x128xf32>
    %41 = arith.negf %40 : vector<16x128xf32>
    %42 = math.exp %41 : vector<16x128xf32>
    %cst_25 = arith.constant 1.000000e+00 : f32
    %43 = vector.broadcast %cst_25 : f32 to vector<16x128xf32>
    %44 = arith.addf %43, %42 : vector<16x128xf32>
    %45 = arith.divf %43, %44 : vector<16x128xf32>
    %46 = arith.mulf %37, %14 : vector<16x128xf32>
    %47 = arith.mulf %31, %39 : vector<16x128xf32>
    %48 = arith.addf %46, %47 : vector<16x128xf32>
    %49 = math.tanh %48 : vector<16x128xf32>
    %50 = arith.mulf %45, %49 : vector<16x128xf32>
    %51 = arith.truncf %50 : vector<16x128xf32> to vector<16x128xbf16>
    %c0_26 = arith.constant 0 : index
    %c0_27 = arith.constant 0 : index
    %52 = vector.load %arg6[%c0_26, %c0_27] : memref<128x512xbf16, #tpu.memory_space<vmem>>, vector<128x512xbf16>
    %cst_28 = arith.constant dense<0.000000e+00> : vector<16x512xf32>
    %53 = tpu.matmul %51, %52, %cst_28 {dimension_numbers = #tpu.dot_dimension_numbers<[1], [0], [0], [1], [0, 0, 1, 1], [], []>} : vector<16x128xbf16>, vector<128x512xbf16>, vector<16x512xf32> -> vector<16x512xf32>
    %c0_29 = arith.constant 0 : index
    %c0_30 = arith.constant 0 : index
    %54 = vector.load %arg7[%c0_29, %c0_30] : memref<128x512xbf16, #tpu.memory_space<vmem>>, vector<128x512xbf16>
    %cst_31 = arith.constant dense<0.000000e+00> : vector<16x512xf32>
    %55 = tpu.matmul %13, %54, %cst_31 {dimension_numbers = #tpu.dot_dimension_numbers<[1], [0], [0], [1], [0, 0, 1, 1], [], []>} : vector<16x128xbf16>, vector<128x512xbf16>, vector<16x512xf32> -> vector<16x512xf32>
    %56 = arith.addf %53, %55 : vector<16x512xf32>
    %c0_32 = arith.constant 0 : index
    %c0_33 = arith.constant 0 : index
    %57 = vector.load %arg8[%c0_32, %c0_33] : memref<1x512xf32, #tpu.memory_space<vmem>>, vector<1x512xf32>
    %58 = vector.broadcast %57 : vector<1x512xf32> to vector<16x512xf32>
    %59 = arith.addf %56, %58 : vector<16x512xf32>
    %60 = vector.extract_strided_slice %59 {offsets = [0, 0], sizes = [16, 128], strides = [1, 1]} : vector<16x512xf32> to vector<16x128xf32>
    %61 = arith.negf %60 : vector<16x128xf32>
    %62 = math.exp %61 : vector<16x128xf32>
    %cst_34 = arith.constant 1.000000e+00 : f32
    %63 = vector.broadcast %cst_34 : f32 to vector<16x128xf32>
    %64 = arith.addf %63, %62 : vector<16x128xf32>
    %65 = arith.divf %63, %64 : vector<16x128xf32>
    %66 = vector.extract_strided_slice %59 {offsets = [0, 128], sizes = [16, 128], strides = [1, 1]} : vector<16x512xf32> to vector<16x128xf32>
    %67 = arith.negf %66 : vector<16x128xf32>
    %68 = math.exp %67 : vector<16x128xf32>
    %cst_35 = arith.constant 1.000000e+00 : f32
    %69 = vector.broadcast %cst_35 : f32 to vector<16x128xf32>
    %70 = arith.addf %69, %68 : vector<16x128xf32>
    %71 = arith.divf %69, %70 : vector<16x128xf32>
    %72 = vector.extract_strided_slice %59 {offsets = [0, 256], sizes = [16, 128], strides = [1, 1]} : vector<16x512xf32> to vector<16x128xf32>
    %73 = math.tanh %72 : vector<16x128xf32>
    %74 = vector.extract_strided_slice %59 {offsets = [0, 384], sizes = [16, 128], strides = [1, 1]} : vector<16x512xf32> to vector<16x128xf32>
    %75 = arith.negf %74 : vector<16x128xf32>
    %76 = math.exp %75 : vector<16x128xf32>
    %cst_36 = arith.constant 1.000000e+00 : f32
    %77 = vector.broadcast %cst_36 : f32 to vector<16x128xf32>
    %78 = arith.addf %77, %76 : vector<16x128xf32>
    %79 = arith.divf %77, %78 : vector<16x128xf32>
    %80 = arith.mulf %71, %15 : vector<16x128xf32>
    %81 = arith.mulf %65, %73 : vector<16x128xf32>
    %82 = arith.addf %80, %81 : vector<16x128xf32>
    %83 = math.tanh %82 : vector<16x128xf32>
    %84 = arith.mulf %79, %83 : vector<16x128xf32>
    %85 = arith.truncf %84 : vector<16x128xf32> to vector<16x128xbf16>
    %c8_i32_37 = arith.constant 8 : i32
    %86 = arith.muli %c0_i32_17, %c8_i32_37 : i32
    %c1_i32 = arith.constant 1 : i32
    %87 = arith.addi %86, %c1_i32 : i32
    %c16_i32_38 = arith.constant 16 : i32
    %88 = arith.muli %87, %c16_i32_38 : i32
    %89 = tpu.assume_multiple %88, 16 : i32
    %90 = arith.index_cast %89 : i32 to index
    %c0_39 = arith.constant 0 : index
    %91 = vector.load %arg14[%90, %c0_39] : memref<128x512xbf16, #tpu.memory_space<vmem>>, vector<16x512xbf16>
    %92 = arith.extf %91 : vector<16x512xbf16> to vector<16x512xf32>
    %c0_40 = arith.constant 0 : index
    %c0_41 = arith.constant 0 : index
    %93 = vector.load %arg4[%c0_40, %c0_41] : memref<128x512xbf16, #tpu.memory_space<vmem>>, vector<128x512xbf16>
    %cst_42 = arith.constant dense<0.000000e+00> : vector<16x512xf32>
    %94 = tpu.matmul %51, %93, %cst_42 {dimension_numbers = #tpu.dot_dimension_numbers<[1], [0], [0], [1], [0, 0, 1, 1], [], []>} : vector<16x128xbf16>, vector<128x512xbf16>, vector<16x512xf32> -> vector<16x512xf32>
    %95 = arith.addf %92, %94 : vector<16x512xf32>
    %96 = vector.extract_strided_slice %95 {offsets = [0, 0], sizes = [16, 128], strides = [1, 1]} : vector<16x512xf32> to vector<16x128xf32>
    %97 = arith.negf %96 : vector<16x128xf32>
    %98 = math.exp %97 : vector<16x128xf32>
    %cst_43 = arith.constant 1.000000e+00 : f32
    %99 = vector.broadcast %cst_43 : f32 to vector<16x128xf32>
    %100 = arith.addf %99, %98 : vector<16x128xf32>
    %101 = arith.divf %99, %100 : vector<16x128xf32>
    %102 = vector.extract_strided_slice %95 {offsets = [0, 128], sizes = [16, 128], strides = [1, 1]} : vector<16x512xf32> to vector<16x128xf32>
    %103 = arith.negf %102 : vector<16x128xf32>
    %104 = math.exp %103 : vector<16x128xf32>
    %cst_44 = arith.constant 1.000000e+00 : f32
    %105 = vector.broadcast %cst_44 : f32 to vector<16x128xf32>
    %106 = arith.addf %105, %104 : vector<16x128xf32>
    %107 = arith.divf %105, %106 : vector<16x128xf32>
    %108 = vector.extract_strided_slice %95 {offsets = [0, 256], sizes = [16, 128], strides = [1, 1]} : vector<16x512xf32> to vector<16x128xf32>
    %109 = math.tanh %108 : vector<16x128xf32>
    %110 = vector.extract_strided_slice %95 {offsets = [0, 384], sizes = [16, 128], strides = [1, 1]} : vector<16x512xf32> to vector<16x128xf32>
    %111 = arith.negf %110 : vector<16x128xf32>
    %112 = math.exp %111 : vector<16x128xf32>
    %cst_45 = arith.constant 1.000000e+00 : f32
    %113 = vector.broadcast %cst_45 : f32 to vector<16x128xf32>
    %114 = arith.addf %113, %112 : vector<16x128xf32>
    %115 = arith.divf %113, %114 : vector<16x128xf32>
    %116 = arith.mulf %107, %48 : vector<16x128xf32>
    %117 = arith.mulf %101, %109 : vector<16x128xf32>
    %118 = arith.addf %116, %117 : vector<16x128xf32>
    %119 = math.tanh %118 : vector<16x128xf32>
    %120 = arith.mulf %115, %119 : vector<16x128xf32>
    %121 = arith.truncf %120 : vector<16x128xf32> to vector<16x128xbf16>
    %c0_46 = arith.constant 0 : index
    %c0_47 = arith.constant 0 : index
    %122 = vector.load %arg6[%c0_46, %c0_47] : memref<128x512xbf16, #tpu.memory_space<vmem>>, vector<128x512xbf16>
    %cst_48 = arith.constant dense<0.000000e+00> : vector<16x512xf32>
    %123 = tpu.matmul %121, %122, %cst_48 {dimension_numbers = #tpu.dot_dimension_numbers<[1], [0], [0], [1], [0, 0, 1, 1], [], []>} : vector<16x128xbf16>, vector<128x512xbf16>, vector<16x512xf32> -> vector<16x512xf32>
    %c0_49 = arith.constant 0 : index
    %c0_50 = arith.constant 0 : index
    %124 = vector.load %arg7[%c0_49, %c0_50] : memref<128x512xbf16, #tpu.memory_space<vmem>>, vector<128x512xbf16>
    %cst_51 = arith.constant dense<0.000000e+00> : vector<16x512xf32>
    %125 = tpu.matmul %85, %124, %cst_51 {dimension_numbers = #tpu.dot_dimension_numbers<[1], [0], [0], [1], [0, 0, 1, 1], [], []>} : vector<16x128xbf16>, vector<128x512xbf16>, vector<16x512xf32> -> vector<16x512xf32>
    %126 = arith.addf %123, %125 : vector<16x512xf32>
    %c0_52 = arith.constant 0 : index
    %c0_53 = arith.constant 0 : index
    %127 = vector.load %arg8[%c0_52, %c0_53] : memref<1x512xf32, #tpu.memory_space<vmem>>, vector<1x512xf32>
    %128 = vector.broadcast %127 : vector<1x512xf32> to vector<16x512xf32>
    %129 = arith.addf %126, %128 : vector<16x512xf32>
    %130 = vector.extract_strided_slice %129 {offsets = [0, 0], sizes = [16, 128], strides = [1, 1]} : vector<16x512xf32> to vector<16x128xf32>
    %131 = arith.negf %130 : vector<16x128xf32>
    %132 = math.exp %131 : vector<16x128xf32>
    %cst_54 = arith.constant 1.000000e+00 : f32
    %133 = vector.broadcast %cst_54 : f32 to vector<16x128xf32>
    %134 = arith.addf %133, %132 : vector<16x128xf32>
    %135 = arith.divf %133, %134 : vector<16x128xf32>
    %136 = vector.extract_strided_slice %129 {offsets = [0, 128], sizes = [16, 128], strides = [1, 1]} : vector<16x512xf32> to vector<16x128xf32>
    %137 = arith.negf %136 : vector<16x128xf32>
    %138 = math.exp %137 : vector<16x128xf32>
    %cst_55 = arith.constant 1.000000e+00 : f32
    %139 = vector.broadcast %cst_55 : f32 to vector<16x128xf32>
    %140 = arith.addf %139, %138 : vector<16x128xf32>
    %141 = arith.divf %139, %140 : vector<16x128xf32>
    %142 = vector.extract_strided_slice %129 {offsets = [0, 256], sizes = [16, 128], strides = [1, 1]} : vector<16x512xf32> to vector<16x128xf32>
    %143 = math.tanh %142 : vector<16x128xf32>
    %144 = vector.extract_strided_slice %129 {offsets = [0, 384], sizes = [16, 128], strides = [1, 1]} : vector<16x512xf32> to vector<16x128xf32>
    %145 = arith.negf %144 : vector<16x128xf32>
    %146 = math.exp %145 : vector<16x128xf32>
    %cst_56 = arith.constant 1.000000e+00 : f32
    %147 = vector.broadcast %cst_56 : f32 to vector<16x128xf32>
    %148 = arith.addf %147, %146 : vector<16x128xf32>
    %149 = arith.divf %147, %148 : vector<16x128xf32>
    %150 = arith.mulf %141, %82 : vector<16x128xf32>
    %151 = arith.mulf %135, %143 : vector<16x128xf32>
    %152 = arith.addf %150, %151 : vector<16x128xf32>
    %153 = math.tanh %152 : vector<16x128xf32>
    %154 = arith.mulf %149, %153 : vector<16x128xf32>
    %155 = arith.truncf %154 : vector<16x128xf32> to vector<16x128xbf16>
    %c8_i32_57 = arith.constant 8 : i32
    %156 = arith.muli %c0_i32_17, %c8_i32_57 : i32
    %c2_i32 = arith.constant 2 : i32
    %157 = arith.addi %156, %c2_i32 : i32
    %c16_i32_58 = arith.constant 16 : i32
    %158 = arith.muli %157, %c16_i32_58 : i32
    %159 = tpu.assume_multiple %158, 16 : i32
    %160 = arith.index_cast %159 : i32 to index
    %c0_59 = arith.constant 0 : index
    %161 = vector.load %arg14[%160, %c0_59] : memref<128x512xbf16, #tpu.memory_space<vmem>>, vector<16x512xbf16>
    %162 = arith.extf %161 : vector<16x512xbf16> to vector<16x512xf32>
    %c0_60 = arith.constant 0 : index
    %c0_61 = arith.constant 0 : index
    %163 = vector.load %arg4[%c0_60, %c0_61] : memref<128x512xbf16, #tpu.memory_space<vmem>>, vector<128x512xbf16>
    %cst_62 = arith.constant dense<0.000000e+00> : vector<16x512xf32>
    %164 = tpu.matmul %121, %163, %cst_62 {dimension_numbers = #tpu.dot_dimension_numbers<[1], [0], [0], [1], [0, 0, 1, 1], [], []>} : vector<16x128xbf16>, vector<128x512xbf16>, vector<16x512xf32> -> vector<16x512xf32>
    %165 = arith.addf %162, %164 : vector<16x512xf32>
    %166 = vector.extract_strided_slice %165 {offsets = [0, 0], sizes = [16, 128], strides = [1, 1]} : vector<16x512xf32> to vector<16x128xf32>
    %167 = arith.negf %166 : vector<16x128xf32>
    %168 = math.exp %167 : vector<16x128xf32>
    %cst_63 = arith.constant 1.000000e+00 : f32
    %169 = vector.broadcast %cst_63 : f32 to vector<16x128xf32>
    %170 = arith.addf %169, %168 : vector<16x128xf32>
    %171 = arith.divf %169, %170 : vector<16x128xf32>
    %172 = vector.extract_strided_slice %165 {offsets = [0, 128], sizes = [16, 128], strides = [1, 1]} : vector<16x512xf32> to vector<16x128xf32>
    %173 = arith.negf %172 : vector<16x128xf32>
    %174 = math.exp %173 : vector<16x128xf32>
    %cst_64 = arith.constant 1.000000e+00 : f32
    %175 = vector.broadcast %cst_64 : f32 to vector<16x128xf32>
    %176 = arith.addf %175, %174 : vector<16x128xf32>
    %177 = arith.divf %175, %176 : vector<16x128xf32>
    %178 = vector.extract_strided_slice %165 {offsets = [0, 256], sizes = [16, 128], strides = [1, 1]} : vector<16x512xf32> to vector<16x128xf32>
    %179 = math.tanh %178 : vector<16x128xf32>
    %180 = vector.extract_strided_slice %165 {offsets = [0, 384], sizes = [16, 128], strides = [1, 1]} : vector<16x512xf32> to vector<16x128xf32>
    %181 = arith.negf %180 : vector<16x128xf32>
    %182 = math.exp %181 : vector<16x128xf32>
    %cst_65 = arith.constant 1.000000e+00 : f32
    %183 = vector.broadcast %cst_65 : f32 to vector<16x128xf32>
    %184 = arith.addf %183, %182 : vector<16x128xf32>
    %185 = arith.divf %183, %184 : vector<16x128xf32>
    %186 = arith.mulf %177, %118 : vector<16x128xf32>
    %187 = arith.mulf %171, %179 : vector<16x128xf32>
    %188 = arith.addf %186, %187 : vector<16x128xf32>
    %189 = math.tanh %188 : vector<16x128xf32>
    %190 = arith.mulf %185, %189 : vector<16x128xf32>
    %191 = arith.truncf %190 : vector<16x128xf32> to vector<16x128xbf16>
    %c0_66 = arith.constant 0 : index
    %c0_67 = arith.constant 0 : index
    %192 = vector.load %arg6[%c0_66, %c0_67] : memref<128x512xbf16, #tpu.memory_space<vmem>>, vector<128x512xbf16>
    %cst_68 = arith.constant dense<0.000000e+00> : vector<16x512xf32>
    %193 = tpu.matmul %191, %192, %cst_68 {dimension_numbers = #tpu.dot_dimension_numbers<[1], [0], [0], [1], [0, 0, 1, 1], [], []>} : vector<16x128xbf16>, vector<128x512xbf16>, vector<16x512xf32> -> vector<16x512xf32>
    %c0_69 = arith.constant 0 : index
    %c0_70 = arith.constant 0 : index
    %194 = vector.load %arg7[%c0_69, %c0_70] : memref<128x512xbf16, #tpu.memory_space<vmem>>, vector<128x512xbf16>
    %cst_71 = arith.constant dense<0.000000e+00> : vector<16x512xf32>
    %195 = tpu.matmul %155, %194, %cst_71 {dimension_numbers = #tpu.dot_dimension_numbers<[1], [0], [0], [1], [0, 0, 1, 1], [], []>} : vector<16x128xbf16>, vector<128x512xbf16>, vector<16x512xf32> -> vector<16x512xf32>
    %196 = arith.addf %193, %195 : vector<16x512xf32>
    %c0_72 = arith.constant 0 : index
    %c0_73 = arith.constant 0 : index
    %197 = vector.load %arg8[%c0_72, %c0_73] : memref<1x512xf32, #tpu.memory_space<vmem>>, vector<1x512xf32>
    %198 = vector.broadcast %197 : vector<1x512xf32> to vector<16x512xf32>
    %199 = arith.addf %196, %198 : vector<16x512xf32>
    %200 = vector.extract_strided_slice %199 {offsets = [0, 0], sizes = [16, 128], strides = [1, 1]} : vector<16x512xf32> to vector<16x128xf32>
    %201 = arith.negf %200 : vector<16x128xf32>
    %202 = math.exp %201 : vector<16x128xf32>
    %cst_74 = arith.constant 1.000000e+00 : f32
    %203 = vector.broadcast %cst_74 : f32 to vector<16x128xf32>
    %204 = arith.addf %203, %202 : vector<16x128xf32>
    %205 = arith.divf %203, %204 : vector<16x128xf32>
    %206 = vector.extract_strided_slice %199 {offsets = [0, 128], sizes = [16, 128], strides = [1, 1]} : vector<16x512xf32> to vector<16x128xf32>
    %207 = arith.negf %206 : vector<16x128xf32>
    %208 = math.exp %207 : vector<16x128xf32>
    %cst_75 = arith.constant 1.000000e+00 : f32
    %209 = vector.broadcast %cst_75 : f32 to vector<16x128xf32>
    %210 = arith.addf %209, %208 : vector<16x128xf32>
    %211 = arith.divf %209, %210 : vector<16x128xf32>
    %212 = vector.extract_strided_slice %199 {offsets = [0, 256], sizes = [16, 128], strides = [1, 1]} : vector<16x512xf32> to vector<16x128xf32>
    %213 = math.tanh %212 : vector<16x128xf32>
    %214 = vector.extract_strided_slice %199 {offsets = [0, 384], sizes = [16, 128], strides = [1, 1]} : vector<16x512xf32> to vector<16x128xf32>
    %215 = arith.negf %214 : vector<16x128xf32>
    %216 = math.exp %215 : vector<16x128xf32>
    %cst_76 = arith.constant 1.000000e+00 : f32
    %217 = vector.broadcast %cst_76 : f32 to vector<16x128xf32>
    %218 = arith.addf %217, %216 : vector<16x128xf32>
    %219 = arith.divf %217, %218 : vector<16x128xf32>
    %220 = arith.mulf %211, %152 : vector<16x128xf32>
    %221 = arith.mulf %205, %213 : vector<16x128xf32>
    %222 = arith.addf %220, %221 : vector<16x128xf32>
    %223 = math.tanh %222 : vector<16x128xf32>
    %224 = arith.mulf %219, %223 : vector<16x128xf32>
    %225 = arith.truncf %224 : vector<16x128xf32> to vector<16x128xbf16>
    %c8_i32_77 = arith.constant 8 : i32
    %226 = arith.muli %c0_i32_17, %c8_i32_77 : i32
    %c3_i32 = arith.constant 3 : i32
    %227 = arith.addi %226, %c3_i32 : i32
    %c16_i32_78 = arith.constant 16 : i32
    %228 = arith.muli %227, %c16_i32_78 : i32
    %229 = tpu.assume_multiple %228, 16 : i32
    %230 = arith.index_cast %229 : i32 to index
    %c0_79 = arith.constant 0 : index
    %231 = vector.load %arg14[%230, %c0_79] : memref<128x512xbf16, #tpu.memory_space<vmem>>, vector<16x512xbf16>
    %232 = arith.extf %231 : vector<16x512xbf16> to vector<16x512xf32>
    %c0_80 = arith.constant 0 : index
    %c0_81 = arith.constant 0 : index
    %233 = vector.load %arg4[%c0_80, %c0_81] : memref<128x512xbf16, #tpu.memory_space<vmem>>, vector<128x512xbf16>
    %cst_82 = arith.constant dense<0.000000e+00> : vector<16x512xf32>
    %234 = tpu.matmul %191, %233, %cst_82 {dimension_numbers = #tpu.dot_dimension_numbers<[1], [0], [0], [1], [0, 0, 1, 1], [], []>} : vector<16x128xbf16>, vector<128x512xbf16>, vector<16x512xf32> -> vector<16x512xf32>
    %235 = arith.addf %232, %234 : vector<16x512xf32>
    %236 = vector.extract_strided_slice %235 {offsets = [0, 0], sizes = [16, 128], strides = [1, 1]} : vector<16x512xf32> to vector<16x128xf32>
    %237 = arith.negf %236 : vector<16x128xf32>
    %238 = math.exp %237 : vector<16x128xf32>
    %cst_83 = arith.constant 1.000000e+00 : f32
    %239 = vector.broadcast %cst_83 : f32 to vector<16x128xf32>
    %240 = arith.addf %239, %238 : vector<16x128xf32>
    %241 = arith.divf %239, %240 : vector<16x128xf32>
    %242 = vector.extract_strided_slice %235 {offsets = [0, 128], sizes = [16, 128], strides = [1, 1]} : vector<16x512xf32> to vector<16x128xf32>
    %243 = arith.negf %242 : vector<16x128xf32>
    %244 = math.exp %243 : vector<16x128xf32>
    %cst_84 = arith.constant 1.000000e+00 : f32
    %245 = vector.broadcast %cst_84 : f32 to vector<16x128xf32>
    %246 = arith.addf %245, %244 : vector<16x128xf32>
    %247 = arith.divf %245, %246 : vector<16x128xf32>
    %248 = vector.extract_strided_slice %235 {offsets = [0, 256], sizes = [16, 128], strides = [1, 1]} : vector<16x512xf32> to vector<16x128xf32>
    %249 = math.tanh %248 : vector<16x128xf32>
    %250 = vector.extract_strided_slice %235 {offsets = [0, 384], sizes = [16, 128], strides = [1, 1]} : vector<16x512xf32> to vector<16x128xf32>
    %251 = arith.negf %250 : vector<16x128xf32>
    %252 = math.exp %251 : vector<16x128xf32>
    %cst_85 = arith.constant 1.000000e+00 : f32
    %253 = vector.broadcast %cst_85 : f32 to vector<16x128xf32>
    %254 = arith.addf %253, %252 : vector<16x128xf32>
    %255 = arith.divf %253, %254 : vector<16x128xf32>
    %256 = arith.mulf %247, %188 : vector<16x128xf32>
    %257 = arith.mulf %241, %249 : vector<16x128xf32>
    %258 = arith.addf %256, %257 : vector<16x128xf32>
    %259 = math.tanh %258 : vector<16x128xf32>
    %260 = arith.mulf %255, %259 : vector<16x128xf32>
    %261 = arith.truncf %260 : vector<16x128xf32> to vector<16x128xbf16>
    %c0_86 = arith.constant 0 : index
    %c0_87 = arith.constant 0 : index
    %262 = vector.load %arg6[%c0_86, %c0_87] : memref<128x512xbf16, #tpu.memory_space<vmem>>, vector<128x512xbf16>
    %cst_88 = arith.constant dense<0.000000e+00> : vector<16x512xf32>
    %263 = tpu.matmul %261, %262, %cst_88 {dimension_numbers = #tpu.dot_dimension_numbers<[1], [0], [0], [1], [0, 0, 1, 1], [], []>} : vector<16x128xbf16>, vector<128x512xbf16>, vector<16x512xf32> -> vector<16x512xf32>
    %c0_89 = arith.constant 0 : index
    %c0_90 = arith.constant 0 : index
    %264 = vector.load %arg7[%c0_89, %c0_90] : memref<128x512xbf16, #tpu.memory_space<vmem>>, vector<128x512xbf16>
    %cst_91 = arith.constant dense<0.000000e+00> : vector<16x512xf32>
    %265 = tpu.matmul %225, %264, %cst_91 {dimension_numbers = #tpu.dot_dimension_numbers<[1], [0], [0], [1], [0, 0, 1, 1], [], []>} : vector<16x128xbf16>, vector<128x512xbf16>, vector<16x512xf32> -> vector<16x512xf32>
    %266 = arith.addf %263, %265 : vector<16x512xf32>
    %c0_92 = arith.constant 0 : index
    %c0_93 = arith.constant 0 : index
    %267 = vector.load %arg8[%c0_92, %c0_93] : memref<1x512xf32, #tpu.memory_space<vmem>>, vector<1x512xf32>
    %268 = vector.broadcast %267 : vector<1x512xf32> to vector<16x512xf32>
    %269 = arith.addf %266, %268 : vector<16x512xf32>
    %270 = vector.extract_strided_slice %269 {offsets = [0, 0], sizes = [16, 128], strides = [1, 1]} : vector<16x512xf32> to vector<16x128xf32>
    %271 = arith.negf %270 : vector<16x128xf32>
    %272 = math.exp %271 : vector<16x128xf32>
    %cst_94 = arith.constant 1.000000e+00 : f32
    %273 = vector.broadcast %cst_94 : f32 to vector<16x128xf32>
    %274 = arith.addf %273, %272 : vector<16x128xf32>
    %275 = arith.divf %273, %274 : vector<16x128xf32>
    %276 = vector.extract_strided_slice %269 {offsets = [0, 128], sizes = [16, 128], strides = [1, 1]} : vector<16x512xf32> to vector<16x128xf32>
    %277 = arith.negf %276 : vector<16x128xf32>
    %278 = math.exp %277 : vector<16x128xf32>
    %cst_95 = arith.constant 1.000000e+00 : f32
    %279 = vector.broadcast %cst_95 : f32 to vector<16x128xf32>
    %280 = arith.addf %279, %278 : vector<16x128xf32>
    %281 = arith.divf %279, %280 : vector<16x128xf32>
    %282 = vector.extract_strided_slice %269 {offsets = [0, 256], sizes = [16, 128], strides = [1, 1]} : vector<16x512xf32> to vector<16x128xf32>
    %283 = math.tanh %282 : vector<16x128xf32>
    %284 = vector.extract_strided_slice %269 {offsets = [0, 384], sizes = [16, 128], strides = [1, 1]} : vector<16x512xf32> to vector<16x128xf32>
    %285 = arith.negf %284 : vector<16x128xf32>
    %286 = math.exp %285 : vector<16x128xf32>
    %cst_96 = arith.constant 1.000000e+00 : f32
    %287 = vector.broadcast %cst_96 : f32 to vector<16x128xf32>
    %288 = arith.addf %287, %286 : vector<16x128xf32>
    %289 = arith.divf %287, %288 : vector<16x128xf32>
    %290 = arith.mulf %281, %222 : vector<16x128xf32>
    %291 = arith.mulf %275, %283 : vector<16x128xf32>
    %292 = arith.addf %290, %291 : vector<16x128xf32>
    %293 = math.tanh %292 : vector<16x128xf32>
    %294 = arith.mulf %289, %293 : vector<16x128xf32>
    %295 = arith.truncf %294 : vector<16x128xf32> to vector<16x128xbf16>
    %c8_i32_97 = arith.constant 8 : i32
    %296 = arith.muli %c0_i32_17, %c8_i32_97 : i32
    %c4_i32 = arith.constant 4 : i32
    %297 = arith.addi %296, %c4_i32 : i32
    %c16_i32_98 = arith.constant 16 : i32
    %298 = arith.muli %297, %c16_i32_98 : i32
    %299 = tpu.assume_multiple %298, 16 : i32
    %300 = arith.index_cast %299 : i32 to index
    %c0_99 = arith.constant 0 : index
    %301 = vector.load %arg14[%300, %c0_99] : memref<128x512xbf16, #tpu.memory_space<vmem>>, vector<16x512xbf16>
    %302 = arith.extf %301 : vector<16x512xbf16> to vector<16x512xf32>
    %c0_100 = arith.constant 0 : index
    %c0_101 = arith.constant 0 : index
    %303 = vector.load %arg4[%c0_100, %c0_101] : memref<128x512xbf16, #tpu.memory_space<vmem>>, vector<128x512xbf16>
    %cst_102 = arith.constant dense<0.000000e+00> : vector<16x512xf32>
    %304 = tpu.matmul %261, %303, %cst_102 {dimension_numbers = #tpu.dot_dimension_numbers<[1], [0], [0], [1], [0, 0, 1, 1], [], []>} : vector<16x128xbf16>, vector<128x512xbf16>, vector<16x512xf32> -> vector<16x512xf32>
    %305 = arith.addf %302, %304 : vector<16x512xf32>
    %306 = vector.extract_strided_slice %305 {offsets = [0, 0], sizes = [16, 128], strides = [1, 1]} : vector<16x512xf32> to vector<16x128xf32>
    %307 = arith.negf %306 : vector<16x128xf32>
    %308 = math.exp %307 : vector<16x128xf32>
    %cst_103 = arith.constant 1.000000e+00 : f32
    %309 = vector.broadcast %cst_103 : f32 to vector<16x128xf32>
    %310 = arith.addf %309, %308 : vector<16x128xf32>
    %311 = arith.divf %309, %310 : vector<16x128xf32>
    %312 = vector.extract_strided_slice %305 {offsets = [0, 128], sizes = [16, 128], strides = [1, 1]} : vector<16x512xf32> to vector<16x128xf32>
    %313 = arith.negf %312 : vector<16x128xf32>
    %314 = math.exp %313 : vector<16x128xf32>
    %cst_104 = arith.constant 1.000000e+00 : f32
    %315 = vector.broadcast %cst_104 : f32 to vector<16x128xf32>
    %316 = arith.addf %315, %314 : vector<16x128xf32>
    %317 = arith.divf %315, %316 : vector<16x128xf32>
    %318 = vector.extract_strided_slice %305 {offsets = [0, 256], sizes = [16, 128], strides = [1, 1]} : vector<16x512xf32> to vector<16x128xf32>
    %319 = math.tanh %318 : vector<16x128xf32>
    %320 = vector.extract_strided_slice %305 {offsets = [0, 384], sizes = [16, 128], strides = [1, 1]} : vector<16x512xf32> to vector<16x128xf32>
    %321 = arith.negf %320 : vector<16x128xf32>
    %322 = math.exp %321 : vector<16x128xf32>
    %cst_105 = arith.constant 1.000000e+00 : f32
    %323 = vector.broadcast %cst_105 : f32 to vector<16x128xf32>
    %324 = arith.addf %323, %322 : vector<16x128xf32>
    %325 = arith.divf %323, %324 : vector<16x128xf32>
    %326 = arith.mulf %317, %258 : vector<16x128xf32>
    %327 = arith.mulf %311, %319 : vector<16x128xf32>
    %328 = arith.addf %326, %327 : vector<16x128xf32>
    %329 = math.tanh %328 : vector<16x128xf32>
    %330 = arith.mulf %325, %329 : vector<16x128xf32>
    %331 = arith.truncf %330 : vector<16x128xf32> to vector<16x128xbf16>
    %c0_106 = arith.constant 0 : index
    %c0_107 = arith.constant 0 : index
    %332 = vector.load %arg6[%c0_106, %c0_107] : memref<128x512xbf16, #tpu.memory_space<vmem>>, vector<128x512xbf16>
    %cst_108 = arith.constant dense<0.000000e+00> : vector<16x512xf32>
    %333 = tpu.matmul %331, %332, %cst_108 {dimension_numbers = #tpu.dot_dimension_numbers<[1], [0], [0], [1], [0, 0, 1, 1], [], []>} : vector<16x128xbf16>, vector<128x512xbf16>, vector<16x512xf32> -> vector<16x512xf32>
    %c0_109 = arith.constant 0 : index
    %c0_110 = arith.constant 0 : index
    %334 = vector.load %arg7[%c0_109, %c0_110] : memref<128x512xbf16, #tpu.memory_space<vmem>>, vector<128x512xbf16>
    %cst_111 = arith.constant dense<0.000000e+00> : vector<16x512xf32>
    %335 = tpu.matmul %295, %334, %cst_111 {dimension_numbers = #tpu.dot_dimension_numbers<[1], [0], [0], [1], [0, 0, 1, 1], [], []>} : vector<16x128xbf16>, vector<128x512xbf16>, vector<16x512xf32> -> vector<16x512xf32>
    %336 = arith.addf %333, %335 : vector<16x512xf32>
    %c0_112 = arith.constant 0 : index
    %c0_113 = arith.constant 0 : index
    %337 = vector.load %arg8[%c0_112, %c0_113] : memref<1x512xf32, #tpu.memory_space<vmem>>, vector<1x512xf32>
    %338 = vector.broadcast %337 : vector<1x512xf32> to vector<16x512xf32>
    %339 = arith.addf %336, %338 : vector<16x512xf32>
    %340 = vector.extract_strided_slice %339 {offsets = [0, 0], sizes = [16, 128], strides = [1, 1]} : vector<16x512xf32> to vector<16x128xf32>
    %341 = arith.negf %340 : vector<16x128xf32>
    %342 = math.exp %341 : vector<16x128xf32>
    %cst_114 = arith.constant 1.000000e+00 : f32
    %343 = vector.broadcast %cst_114 : f32 to vector<16x128xf32>
    %344 = arith.addf %343, %342 : vector<16x128xf32>
    %345 = arith.divf %343, %344 : vector<16x128xf32>
    %346 = vector.extract_strided_slice %339 {offsets = [0, 128], sizes = [16, 128], strides = [1, 1]} : vector<16x512xf32> to vector<16x128xf32>
    %347 = arith.negf %346 : vector<16x128xf32>
    %348 = math.exp %347 : vector<16x128xf32>
    %cst_115 = arith.constant 1.000000e+00 : f32
    %349 = vector.broadcast %cst_115 : f32 to vector<16x128xf32>
    %350 = arith.addf %349, %348 : vector<16x128xf32>
    %351 = arith.divf %349, %350 : vector<16x128xf32>
    %352 = vector.extract_strided_slice %339 {offsets = [0, 256], sizes = [16, 128], strides = [1, 1]} : vector<16x512xf32> to vector<16x128xf32>
    %353 = math.tanh %352 : vector<16x128xf32>
    %354 = vector.extract_strided_slice %339 {offsets = [0, 384], sizes = [16, 128], strides = [1, 1]} : vector<16x512xf32> to vector<16x128xf32>
    %355 = arith.negf %354 : vector<16x128xf32>
    %356 = math.exp %355 : vector<16x128xf32>
    %cst_116 = arith.constant 1.000000e+00 : f32
    %357 = vector.broadcast %cst_116 : f32 to vector<16x128xf32>
    %358 = arith.addf %357, %356 : vector<16x128xf32>
    %359 = arith.divf %357, %358 : vector<16x128xf32>
    %360 = arith.mulf %351, %292 : vector<16x128xf32>
    %361 = arith.mulf %345, %353 : vector<16x128xf32>
    %362 = arith.addf %360, %361 : vector<16x128xf32>
    %363 = math.tanh %362 : vector<16x128xf32>
    %364 = arith.mulf %359, %363 : vector<16x128xf32>
    %365 = arith.truncf %364 : vector<16x128xf32> to vector<16x128xbf16>
    %c8_i32_117 = arith.constant 8 : i32
    %366 = arith.muli %c0_i32_17, %c8_i32_117 : i32
    %c5_i32 = arith.constant 5 : i32
    %367 = arith.addi %366, %c5_i32 : i32
    %c16_i32_118 = arith.constant 16 : i32
    %368 = arith.muli %367, %c16_i32_118 : i32
    %369 = tpu.assume_multiple %368, 16 : i32
    %370 = arith.index_cast %369 : i32 to index
    %c0_119 = arith.constant 0 : index
    %371 = vector.load %arg14[%370, %c0_119] : memref<128x512xbf16, #tpu.memory_space<vmem>>, vector<16x512xbf16>
    %372 = arith.extf %371 : vector<16x512xbf16> to vector<16x512xf32>
    %c0_120 = arith.constant 0 : index
    %c0_121 = arith.constant 0 : index
    %373 = vector.load %arg4[%c0_120, %c0_121] : memref<128x512xbf16, #tpu.memory_space<vmem>>, vector<128x512xbf16>
    %cst_122 = arith.constant dense<0.000000e+00> : vector<16x512xf32>
    %374 = tpu.matmul %331, %373, %cst_122 {dimension_numbers = #tpu.dot_dimension_numbers<[1], [0], [0], [1], [0, 0, 1, 1], [], []>} : vector<16x128xbf16>, vector<128x512xbf16>, vector<16x512xf32> -> vector<16x512xf32>
    %375 = arith.addf %372, %374 : vector<16x512xf32>
    %376 = vector.extract_strided_slice %375 {offsets = [0, 0], sizes = [16, 128], strides = [1, 1]} : vector<16x512xf32> to vector<16x128xf32>
    %377 = arith.negf %376 : vector<16x128xf32>
    %378 = math.exp %377 : vector<16x128xf32>
    %cst_123 = arith.constant 1.000000e+00 : f32
    %379 = vector.broadcast %cst_123 : f32 to vector<16x128xf32>
    %380 = arith.addf %379, %378 : vector<16x128xf32>
    %381 = arith.divf %379, %380 : vector<16x128xf32>
    %382 = vector.extract_strided_slice %375 {offsets = [0, 128], sizes = [16, 128], strides = [1, 1]} : vector<16x512xf32> to vector<16x128xf32>
    %383 = arith.negf %382 : vector<16x128xf32>
    %384 = math.exp %383 : vector<16x128xf32>
    %cst_124 = arith.constant 1.000000e+00 : f32
    %385 = vector.broadcast %cst_124 : f32 to vector<16x128xf32>
    %386 = arith.addf %385, %384 : vector<16x128xf32>
    %387 = arith.divf %385, %386 : vector<16x128xf32>
    %388 = vector.extract_strided_slice %375 {offsets = [0, 256], sizes = [16, 128], strides = [1, 1]} : vector<16x512xf32> to vector<16x128xf32>
    %389 = math.tanh %388 : vector<16x128xf32>
    %390 = vector.extract_strided_slice %375 {offsets = [0, 384], sizes = [16, 128], strides = [1, 1]} : vector<16x512xf32> to vector<16x128xf32>
    %391 = arith.negf %390 : vector<16x128xf32>
    %392 = math.exp %391 : vector<16x128xf32>
    %cst_125 = arith.constant 1.000000e+00 : f32
    %393 = vector.broadcast %cst_125 : f32 to vector<16x128xf32>
    %394 = arith.addf %393, %392 : vector<16x128xf32>
    %395 = arith.divf %393, %394 : vector<16x128xf32>
    %396 = arith.mulf %387, %328 : vector<16x128xf32>
    %397 = arith.mulf %381, %389 : vector<16x128xf32>
    %398 = arith.addf %396, %397 : vector<16x128xf32>
    %399 = math.tanh %398 : vector<16x128xf32>
    %400 = arith.mulf %395, %399 : vector<16x128xf32>
    %401 = arith.truncf %400 : vector<16x128xf32> to vector<16x128xbf16>
    %c0_126 = arith.constant 0 : index
    %c0_127 = arith.constant 0 : index
    %402 = vector.load %arg6[%c0_126, %c0_127] : memref<128x512xbf16, #tpu.memory_space<vmem>>, vector<128x512xbf16>
    %cst_128 = arith.constant dense<0.000000e+00> : vector<16x512xf32>
    %403 = tpu.matmul %401, %402, %cst_128 {dimension_numbers = #tpu.dot_dimension_numbers<[1], [0], [0], [1], [0, 0, 1, 1], [], []>} : vector<16x128xbf16>, vector<128x512xbf16>, vector<16x512xf32> -> vector<16x512xf32>
    %c0_129 = arith.constant 0 : index
    %c0_130 = arith.constant 0 : index
    %404 = vector.load %arg7[%c0_129, %c0_130] : memref<128x512xbf16, #tpu.memory_space<vmem>>, vector<128x512xbf16>
    %cst_131 = arith.constant dense<0.000000e+00> : vector<16x512xf32>
    %405 = tpu.matmul %365, %404, %cst_131 {dimension_numbers = #tpu.dot_dimension_numbers<[1], [0], [0], [1], [0, 0, 1, 1], [], []>} : vector<16x128xbf16>, vector<128x512xbf16>, vector<16x512xf32> -> vector<16x512xf32>
    %406 = arith.addf %403, %405 : vector<16x512xf32>
    %c0_132 = arith.constant 0 : index
    %c0_133 = arith.constant 0 : index
    %407 = vector.load %arg8[%c0_132, %c0_133] : memref<1x512xf32, #tpu.memory_space<vmem>>, vector<1x512xf32>
    %408 = vector.broadcast %407 : vector<1x512xf32> to vector<16x512xf32>
    %409 = arith.addf %406, %408 : vector<16x512xf32>
    %410 = vector.extract_strided_slice %409 {offsets = [0, 0], sizes = [16, 128], strides = [1, 1]} : vector<16x512xf32> to vector<16x128xf32>
    %411 = arith.negf %410 : vector<16x128xf32>
    %412 = math.exp %411 : vector<16x128xf32>
    %cst_134 = arith.constant 1.000000e+00 : f32
    %413 = vector.broadcast %cst_134 : f32 to vector<16x128xf32>
    %414 = arith.addf %413, %412 : vector<16x128xf32>
    %415 = arith.divf %413, %414 : vector<16x128xf32>
    %416 = vector.extract_strided_slice %409 {offsets = [0, 128], sizes = [16, 128], strides = [1, 1]} : vector<16x512xf32> to vector<16x128xf32>
    %417 = arith.negf %416 : vector<16x128xf32>
    %418 = math.exp %417 : vector<16x128xf32>
    %cst_135 = arith.constant 1.000000e+00 : f32
    %419 = vector.broadcast %cst_135 : f32 to vector<16x128xf32>
    %420 = arith.addf %419, %418 : vector<16x128xf32>
    %421 = arith.divf %419, %420 : vector<16x128xf32>
    %422 = vector.extract_strided_slice %409 {offsets = [0, 256], sizes = [16, 128], strides = [1, 1]} : vector<16x512xf32> to vector<16x128xf32>
    %423 = math.tanh %422 : vector<16x128xf32>
    %424 = vector.extract_strided_slice %409 {offsets = [0, 384], sizes = [16, 128], strides = [1, 1]} : vector<16x512xf32> to vector<16x128xf32>
    %425 = arith.negf %424 : vector<16x128xf32>
    %426 = math.exp %425 : vector<16x128xf32>
    %cst_136 = arith.constant 1.000000e+00 : f32
    %427 = vector.broadcast %cst_136 : f32 to vector<16x128xf32>
    %428 = arith.addf %427, %426 : vector<16x128xf32>
    %429 = arith.divf %427, %428 : vector<16x128xf32>
    %430 = arith.mulf %421, %362 : vector<16x128xf32>
    %431 = arith.mulf %415, %423 : vector<16x128xf32>
    %432 = arith.addf %430, %431 : vector<16x128xf32>
    %433 = math.tanh %432 : vector<16x128xf32>
    %434 = arith.mulf %429, %433 : vector<16x128xf32>
    %435 = arith.truncf %434 : vector<16x128xf32> to vector<16x128xbf16>
    %c8_i32_137 = arith.constant 8 : i32
    %436 = arith.muli %c0_i32_17, %c8_i32_137 : i32
    %c6_i32 = arith.constant 6 : i32
    %437 = arith.addi %436, %c6_i32 : i32
    %c16_i32_138 = arith.constant 16 : i32
    %438 = arith.muli %437, %c16_i32_138 : i32
    %439 = tpu.assume_multiple %438, 16 : i32
    %440 = arith.index_cast %439 : i32 to index
    %c0_139 = arith.constant 0 : index
    %441 = vector.load %arg14[%440, %c0_139] : memref<128x512xbf16, #tpu.memory_space<vmem>>, vector<16x512xbf16>
    %442 = arith.extf %441 : vector<16x512xbf16> to vector<16x512xf32>
    %c0_140 = arith.constant 0 : index
    %c0_141 = arith.constant 0 : index
    %443 = vector.load %arg4[%c0_140, %c0_141] : memref<128x512xbf16, #tpu.memory_space<vmem>>, vector<128x512xbf16>
    %cst_142 = arith.constant dense<0.000000e+00> : vector<16x512xf32>
    %444 = tpu.matmul %401, %443, %cst_142 {dimension_numbers = #tpu.dot_dimension_numbers<[1], [0], [0], [1], [0, 0, 1, 1], [], []>} : vector<16x128xbf16>, vector<128x512xbf16>, vector<16x512xf32> -> vector<16x512xf32>
    %445 = arith.addf %442, %444 : vector<16x512xf32>
    %446 = vector.extract_strided_slice %445 {offsets = [0, 0], sizes = [16, 128], strides = [1, 1]} : vector<16x512xf32> to vector<16x128xf32>
    %447 = arith.negf %446 : vector<16x128xf32>
    %448 = math.exp %447 : vector<16x128xf32>
    %cst_143 = arith.constant 1.000000e+00 : f32
    %449 = vector.broadcast %cst_143 : f32 to vector<16x128xf32>
    %450 = arith.addf %449, %448 : vector<16x128xf32>
    %451 = arith.divf %449, %450 : vector<16x128xf32>
    %452 = vector.extract_strided_slice %445 {offsets = [0, 128], sizes = [16, 128], strides = [1, 1]} : vector<16x512xf32> to vector<16x128xf32>
    %453 = arith.negf %452 : vector<16x128xf32>
    %454 = math.exp %453 : vector<16x128xf32>
    %cst_144 = arith.constant 1.000000e+00 : f32
    %455 = vector.broadcast %cst_144 : f32 to vector<16x128xf32>
    %456 = arith.addf %455, %454 : vector<16x128xf32>
    %457 = arith.divf %455, %456 : vector<16x128xf32>
    %458 = vector.extract_strided_slice %445 {offsets = [0, 256], sizes = [16, 128], strides = [1, 1]} : vector<16x512xf32> to vector<16x128xf32>
    %459 = math.tanh %458 : vector<16x128xf32>
    %460 = vector.extract_strided_slice %445 {offsets = [0, 384], sizes = [16, 128], strides = [1, 1]} : vector<16x512xf32> to vector<16x128xf32>
    %461 = arith.negf %460 : vector<16x128xf32>
    %462 = math.exp %461 : vector<16x128xf32>
    %cst_145 = arith.constant 1.000000e+00 : f32
    %463 = vector.broadcast %cst_145 : f32 to vector<16x128xf32>
    %464 = arith.addf %463, %462 : vector<16x128xf32>
    %465 = arith.divf %463, %464 : vector<16x128xf32>
    %466 = arith.mulf %457, %398 : vector<16x128xf32>
    %467 = arith.mulf %451, %459 : vector<16x128xf32>
    %468 = arith.addf %466, %467 : vector<16x128xf32>
    %469 = math.tanh %468 : vector<16x128xf32>
    %470 = arith.mulf %465, %469 : vector<16x128xf32>
    %471 = arith.truncf %470 : vector<16x128xf32> to vector<16x128xbf16>
    %c0_146 = arith.constant 0 : index
    %c0_147 = arith.constant 0 : index
    %472 = vector.load %arg6[%c0_146, %c0_147] : memref<128x512xbf16, #tpu.memory_space<vmem>>, vector<128x512xbf16>
    %cst_148 = arith.constant dense<0.000000e+00> : vector<16x512xf32>
    %473 = tpu.matmul %471, %472, %cst_148 {dimension_numbers = #tpu.dot_dimension_numbers<[1], [0], [0], [1], [0, 0, 1, 1], [], []>} : vector<16x128xbf16>, vector<128x512xbf16>, vector<16x512xf32> -> vector<16x512xf32>
    %c0_149 = arith.constant 0 : index
    %c0_150 = arith.constant 0 : index
    %474 = vector.load %arg7[%c0_149, %c0_150] : memref<128x512xbf16, #tpu.memory_space<vmem>>, vector<128x512xbf16>
    %cst_151 = arith.constant dense<0.000000e+00> : vector<16x512xf32>
    %475 = tpu.matmul %435, %474, %cst_151 {dimension_numbers = #tpu.dot_dimension_numbers<[1], [0], [0], [1], [0, 0, 1, 1], [], []>} : vector<16x128xbf16>, vector<128x512xbf16>, vector<16x512xf32> -> vector<16x512xf32>
    %476 = arith.addf %473, %475 : vector<16x512xf32>
    %c0_152 = arith.constant 0 : index
    %c0_153 = arith.constant 0 : index
    %477 = vector.load %arg8[%c0_152, %c0_153] : memref<1x512xf32, #tpu.memory_space<vmem>>, vector<1x512xf32>
    %478 = vector.broadcast %477 : vector<1x512xf32> to vector<16x512xf32>
    %479 = arith.addf %476, %478 : vector<16x512xf32>
    %480 = vector.extract_strided_slice %479 {offsets = [0, 0], sizes = [16, 128], strides = [1, 1]} : vector<16x512xf32> to vector<16x128xf32>
    %481 = arith.negf %480 : vector<16x128xf32>
    %482 = math.exp %481 : vector<16x128xf32>
    %cst_154 = arith.constant 1.000000e+00 : f32
    %483 = vector.broadcast %cst_154 : f32 to vector<16x128xf32>
    %484 = arith.addf %483, %482 : vector<16x128xf32>
    %485 = arith.divf %483, %484 : vector<16x128xf32>
    %486 = vector.extract_strided_slice %479 {offsets = [0, 128], sizes = [16, 128], strides = [1, 1]} : vector<16x512xf32> to vector<16x128xf32>
    %487 = arith.negf %486 : vector<16x128xf32>
    %488 = math.exp %487 : vector<16x128xf32>
    %cst_155 = arith.constant 1.000000e+00 : f32
    %489 = vector.broadcast %cst_155 : f32 to vector<16x128xf32>
    %490 = arith.addf %489, %488 : vector<16x128xf32>
    %491 = arith.divf %489, %490 : vector<16x128xf32>
    %492 = vector.extract_strided_slice %479 {offsets = [0, 256], sizes = [16, 128], strides = [1, 1]} : vector<16x512xf32> to vector<16x128xf32>
    %493 = math.tanh %492 : vector<16x128xf32>
    %494 = vector.extract_strided_slice %479 {offsets = [0, 384], sizes = [16, 128], strides = [1, 1]} : vector<16x512xf32> to vector<16x128xf32>
    %495 = arith.negf %494 : vector<16x128xf32>
    %496 = math.exp %495 : vector<16x128xf32>
    %cst_156 = arith.constant 1.000000e+00 : f32
    %497 = vector.broadcast %cst_156 : f32 to vector<16x128xf32>
    %498 = arith.addf %497, %496 : vector<16x128xf32>
    %499 = arith.divf %497, %498 : vector<16x128xf32>
    %500 = arith.mulf %491, %432 : vector<16x128xf32>
    %501 = arith.mulf %485, %493 : vector<16x128xf32>
    %502 = arith.addf %500, %501 : vector<16x128xf32>
    %503 = math.tanh %502 : vector<16x128xf32>
    %504 = arith.mulf %499, %503 : vector<16x128xf32>
    %505 = arith.truncf %504 : vector<16x128xf32> to vector<16x128xbf16>
    %c8_i32_157 = arith.constant 8 : i32
    %506 = arith.muli %c0_i32_17, %c8_i32_157 : i32
    %c7_i32 = arith.constant 7 : i32
    %507 = arith.addi %506, %c7_i32 : i32
    %c16_i32_158 = arith.constant 16 : i32
    %508 = arith.muli %507, %c16_i32_158 : i32
    %509 = tpu.assume_multiple %508, 16 : i32
    %510 = arith.index_cast %509 : i32 to index
    %c0_159 = arith.constant 0 : index
    %511 = vector.load %arg14[%510, %c0_159] : memref<128x512xbf16, #tpu.memory_space<vmem>>, vector<16x512xbf16>
    %512 = arith.extf %511 : vector<16x512xbf16> to vector<16x512xf32>
    %c0_160 = arith.constant 0 : index
    %c0_161 = arith.constant 0 : index
    %513 = vector.load %arg4[%c0_160, %c0_161] : memref<128x512xbf16, #tpu.memory_space<vmem>>, vector<128x512xbf16>
    %cst_162 = arith.constant dense<0.000000e+00> : vector<16x512xf32>
    %514 = tpu.matmul %471, %513, %cst_162 {dimension_numbers = #tpu.dot_dimension_numbers<[1], [0], [0], [1], [0, 0, 1, 1], [], []>} : vector<16x128xbf16>, vector<128x512xbf16>, vector<16x512xf32> -> vector<16x512xf32>
    %515 = arith.addf %512, %514 : vector<16x512xf32>
    %516 = vector.extract_strided_slice %515 {offsets = [0, 0], sizes = [16, 128], strides = [1, 1]} : vector<16x512xf32> to vector<16x128xf32>
    %517 = arith.negf %516 : vector<16x128xf32>
    %518 = math.exp %517 : vector<16x128xf32>
    %cst_163 = arith.constant 1.000000e+00 : f32
    %519 = vector.broadcast %cst_163 : f32 to vector<16x128xf32>
    %520 = arith.addf %519, %518 : vector<16x128xf32>
    %521 = arith.divf %519, %520 : vector<16x128xf32>
    %522 = vector.extract_strided_slice %515 {offsets = [0, 128], sizes = [16, 128], strides = [1, 1]} : vector<16x512xf32> to vector<16x128xf32>
    %523 = arith.negf %522 : vector<16x128xf32>
    %524 = math.exp %523 : vector<16x128xf32>
    %cst_164 = arith.constant 1.000000e+00 : f32
    %525 = vector.broadcast %cst_164 : f32 to vector<16x128xf32>
    %526 = arith.addf %525, %524 : vector<16x128xf32>
    %527 = arith.divf %525, %526 : vector<16x128xf32>
    %528 = vector.extract_strided_slice %515 {offsets = [0, 256], sizes = [16, 128], strides = [1, 1]} : vector<16x512xf32> to vector<16x128xf32>
    %529 = math.tanh %528 : vector<16x128xf32>
    %530 = vector.extract_strided_slice %515 {offsets = [0, 384], sizes = [16, 128], strides = [1, 1]} : vector<16x512xf32> to vector<16x128xf32>
    %531 = arith.negf %530 : vector<16x128xf32>
    %532 = math.exp %531 : vector<16x128xf32>
    %cst_165 = arith.constant 1.000000e+00 : f32
    %533 = vector.broadcast %cst_165 : f32 to vector<16x128xf32>
    %534 = arith.addf %533, %532 : vector<16x128xf32>
    %535 = arith.divf %533, %534 : vector<16x128xf32>
    %536 = arith.mulf %527, %468 : vector<16x128xf32>
    %537 = arith.mulf %521, %529 : vector<16x128xf32>
    %538 = arith.addf %536, %537 : vector<16x128xf32>
    %539 = math.tanh %538 : vector<16x128xf32>
    %540 = arith.mulf %535, %539 : vector<16x128xf32>
    %541 = arith.truncf %540 : vector<16x128xf32> to vector<16x128xbf16>
    %c0_166 = arith.constant 0 : index
    %c0_167 = arith.constant 0 : index
    %542 = vector.load %arg6[%c0_166, %c0_167] : memref<128x512xbf16, #tpu.memory_space<vmem>>, vector<128x512xbf16>
    %cst_168 = arith.constant dense<0.000000e+00> : vector<16x512xf32>
    %543 = tpu.matmul %541, %542, %cst_168 {dimension_numbers = #tpu.dot_dimension_numbers<[1], [0], [0], [1], [0, 0, 1, 1], [], []>} : vector<16x128xbf16>, vector<128x512xbf16>, vector<16x512xf32> -> vector<16x512xf32>
    %c0_169 = arith.constant 0 : index
    %c0_170 = arith.constant 0 : index
    %544 = vector.load %arg7[%c0_169, %c0_170] : memref<128x512xbf16, #tpu.memory_space<vmem>>, vector<128x512xbf16>
    %cst_171 = arith.constant dense<0.000000e+00> : vector<16x512xf32>
    %545 = tpu.matmul %505, %544, %cst_171 {dimension_numbers = #tpu.dot_dimension_numbers<[1], [0], [0], [1], [0, 0, 1, 1], [], []>} : vector<16x128xbf16>, vector<128x512xbf16>, vector<16x512xf32> -> vector<16x512xf32>
    %546 = arith.addf %543, %545 : vector<16x512xf32>
    %c0_172 = arith.constant 0 : index
    %c0_173 = arith.constant 0 : index
    %547 = vector.load %arg8[%c0_172, %c0_173] : memref<1x512xf32, #tpu.memory_space<vmem>>, vector<1x512xf32>
    %548 = vector.broadcast %547 : vector<1x512xf32> to vector<16x512xf32>
    %549 = arith.addf %546, %548 : vector<16x512xf32>
    %550 = vector.extract_strided_slice %549 {offsets = [0, 0], sizes = [16, 128], strides = [1, 1]} : vector<16x512xf32> to vector<16x128xf32>
    %551 = arith.negf %550 : vector<16x128xf32>
    %552 = math.exp %551 : vector<16x128xf32>
    %cst_174 = arith.constant 1.000000e+00 : f32
    %553 = vector.broadcast %cst_174 : f32 to vector<16x128xf32>
    %554 = arith.addf %553, %552 : vector<16x128xf32>
    %555 = arith.divf %553, %554 : vector<16x128xf32>
    %556 = vector.extract_strided_slice %549 {offsets = [0, 128], sizes = [16, 128], strides = [1, 1]} : vector<16x512xf32> to vector<16x128xf32>
    %557 = arith.negf %556 : vector<16x128xf32>
    %558 = math.exp %557 : vector<16x128xf32>
    %cst_175 = arith.constant 1.000000e+00 : f32
    %559 = vector.broadcast %cst_175 : f32 to vector<16x128xf32>
    %560 = arith.addf %559, %558 : vector<16x128xf32>
    %561 = arith.divf %559, %560 : vector<16x128xf32>
    %562 = vector.extract_strided_slice %549 {offsets = [0, 256], sizes = [16, 128], strides = [1, 1]} : vector<16x512xf32> to vector<16x128xf32>
    %563 = math.tanh %562 : vector<16x128xf32>
    %564 = vector.extract_strided_slice %549 {offsets = [0, 384], sizes = [16, 128], strides = [1, 1]} : vector<16x512xf32> to vector<16x128xf32>
    %565 = arith.negf %564 : vector<16x128xf32>
    %566 = math.exp %565 : vector<16x128xf32>
    %cst_176 = arith.constant 1.000000e+00 : f32
    %567 = vector.broadcast %cst_176 : f32 to vector<16x128xf32>
    %568 = arith.addf %567, %566 : vector<16x128xf32>
    %569 = arith.divf %567, %568 : vector<16x128xf32>
    %570 = arith.mulf %561, %502 : vector<16x128xf32>
    %571 = arith.mulf %555, %563 : vector<16x128xf32>
    %572 = arith.addf %570, %571 : vector<16x128xf32>
    %573 = math.tanh %572 : vector<16x128xf32>
    %574 = arith.mulf %569, %573 : vector<16x128xf32>
    %575 = arith.truncf %574 : vector<16x128xf32> to vector<16x128xbf16>
    %c1_i32_177 = arith.constant 1 : i32
    %c0_178 = arith.constant 0 : index
    %c0_179 = arith.constant 0 : index
    %576 = vector.load %arg15[%c0_178, %c0_179] : memref<16x128xbf16, #tpu.memory_space<vmem>>, vector<16x128xbf16>
    tpu.vector_store %arg15[%c0_178, %c0_179], %541 {strides = array<i32>} : memref<16x128xbf16, #tpu.memory_space<vmem>>, vector<16x128xbf16>,
    %c0_180 = arith.constant 0 : index
    %c0_181 = arith.constant 0 : index
    %577 = vector.load %arg17[%c0_180, %c0_181] : memref<16x128xf32, #tpu.memory_space<vmem>>, vector<16x128xf32>
    tpu.vector_store %arg17[%c0_180, %c0_181], %538 {strides = array<i32>} : memref<16x128xf32, #tpu.memory_space<vmem>>, vector<16x128xf32>,
    %c0_182 = arith.constant 0 : index
    %c0_183 = arith.constant 0 : index
    %578 = vector.load %arg16[%c0_182, %c0_183] : memref<16x128xbf16, #tpu.memory_space<vmem>>, vector<16x128xbf16>
    tpu.vector_store %arg16[%c0_182, %c0_183], %575 {strides = array<i32>} : memref<16x128xbf16, #tpu.memory_space<vmem>>, vector<16x128xbf16>,
    %c0_184 = arith.constant 0 : index
    %c0_185 = arith.constant 0 : index
    %579 = vector.load %arg18[%c0_184, %c0_185] : memref<16x128xf32, #tpu.memory_space<vmem>>, vector<16x128xf32>
    tpu.vector_store %arg18[%c0_184, %c0_185], %572 {strides = array<i32>} : memref<16x128xf32, #tpu.memory_space<vmem>>, vector<16x128xf32>,
    %c0_i32_186 = arith.constant 0 : i32
    %580 = arith.cmpi eq, %arg1, %c0_i32_186 : i32
    %581 = arith.extui %580 : i1 to i32
    %c0_i32_187 = arith.constant 0 : i32
    %582 = arith.cmpi ne, %581, %c0_i32_187 : i32
    scf.if %582 {
      %c0_188 = arith.constant 0 : index
      %c0_189 = arith.constant 0 : index
      %583 = vector.load %arg9[%c0_188, %c0_189] : memref<128x128xbf16, #tpu.memory_space<vmem>>, vector<128x128xbf16>
      %cst_190 = arith.constant dense<0.000000e+00> : vector<16x128xf32>
      %584 = tpu.matmul %575, %583, %cst_190 {dimension_numbers = #tpu.dot_dimension_numbers<[1], [0], [0], [1], [0, 0, 1, 1], [], []>} : vector<16x128xbf16>, vector<128x128xbf16>, vector<16x128xf32> -> vector<16x128xf32>
      %c0_191 = arith.constant 0 : index
      %c0_192 = arith.constant 0 : index
      %585 = vector.load %arg10[%c0_191, %c0_192] : memref<1x128xf32, #tpu.memory_space<vmem>>, vector<1x128xf32>
      %586 = vector.broadcast %585 : vector<1x128xf32> to vector<16x128xf32>
      %587 = arith.addf %584, %586 : vector<16x128xf32>
      %cst_193 = arith.constant 0.000000e+00 : f32
      %588 = vector.broadcast %cst_193 : f32 to vector<16x128xf32>
      %589 = arith.maximumf %587, %588 : vector<16x128xf32>
      %590 = arith.truncf %589 : vector<16x128xf32> to vector<16x128xbf16>
      %c0_194 = arith.constant 0 : index
      %c0_195 = arith.constant 0 : index
      %591 = vector.load %arg11[%c0_194, %c0_195] : memref<128x128xbf16, #tpu.memory_space<vmem>>, vector<128x128xbf16>
      %cst_196 = arith.constant dense<0.000000e+00> : vector<16x128xf32>
      %592 = tpu.matmul %590, %591, %cst_196 {dimension_numbers = #tpu.dot_dimension_numbers<[1], [0], [0], [1], [0, 0, 1, 1], [], []>} : vector<16x128xbf16>, vector<128x128xbf16>, vector<16x128xf32> -> vector<16x128xf32>
      %c0_197 = arith.constant 0 : index
      %c0_198 = arith.constant 0 : index
      %593 = vector.load %arg12[%c0_197, %c0_198] : memref<1x128xf32, #tpu.memory_space<vmem>>, vector<1x128xf32>
      %594 = vector.broadcast %593 : vector<1x128xf32> to vector<16x128xf32>
      %595 = arith.addf %592, %594 : vector<16x128xf32>
      %c0_199 = arith.constant 0 : index
      %c0_200 = arith.constant 0 : index
      %596 = vector.load %arg13[%c0_199, %c0_200] : memref<16x128xf32, #tpu.memory_space<vmem>>, vector<16x128xf32>
      tpu.vector_store %arg13[%c0_199, %c0_200], %595 {strides = array<i32>} : memref<16x128xf32, #tpu.memory_space<vmem>>, vector<16x128xf32>,
    } else {
    }
    return
  }
  func.func @transform_0(%arg0: i32, %arg1: i32) -> (i32, i32, i32) {
    %c0_i32 = arith.constant 0 : i32
    %c0_i32_0 = arith.constant 0 : i32
    return %arg0, %arg1, %c0_i32 : i32, i32, i32
  }
  func.func @transform_1(%arg0: i32, %arg1: i32) -> (i32, i32) {
    %c0_i32 = arith.constant 0 : i32
    %c0_i32_0 = arith.constant 0 : i32
    %c0_i32_1 = arith.constant 0 : i32
    return %c0_i32, %c0_i32_0 : i32, i32
  }
  func.func @transform_2(%arg0: i32, %arg1: i32) -> (i32, i32) {
    %c0_i32 = arith.constant 0 : i32
    %c0_i32_0 = arith.constant 0 : i32
    %c0_i32_1 = arith.constant 0 : i32
    return %c0_i32, %c0_i32_0 : i32, i32
  }
  func.func @transform_3(%arg0: i32, %arg1: i32) -> (i32, i32) {
    %c0_i32 = arith.constant 0 : i32
    %c0_i32_0 = arith.constant 0 : i32
    %c0_i32_1 = arith.constant 0 : i32
    return %c0_i32, %c0_i32_0 : i32, i32
  }
  func.func @transform_4(%arg0: i32, %arg1: i32) -> (i32, i32) {
    %c0_i32 = arith.constant 0 : i32
    %c0_i32_0 = arith.constant 0 : i32
    %c0_i32_1 = arith.constant 0 : i32
    return %c0_i32, %c0_i32_0 : i32, i32
  }
  func.func @transform_5(%arg0: i32, %arg1: i32) -> (i32, i32) {
    %c0_i32 = arith.constant 0 : i32
    %c0_i32_0 = arith.constant 0 : i32
    %c0_i32_1 = arith.constant 0 : i32
    return %c0_i32, %c0_i32_0 : i32, i32
  }
  func.func @transform_6(%arg0: i32, %arg1: i32) -> (i32, i32) {
    %c0_i32 = arith.constant 0 : i32
    %c0_i32_0 = arith.constant 0 : i32
    %c0_i32_1 = arith.constant 0 : i32
    return %c0_i32, %c0_i32_0 : i32, i32
  }
  func.func @transform_7(%arg0: i32, %arg1: i32) -> (i32, i32) {
    %c0_i32 = arith.constant 0 : i32
    %c0_i32_0 = arith.constant 0 : i32
    %c0_i32_1 = arith.constant 0 : i32
    return %c0_i32, %c0_i32_0 : i32, i32
  }
  func.func @transform_8(%arg0: i32, %arg1: i32) -> (i32, i32) {
    %c0_i32 = arith.constant 0 : i32
    %c0_i32_0 = arith.constant 0 : i32
    %c0_i32_1 = arith.constant 0 : i32
    return %c0_i32, %c0_i32_0 : i32, i32
  }
  func.func @transform_9(%arg0: i32, %arg1: i32) -> (i32, i32) {
    %c0_i32 = arith.constant 0 : i32
    %c0_i32_0 = arith.constant 0 : i32
    %c0_i32_1 = arith.constant 0 : i32
    return %c0_i32, %c0_i32_0 : i32, i32
  }
  func.func @transform_10(%arg0: i32, %arg1: i32) -> (i32, i32) {
    %c0_i32 = arith.constant 0 : i32
    %c0_i32_0 = arith.constant 0 : i32
    %c0_i32_1 = arith.constant 0 : i32
    return %c0_i32, %c0_i32_0 : i32, i32
  }
  func.func @transform_11(%arg0: i32, %arg1: i32) -> (i32, i32) {
    %c0_i32 = arith.constant 0 : i32
    %c0_i32_0 = arith.constant 0 : i32
    return %arg0, %c0_i32 : i32, i32
  }
}

</mosaic_0001>

<llo_original>
// kernel: lstm_forward.1
$region0: #{lstm_forward.1}
  #allocation0 [shape = 'u32[]', space=smem, size = 0x4, offset = 0x4, fixed_abs, tag = 'smem constant byte address 0x4 - core index']
  #allocation1 [shape = 'u32[144,128]{1,0:T(1,128)}', space=vmem, size = 0x12000, scoped, tag = 'internal scratch']
  #allocation2 [shape = 'bf16[128,512]{1,0:T(8,128)(2,1)}', space=vmem, size = 0x20000, scoped, tag = 'scratch operand']
  #allocation3 [shape = 'bf16[16,128]{1,0:T(8,128)(2,1)}', space=vmem, size = 0x1000, scoped, tag = 'scratch operand']
  #allocation4 [shape = 'bf16[16,128]{1,0:T(8,128)(2,1)}', space=vmem, size = 0x1000, scoped, tag = 'scratch operand']
  #allocation5 [shape = 'f32[16,128]{1,0:T(8,128)}', space=vmem, size = 0x2000, scoped, tag = 'scratch operand']
  #allocation6 [shape = 'f32[16,128]{1,0:T(8,128)}', space=vmem, size = 0x2000, scoped, tag = 'scratch operand']
  %s0 = inlined_call_operand.vmem [shape: bf16[1,128,4], index: 0, kind: input, shape index: {}]
  %s1 = inlined_call_operand.vmem [shape: bf16[4,512], index: 1, kind: input, shape index: {}]
  %s2 = inlined_call_operand.hbm [shape: bf16[128,512], index: 2, kind: input, shape index: {}]
  %s3 = inlined_call_operand.vmem [shape: f32[1,512], index: 3, kind: input, shape index: {}]
  %s4 = inlined_call_operand.hbm [shape: bf16[128,512], index: 4, kind: input, shape index: {}]
  %s5 = inlined_call_operand.hbm [shape: bf16[128,512], index: 5, kind: input, shape index: {}]
  %s6 = inlined_call_operand.vmem [shape: f32[1,512], index: 6, kind: input, shape index: {}]
  %s7 = inlined_call_operand.vmem [shape: bf16[128,128], index: 7, kind: input, shape index: {}]
  %s8 = inlined_call_operand.vmem [shape: f32[1,128], index: 8, kind: input, shape index: {}]
  %s9 = inlined_call_operand.vmem [shape: bf16[128,128], index: 9, kind: input, shape index: {}]
  %s10 = inlined_call_operand.vmem [shape: f32[1,128], index: 10, kind: input, shape index: {}]
  %s11 = inlined_call_operand.vmem [shape: f32[16,128], index: 11, kind: output, shape index: {}]
  %s12 = sld [smem:[#allocation0]]
  $region74: #{lstm_forward.1} parent=0
    _
  %s14 = ssub.s32 1, %s12
  %s15 = scalar_select 0, %s14, %s12
  $region1: #{lstm_forward.1} parent=0
    #allocation7 [shape = 'u8[131072]{0}', space=vmem, size = 0x20000, scoped, tag = 'input window, operand 2, single buffered']
    #allocation8 [shape = 's32[1]{0}', space=sflag, size = 0x4, scoped, tag = 'scoped memory for lstm_forward.1']
    #allocation9 [shape = 'u8[131072]{0}', space=vmem, size = 0x20000, scoped, tag = 'input window, operand 4, single buffered']
    #allocation10 [shape = 's32[1]{0}', space=sflag, size = 0x4, scoped, tag = 'scoped memory for lstm_forward.1']
    #allocation11 [shape = 'u8[131072]{0}', space=vmem, size = 0x20000, scoped, tag = 'input window, operand 5, single buffered']
    %16 = vsyncpa [#allocation8], 0
    %17 = vsyncpa [#allocation10], 0
    // Predicated region
    $region2: #{lstm_forward.1} parent=1 // pred_check
      _
    $region3: #{lstm_forward.1} parent=1 // pred_check_branch
      %19 = sbr.rel (0) target = $region5
    $region4: #{lstm_forward.1} parent=1 // pred_region
      _
    $region5: #{lstm_forward.1} parent=1 // pred_fallthru
      _
    // Predicated region
    $region6: #{lstm_forward.1} parent=1 // pred_check
      _
    $region7: #{lstm_forward.1} parent=1 // pred_check_branch
      %21 = sbr.rel (0) target = $region9
    $region8: #{lstm_forward.1} parent=1 // pred_region
      _
    $region9: #{lstm_forward.1} parent=1 // pred_fallthru
      _
    // Predicated region
    $region10: #{lstm_forward.1} parent=1 // pred_check
      _
    $region11: #{lstm_forward.1} parent=1 // pred_check_branch
      %23 = sbr.rel (0) target = $region13
    $region12: #{lstm_forward.1} parent=1 // pred_region
      %s25 = ssub.s32 4096, 4096
      %26 = vsyncadd [#allocation8], %s25
      %s27 = sshll.u32 [#allocation7], 4
      %s28 = int_to_ptr.vmem [resolvable:$true] %s27
      %33 = dma.hbm_to_vmem [thread:$0]  %s2, 4096, %s28, [#allocation8], 256, 256, 16
    $region13: #{lstm_forward.1} parent=1 // pred_fallthru
      _
    // Predicated region
    $region14: #{lstm_forward.1} parent=1 // pred_check
      _
    $region15: #{lstm_forward.1} parent=1 // pred_check_branch
      %35 = sbr.rel (0) target = $region17
    $region16: #{lstm_forward.1} parent=1 // pred_region
      _
    $region17: #{lstm_forward.1} parent=1 // pred_fallthru
      _
    // Predicated region
    $region18: #{lstm_forward.1} parent=1 // pred_check
      _
    $region19: #{lstm_forward.1} parent=1 // pred_check_branch
      %37 = sbr.rel (0) target = $region21
    $region20: #{lstm_forward.1} parent=1 // pred_region
      %s39 = ssub.s32 4096, 4096
      %40 = vsyncadd [#allocation10], %s39
      %s41 = sshll.u32 [#allocation9], 4
      %s42 = int_to_ptr.vmem [resolvable:$true] %s41
      %47 = dma.hbm_to_vmem [thread:$0]  %s4, 4096, %s42, [#allocation10], 256, 256, 16
    $region21: #{lstm_forward.1} parent=1 // pred_fallthru
      _
    // Predicated region
    $region22: #{lstm_forward.1} parent=1 // pred_check
      _
    $region23: #{lstm_forward.1} parent=1 // pred_check_branch
      %49 = sbr.rel (0) target = $region25
    $region24: #{lstm_forward.1} parent=1 // pred_region
      %s51 = ssub.s32 4096, 4096
      %52 = vsyncadd [#allocation10], %s51
      %s53 = sshll.u32 [#allocation11], 4
      %s54 = int_to_ptr.vmem [resolvable:$true] %s53
      %59 = dma.hbm_to_vmem [thread:$0]  %s5, 4096, %s54, [#allocation10], 256, 256, 16
    $region25: #{lstm_forward.1} parent=1 // pred_fallthru
      _
    // Predicated region
    $region26: #{lstm_forward.1} parent=1 // pred_check
      _
    $region27: #{lstm_forward.1} parent=1 // pred_check_branch
      %61 = sbr.rel (0) target = $region29
    $region28: #{lstm_forward.1} parent=1 // pred_region
      _
    $region29: #{lstm_forward.1} parent=1 // pred_fallthru
      _
    // Predicated region
    $region30: #{lstm_forward.1} parent=1 // pred_check
      _
    $region31: #{lstm_forward.1} parent=1 // pred_check_branch
      %63 = sbr.rel (0) target = $region33
    $region32: #{lstm_forward.1} parent=1 // pred_region
      _
    $region33: #{lstm_forward.1} parent=1 // pred_fallthru
      _
    // Predicated region
    $region34: #{lstm_forward.1} parent=1 // pred_check
      _
    $region35: #{lstm_forward.1} parent=1 // pred_check_branch
      %65 = sbr.rel (0) target = $region37
    $region36: #{lstm_forward.1} parent=1 // pred_region
      _
    $region37: #{lstm_forward.1} parent=1 // pred_fallthru
      _
    // Predicated region
    $region38: #{lstm_forward.1} parent=1 // pred_check
      _
    $region39: #{lstm_forward.1} parent=1 // pred_check_branch
      %67 = sbr.rel (0) target = $region41
    $region40: #{lstm_forward.1} parent=1 // pred_region
      _
    $region41: #{lstm_forward.1} parent=1 // pred_fallthru
      _
    // Predicated region
    $region42: #{lstm_forward.1} parent=1 // pred_check
      _
    $region43: #{lstm_forward.1} parent=1 // pred_check_branch
      %69 = sbr.rel (0) target = $region45
    $region44: #{lstm_forward.1} parent=1 // pred_region
      _
    $region45: #{lstm_forward.1} parent=1 // pred_fallthru
      _
    // Predicated region
    $region46: #{lstm_forward.1} parent=1 // pred_check
      _
    $region47: #{lstm_forward.1} parent=1 // pred_check_branch
      %71 = sbr.rel (0) target = $region49
    $region48: #{lstm_forward.1} parent=1 // pred_region
      %72 = dma.done [#allocation8], 4096
    $region49: #{lstm_forward.1} parent=1 // pred_fallthru
      _
    // Predicated region
    $region50: #{lstm_forward.1} parent=1 // pred_check
      _
    $region51: #{lstm_forward.1} parent=1 // pred_check_branch
      %74 = sbr.rel (0) target = $region53
    $region52: #{lstm_forward.1} parent=1 // pred_region
      %75 = dma.done [#allocation10], 4096
    $region53: #{lstm_forward.1} parent=1 // pred_fallthru
      _
    // Predicated region
    $region54: #{lstm_forward.1} parent=1 // pred_check
      _
    $region55: #{lstm_forward.1} parent=1 // pred_check_branch
      %77 = sbr.rel (0) target = $region57
    $region56: #{lstm_forward.1} parent=1 // pred_region
      %78 = dma.done [#allocation10], 4096
    $region57: #{lstm_forward.1} parent=1 // pred_fallthru
      _
    %p80 = scmp.eq.s32.totalorder 0, 0
    // Predicated region
    $region58: #{lstm_forward.1} parent=1 // pred_check
      %p81 = pneg %p80
    $region59: #{lstm_forward.1} parent=1 // pred_check_branch
      %83 = sbr.rel (%p81) target = $region61
    $region60: #{lstm_forward.1} parent=1 // pred_region
      %84 = vst [vmem:[#allocation3] sm:$0xf] 0
      %85 = vst [vmem:[#allocation3 + $0x4] sm:$0xf] 0
      %86 = vst [vmem:[#allocation5] sm:$0xff] 0.0
      %87 = vst [vmem:[#allocation5 + $0x8] sm:$0xff] 0.0
      %88 = vst [vmem:[#allocation4] sm:$0xf] 0
      %89 = vst [vmem:[#allocation4 + $0x4] sm:$0xf] 0
      %90 = vst [vmem:[#allocation6] sm:$0xff] 0.0
      %91 = vst [vmem:[#allocation6 + $0x8] sm:$0xff] 0.0
    $region61: #{lstm_forward.1} parent=1 // pred_fallthru
      _
    %v92 = vld [vmem:[%s0] sm:$0xf]
    %v93 = vld [vmem:[%s0 + $0x4] sm:$0xf]
    %v94 = vld [vmem:[%s0 + $0x8] sm:$0xf]
    %v95 = vld [vmem:[%s0 + $0xc] sm:$0xf]
    %v96 = vld [vmem:[%s0 + $0x10] sm:$0xf]
    %v97 = vld [vmem:[%s0 + $0x14] sm:$0xf]
    %v98 = vld [vmem:[%s0 + $0x18] sm:$0xf]
    %v99 = vld [vmem:[%s0 + $0x1c] sm:$0xf]
    %v100 = vld [vmem:[%s0 + $0x20] sm:$0xf]
    %v101 = vld [vmem:[%s0 + $0x24] sm:$0xf]
    %v102 = vld [vmem:[%s0 + $0x28] sm:$0xf]
    %v103 = vld [vmem:[%s0 + $0x2c] sm:$0xf]
    %v104 = vld [vmem:[%s0 + $0x30] sm:$0xf]
    %v105 = vld [vmem:[%s0 + $0x34] sm:$0xf]
    %v106 = vld [vmem:[%s0 + $0x38] sm:$0xf]
    %v107 = vld [vmem:[%s0 + $0x3c] sm:$0xf]
    %v108 = vld [vmem:[%s1] sm:$0xff]
    %v109 = vld [vmem:[%s3] sm:$0xf]
    %v111 = vlaneseq
    %v112 = vshrl.u32 %v111, 7
    %v113 = vsub.s32 0, %v112
    %v114 = vrot.slane %v109, %v113
    %v115 = vlaneseq
    %v116 = vshrl.u32 %v115, 7
    %v117 = vsub.s32 1, %v116
    %v118 = vrot.slane %v109, %v117
    %v119 = vlaneseq
    %v120 = vshrl.u32 %v119, 7
    %v121 = vsub.s32 2, %v120
    %v122 = vrot.slane %v109, %v121
    %v123 = vlaneseq
    %v124 = vshrl.u32 %v123, 7
    %v125 = vsub.s32 3, %v124
    %v126 = vrot.slane %v109, %v125
    %v147 = vunpack.c.l.b16 %v92
    %v148 = vunpack.c.l.b16 %v93
    %v149 = vunpack.c.l.b16 %v94
    %v150 = vunpack.c.l.b16 %v95
    %v151 = vunpack.c.l.b16 %v96
    %v152 = vunpack.c.l.b16 %v97
    %v153 = vunpack.c.l.b16 %v98
    %v154 = vunpack.c.l.b16 %v99
    %v155 = vunpack.c.l.b16 %v100
    %v156 = vunpack.c.l.b16 %v101
    %v157 = vunpack.c.l.b16 %v102
    %v158 = vunpack.c.l.b16 %v103
    %v159 = vunpack.c.l.b16 %v104
    %v160 = vunpack.c.l.b16 %v105
    %v161 = vunpack.c.l.b16 %v106
    %v162 = vunpack.c.l.b16 %v107
    %v163 = vpack.c.b16 %v148, %v147
    %v164 = vpack.c.b16 %v150, %v149
    %v165 = vpack.c.b16 %v152, %v151
    %v166 = vpack.c.b16 %v154, %v153
    %v167 = vpack.c.b16 %v156, %v155
    %v168 = vpack.c.b16 %v158, %v157
    %v169 = vpack.c.b16 %v160, %v159
    %v170 = vpack.c.b16 %v162, %v161
    %v172 = vcombine.high %v108, %v108
    %v174 = vunpack.c.l.s4 1983009808
    %v175 = vunpack.c.0.s8 %v174
    %v176 = vlaneseq
    %v177 = vshrl.u32 %v176, 7
    %v178 = vsub.s32 %v175, %v177
    %v179 = vrot.slane %v108, %v178
    %v181 = vunpack.c.l.s4 1983009808
    %v182 = vunpack.c.0.s8 %v181
    %v183 = vlaneseq
    %v184 = vshrl.u32 %v183, 7
    %v185 = vsub.s32 %v182, %v184
    %v186 = vrot.slane %v172, %v185
    %v187 = vcombine.high %v179, %v179
    %v188 = vcombine.high %v186, %v186
    %vm189 = vcmask 31744
    %v191 = vsel %vm189, %v163, 0
    %v194 = vsel %vm189, %v164, 0
    %v197 = vsel %vm189, %v165, 0
    %v200 = vsel %vm189, %v166, 0
    %v203 = vsel %vm189, %v167, 0
    %v206 = vsel %vm189, %v168, 0
    %v209 = vsel %vm189, %v169, 0
    %v212 = vsel %vm189, %v170, 0
    %vm214 = vcmask 1041408
    %v216 = vsel %vm214, %v179, 0
    %v219 = vsel %vm214, %v187, 0
    %v222 = vsel %vm214, %v186, 0
    %v225 = vsel %vm214, %v188, 0
    %227 = vmatprep.subr.bf16.mxu0 0
    %228 = vmatpush1.bf16.msra.mxu0 0
    %229 = vmatprep.subr.bf16.mxu0 0
    %230 = vmatpush1.bf16.msra.mxu0 0
    %231 = vmatprep.subr.bf16.mxu0 0
    %232 = vmatpush1.bf16.msra.mxu0 0
    %233 = vmatprep.subr.bf16.mxu0 0
    %234 = vmatpush1.bf16.msra.mxu0 0
    %235 = vmatprep.subr.bf16.mxu0 0
    %236 = vmatpush1.bf16.msra.mxu0 0
    %237 = vmatprep.subr.bf16.mxu0 0
    %238 = vmatpush1.bf16.msra.mxu0 0
    %239 = vmatprep.subr.bf16.mxu0 0
    %240 = vmatpush1.bf16.msra.mxu0 0
    %241 = vmatprep.subr.bf16.mxu0 %v219
    %242 = vmatpush1.bf16.msra.mxu0 %v216
    %243 = vmatprep.subr.bf16.mxu0 0
    %244 = vmatpush2.bf16.msra.mxu0 0
    %245 = vmatprep.subr.bf16.mxu0 0
    %246 = vmatpush2.bf16.msra.mxu0 0
    %247 = vmatprep.subr.bf16.mxu0 0
    %248 = vmatpush2.bf16.msra.mxu0 0
    %249 = vmatprep.subr.bf16.mxu0 0
    %250 = vmatpush2.bf16.msra.mxu0 0
    %251 = vmatprep.subr.bf16.mxu0 0
    %252 = vmatpush2.bf16.msra.mxu0 0
    %253 = vmatprep.subr.bf16.mxu0 0
    %254 = vmatpush2.bf16.msra.mxu0 0
    %255 = vmatprep.subr.bf16.mxu0 0
    %256 = vmatpush2.bf16.msra.mxu0 0
    %257 = vmatprep.subr.bf16.mxu0 0
    %258 = vmatpush2.bf16.msra.mxu0 0
    %259 = vmatprep.mubr.bf16.mxu0 0
    %260 = vmatmul.mubr.bf16.gmra.mxu0 %v191
    %v261 = vpop.f32.mrf.mxu0
    %v262 = vadd.f32 %v114, %v261
    %v263 = vpop.f32.mrf.mxu0
    %v264 = vadd.f32 %v118, %v263
    %v265 = vpop.f32.mrf.mxu0
    %v266 = vadd.f32 %v114, %v265
    %v267 = vpop.f32.mrf.mxu0
    %v268 = vadd.f32 %v118, %v267
    %269 = vmatprep.mubr.bf16.mxu0 0
    %270 = vmatmul.mubr.bf16.gmra.mxu0 %v194
    %v271 = vpop.f32.mrf.mxu0
    %v272 = vadd.f32 %v114, %v271
    %v273 = vpop.f32.mrf.mxu0
    %v274 = vadd.f32 %v118, %v273
    %v275 = vpop.f32.mrf.mxu0
    %v276 = vadd.f32 %v114, %v275
    %v277 = vpop.f32.mrf.mxu0
    %v278 = vadd.f32 %v118, %v277
    %279 = vmatprep.mubr.bf16.mxu0 0
    %280 = vmatmul.mubr.bf16.gmra.mxu0 %v197
    %v281 = vpop.f32.mrf.mxu0
    %v282 = vadd.f32 %v114, %v281
    %v283 = vpop.f32.mrf.mxu0
    %v284 = vadd.f32 %v118, %v283
    %v285 = vpop.f32.mrf.mxu0
    %v286 = vadd.f32 %v114, %v285
    %v287 = vpop.f32.mrf.mxu0
    %v288 = vadd.f32 %v118, %v287
    %289 = vmatprep.mubr.bf16.mxu0 0
    %290 = vmatmul.mubr.bf16.gmra.mxu0 %v200
    %v291 = vpop.f32.mrf.mxu0
    %v292 = vadd.f32 %v114, %v291
    %v293 = vpop.f32.mrf.mxu0
    %v294 = vadd.f32 %v118, %v293
    %v295 = vpop.f32.mrf.mxu0
    %v296 = vadd.f32 %v114, %v295
    %v297 = vpop.f32.mrf.mxu0
    %v298 = vadd.f32 %v118, %v297
    %299 = vmatprep.mubr.bf16.mxu0 0
    %300 = vmatmul.mubr.bf16.gmra.mxu0 %v203
    %v301 = vpop.f32.mrf.mxu0
    %v302 = vadd.f32 %v114, %v301
    %v303 = vpop.f32.mrf.mxu0
    %v304 = vadd.f32 %v118, %v303
    %v305 = vpop.f32.mrf.mxu0
    %v306 = vadd.f32 %v114, %v305
    %v307 = vpop.f32.mrf.mxu0
    %v308 = vadd.f32 %v118, %v307
    %309 = vmatprep.mubr.bf16.mxu0 0
    %310 = vmatmul.mubr.bf16.gmra.mxu0 %v206
    %v311 = vpop.f32.mrf.mxu0
    %v312 = vadd.f32 %v114, %v311
    %v313 = vpop.f32.mrf.mxu0
    %v314 = vadd.f32 %v118, %v313
    %v315 = vpop.f32.mrf.mxu0
    %v316 = vadd.f32 %v114, %v315
    %v317 = vpop.f32.mrf.mxu0
    %v318 = vadd.f32 %v118, %v317
    %319 = vmatprep.mubr.bf16.mxu0 0
    %320 = vmatmul.mubr.bf16.gmra.mxu0 %v209
    %v321 = vpop.f32.mrf.mxu0
    %v322 = vadd.f32 %v114, %v321
    %v323 = vpop.f32.mrf.mxu0
    %v324 = vadd.f32 %v118, %v323
    %v325 = vpop.f32.mrf.mxu0
    %v326 = vadd.f32 %v114, %v325
    %v327 = vpop.f32.mrf.mxu0
    %v328 = vadd.f32 %v118, %v327
    %329 = vmatprep.mubr.bf16.mxu0 0
    %330 = vmatmul.mubr.bf16.gmra.mxu0 %v212
    %v331 = vpop.f32.mrf.mxu0
    %v332 = vadd.f32 %v114, %v331
    %v333 = vpop.f32.mrf.mxu0
    %v334 = vadd.f32 %v118, %v333
    %v335 = vpop.f32.mrf.mxu0
    %v336 = vadd.f32 %v114, %v335
    %v337 = vpop.f32.mrf.mxu0
    %v338 = vadd.f32 %v118, %v337
    %339 = vdwg.mxu0
    %340 = vmatprep.subr.bf16.mxu0 0
    %341 = vmatpush1.bf16.msra.mxu0 0
    %342 = vmatprep.subr.bf16.mxu0 0
    %343 = vmatpush1.bf16.msra.mxu0 0
    %344 = vmatprep.subr.bf16.mxu0 0
    %345 = vmatpush1.bf16.msra.mxu0 0
    %346 = vmatprep.subr.bf16.mxu0 0
    %347 = vmatpush1.bf16.msra.mxu0 0
    %348 = vmatprep.subr.bf16.mxu0 0
    %349 = vmatpush1.bf16.msra.mxu0 0
    %350 = vmatprep.subr.bf16.mxu0 0
    %351 = vmatpush1.bf16.msra.mxu0 0
    %352 = vmatprep.subr.bf16.mxu0 0
    %353 = vmatpush1.bf16.msra.mxu0 0
    %354 = vmatprep.subr.bf16.mxu0 %v225
    %355 = vmatpush1.bf16.msra.mxu0 %v222
    %356 = vmatprep.subr.bf16.mxu0 0
    %357 = vmatpush2.bf16.msra.mxu0 0
    %358 = vmatprep.subr.bf16.mxu0 0
    %359 = vmatpush2.bf16.msra.mxu0 0
    %360 = vmatprep.subr.bf16.mxu0 0
    %361 = vmatpush2.bf16.msra.mxu0 0
    %362 = vmatprep.subr.bf16.mxu0 0
    %363 = vmatpush2.bf16.msra.mxu0 0
    %364 = vmatprep.subr.bf16.mxu0 0
    %365 = vmatpush2.bf16.msra.mxu0 0
    %366 = vmatprep.subr.bf16.mxu0 0
    %367 = vmatpush2.bf16.msra.mxu0 0
    %368 = vmatprep.subr.bf16.mxu0 0
    %369 = vmatpush2.bf16.msra.mxu0 0
    %370 = vmatprep.subr.bf16.mxu0 0
    %371 = vmatpush2.bf16.msra.mxu0 0
    %372 = vmatprep.mubr.bf16.mxu0 0
    %373 = vmatmul.mubr.bf16.gmra.mxu0 %v191
    %v374 = vpop.f32.mrf.mxu0
    %v375 = vadd.f32 %v122, %v374
    %v376 = vpop.f32.mrf.mxu0
    %v377 = vadd.f32 %v126, %v376
    %v378 = vpop.f32.mrf.mxu0
    %v379 = vadd.f32 %v122, %v378
    %v380 = vpop.f32.mrf.mxu0
    %v381 = vadd.f32 %v126, %v380
    %382 = vmatprep.mubr.bf16.mxu0 0
    %383 = vmatmul.mubr.bf16.gmra.mxu0 %v194
    %v384 = vpop.f32.mrf.mxu0
    %v385 = vadd.f32 %v122, %v384
    %v386 = vpop.f32.mrf.mxu0
    %v387 = vadd.f32 %v126, %v386
    %v388 = vpop.f32.mrf.mxu0
    %v389 = vadd.f32 %v122, %v388
    %v390 = vpop.f32.mrf.mxu0
    %v391 = vadd.f32 %v126, %v390
    %392 = vmatprep.mubr.bf16.mxu0 0
    %393 = vmatmul.mubr.bf16.gmra.mxu0 %v197
    %v394 = vpop.f32.mrf.mxu0
    %v395 = vadd.f32 %v122, %v394
    %v396 = vpop.f32.mrf.mxu0
    %v397 = vadd.f32 %v126, %v396
    %v398 = vpop.f32.mrf.mxu0
    %v399 = vadd.f32 %v122, %v398
    %v400 = vpop.f32.mrf.mxu0
    %v401 = vadd.f32 %v126, %v400
    %402 = vmatprep.mubr.bf16.mxu0 0
    %403 = vmatmul.mubr.bf16.gmra.mxu0 %v200
    %v404 = vpop.f32.mrf.mxu0
    %v405 = vadd.f32 %v122, %v404
    %v406 = vpop.f32.mrf.mxu0
    %v407 = vadd.f32 %v126, %v406
    %v408 = vpop.f32.mrf.mxu0
    %v409 = vadd.f32 %v122, %v408
    %v410 = vpop.f32.mrf.mxu0
    %v411 = vadd.f32 %v126, %v410
    %412 = vmatprep.mubr.bf16.mxu0 0
    %413 = vmatmul.mubr.bf16.gmra.mxu0 %v203
    %v414 = vpop.f32.mrf.mxu0
    %v415 = vadd.f32 %v122, %v414
    %v416 = vpop.f32.mrf.mxu0
    %v417 = vadd.f32 %v126, %v416
    %v418 = vpop.f32.mrf.mxu0
    %v419 = vadd.f32 %v122, %v418
    %v420 = vpop.f32.mrf.mxu0
    %v421 = vadd.f32 %v126, %v420
    %422 = vmatprep.mubr.bf16.mxu0 0
    %423 = vmatmul.mubr.bf16.gmra.mxu0 %v206
    %v424 = vpop.f32.mrf.mxu0
    %v425 = vadd.f32 %v122, %v424
    %v426 = vpop.f32.mrf.mxu0
    %v427 = vadd.f32 %v126, %v426
    %v428 = vpop.f32.mrf.mxu0
    %v429 = vadd.f32 %v122, %v428
    %v430 = vpop.f32.mrf.mxu0
    %v431 = vadd.f32 %v126, %v430
    %432 = vmatprep.mubr.bf16.mxu0 0
    %433 = vmatmul.mubr.bf16.gmra.mxu0 %v209
    %v434 = vpop.f32.mrf.mxu0
    %v435 = vadd.f32 %v122, %v434
    %v436 = vpop.f32.mrf.mxu0
    %v437 = vadd.f32 %v126, %v436
    %v438 = vpop.f32.mrf.mxu0
    %v439 = vadd.f32 %v122, %v438
    %v440 = vpop.f32.mrf.mxu0
    %v441 = vadd.f32 %v126, %v440
    %442 = vmatprep.mubr.bf16.mxu0 0
    %443 = vmatmul.mubr.bf16.gmra.mxu0 %v212
    %v444 = vpop.f32.mrf.mxu0
    %v445 = vadd.f32 %v122, %v444
    %v446 = vpop.f32.mrf.mxu0
    %v447 = vadd.f32 %v126, %v446
    %v448 = vpop.f32.mrf.mxu0
    %v449 = vadd.f32 %v122, %v448
    %v450 = vpop.f32.mrf.mxu0
    %v451 = vadd.f32 %v126, %v450
    %452 = vdwg.mxu0
    %v453 = vpack.c.bf16 %v266, %v262
    %v454 = vpack.c.bf16 %v268, %v264
    %v455 = vpack.c.bf16 %v379, %v375
    %v456 = vpack.c.bf16 %v381, %v377
    %v457 = vpack.c.bf16 %v276, %v272
    %v458 = vpack.c.bf16 %v278, %v274
    %v459 = vpack.c.bf16 %v389, %v385
    %v460 = vpack.c.bf16 %v391, %v387
    %v461 = vpack.c.bf16 %v286, %v282
    %v462 = vpack.c.bf16 %v288, %v284
    %v463 = vpack.c.bf16 %v399, %v395
    %v464 = vpack.c.bf16 %v401, %v397
    %v465 = vpack.c.bf16 %v296, %v292
    %v466 = vpack.c.bf16 %v298, %v294
    %v467 = vpack.c.bf16 %v409, %v405
    %v468 = vpack.c.bf16 %v411, %v407
    %v469 = vpack.c.bf16 %v306, %v302
    %v470 = vpack.c.bf16 %v308, %v304
    %v471 = vpack.c.bf16 %v419, %v415
    %v472 = vpack.c.bf16 %v421, %v417
    %v473 = vpack.c.bf16 %v316, %v312
    %v474 = vpack.c.bf16 %v318, %v314
    %v475 = vpack.c.bf16 %v429, %v425
    %v476 = vpack.c.bf16 %v431, %v427
    %v477 = vpack.c.bf16 %v326, %v322
    %v478 = vpack.c.bf16 %v328, %v324
    %v479 = vpack.c.bf16 %v439, %v435
    %v480 = vpack.c.bf16 %v441, %v437
    %v481 = vpack.c.bf16 %v336, %v332
    %v482 = vpack.c.bf16 %v338, %v334
    %v483 = vpack.c.bf16 %v449, %v445
    %v484 = vpack.c.bf16 %v451, %v447
    %v517 = vunpack.c.l.b16 %v453
    %v518 = vunpack.c.l.b16 %v454
    %v519 = vunpack.c.l.b16 %v455
    %v520 = vunpack.c.l.b16 %v456
    %v521 = vunpack.c.h.b16 %v453
    %v522 = vunpack.c.h.b16 %v454
    %v523 = vunpack.c.h.b16 %v455
    %v524 = vunpack.c.h.b16 %v456
    %v525 = vunpack.c.l.b16 %v457
    %v526 = vunpack.c.l.b16 %v458
    %v527 = vunpack.c.l.b16 %v459
    %v528 = vunpack.c.l.b16 %v460
    %v529 = vunpack.c.h.b16 %v457
    %v530 = vunpack.c.h.b16 %v458
    %v531 = vunpack.c.h.b16 %v459
    %v532 = vunpack.c.h.b16 %v460
    %v533 = vunpack.c.l.b16 %v461
    %v534 = vunpack.c.l.b16 %v462
    %v535 = vunpack.c.l.b16 %v463
    %v536 = vunpack.c.l.b16 %v464
    %v537 = vunpack.c.h.b16 %v461
    %v538 = vunpack.c.h.b16 %v462
    %v539 = vunpack.c.h.b16 %v463
    %v540 = vunpack.c.h.b16 %v464
    %v541 = vunpack.c.l.b16 %v465
    %v542 = vunpack.c.l.b16 %v466
    %v543 = vunpack.c.l.b16 %v467
    %v544 = vunpack.c.l.b16 %v468
    %v545 = vunpack.c.h.b16 %v465
    %v546 = vunpack.c.h.b16 %v466
    %v547 = vunpack.c.h.b16 %v467
    %v548 = vunpack.c.h.b16 %v468
    %v549 = vunpack.c.l.b16 %v469
    %v550 = vunpack.c.l.b16 %v470
    %v551 = vunpack.c.l.b16 %v471
    %v552 = vunpack.c.l.b16 %v472
    %v553 = vunpack.c.h.b16 %v469
    %v554 = vunpack.c.h.b16 %v470
    %v555 = vunpack.c.h.b16 %v471
    %v556 = vunpack.c.h.b16 %v472
    %v557 = vunpack.c.l.b16 %v473
    %v558 = vunpack.c.l.b16 %v474
    %v559 = vunpack.c.l.b16 %v475
    %v560 = vunpack.c.l.b16 %v476
    %v561 = vunpack.c.h.b16 %v473
    %v562 = vunpack.c.h.b16 %v474
    %v563 = vunpack.c.h.b16 %v475
    %v564 = vunpack.c.h.b16 %v476
    %v565 = vunpack.c.l.b16 %v477
    %v566 = vunpack.c.l.b16 %v478
    %v567 = vunpack.c.l.b16 %v479
    %v568 = vunpack.c.l.b16 %v480
    %v569 = vunpack.c.h.b16 %v477
    %v570 = vunpack.c.h.b16 %v478
    %v571 = vunpack.c.h.b16 %v479
    %v572 = vunpack.c.h.b16 %v480
    %v573 = vunpack.c.l.b16 %v481
    %v574 = vunpack.c.l.b16 %v482
    %v575 = vunpack.c.l.b16 %v483
    %v576 = vunpack.c.l.b16 %v484
    %v577 = vunpack.c.h.b16 %v481
    %v578 = vunpack.c.h.b16 %v482
    %v579 = vunpack.c.h.b16 %v483
    %v580 = vunpack.c.h.b16 %v484
    %v581 = vpack.c.b16 %v518, %v517
    %v582 = vpack.c.b16 %v520, %v519
    %v583 = vpack.c.b16 %v522, %v521
    %v584 = vpack.c.b16 %v524, %v523
    %v585 = vpack.c.b16 %v526, %v525
    %v586 = vpack.c.b16 %v528, %v527
    %v587 = vpack.c.b16 %v530, %v529
    %v588 = vpack.c.b16 %v532, %v531
    %v589 = vpack.c.b16 %v534, %v533
    %v590 = vpack.c.b16 %v536, %v535
    %v591 = vpack.c.b16 %v538, %v537
    %v592 = vpack.c.b16 %v540, %v539
    %v593 = vpack.c.b16 %v542, %v541
    %v594 = vpack.c.b16 %v544, %v543
    %v595 = vpack.c.b16 %v546, %v545
    %v596 = vpack.c.b16 %v548, %v547
    %v597 = vpack.c.b16 %v550, %v549
    %v598 = vpack.c.b16 %v552, %v551
    %v599 = vpack.c.b16 %v554, %v553
    %v600 = vpack.c.b16 %v556, %v555
    %v601 = vpack.c.b16 %v558, %v557
    %v602 = vpack.c.b16 %v560, %v559
    %v603 = vpack.c.b16 %v562, %v561
    %v604 = vpack.c.b16 %v564, %v563
    %v605 = vpack.c.b16 %v566, %v565
    %v606 = vpack.c.b16 %v568, %v567
    %v607 = vpack.c.b16 %v570, %v569
    %v608 = vpack.c.b16 %v572, %v571
    %v609 = vpack.c.b16 %v574, %v573
    %v610 = vpack.c.b16 %v576, %v575
    %v611 = vpack.c.b16 %v578, %v577
    %v612 = vpack.c.b16 %v580, %v579
    %645 = vst [vmem:[#allocation2] sm:$0xff] %v581
    %646 = vst [vmem:[#allocation2 + $0x8] sm:$0xff] %v582
    %647 = vst [vmem:[#allocation2 + $0x10] sm:$0xff] %v583
    %648 = vst [vmem:[#allocation2 + $0x18] sm:$0xff] %v584
    %649 = vst [vmem:[#allocation2 + $0x20] sm:$0xff] %v585
    %650 = vst [vmem:[#allocation2 + $0x28] sm:$0xff] %v586
    %651 = vst [vmem:[#allocation2 + $0x30] sm:$0xff] %v587
    %652 = vst [vmem:[#allocation2 + $0x38] sm:$0xff] %v588
    %653 = vst [vmem:[#allocation2 + $0x40] sm:$0xff] %v589
    %654 = vst [vmem:[#allocation2 + $0x48] sm:$0xff] %v590
    %655 = vst [vmem:[#allocation2 + $0x50] sm:$0xff] %v591
    %656 = vst [vmem:[#allocation2 + $0x58] sm:$0xff] %v592
    %657 = vst [vmem:[#allocation2 + $0x60] sm:$0xff] %v593
    %658 = vst [vmem:[#allocation2 + $0x68] sm:$0xff] %v594
    %659 = vst [vmem:[#allocation2 + $0x70] sm:$0xff] %v595
    %660 = vst [vmem:[#allocation2 + $0x78] sm:$0xff] %v596
    %661 = vst [vmem:[#allocation2 + $0x80] sm:$0xff] %v597
    %662 = vst [vmem:[#allocation2 + $0x88] sm:$0xff] %v598
    %663 = vst [vmem:[#allocation2 + $0x90] sm:$0xff] %v599
    %664 = vst [vmem:[#allocation2 + $0x98] sm:$0xff] %v600
    %665 = vst [vmem:[#allocation2 + $0xa0] sm:$0xff] %v601
    %666 = vst [vmem:[#allocation2 + $0xa8] sm:$0xff] %v602
    %667 = vst [vmem:[#allocation2 + $0xb0] sm:$0xff] %v603
    %668 = vst [vmem:[#allocation2 + $0xb8] sm:$0xff] %v604
    %669 = vst [vmem:[#allocation2 + $0xc0] sm:$0xff] %v605
    %670 = vst [vmem:[#allocation2 + $0xc8] sm:$0xff] %v606
    %671 = vst [vmem:[#allocation2 + $0xd0] sm:$0xff] %v607
    %672 = vst [vmem:[#allocation2 + $0xd8] sm:$0xff] %v608
    %673 = vst [vmem:[#allocation2 + $0xe0] sm:$0xff] %v609
    %674 = vst [vmem:[#allocation2 + $0xe8] sm:$0xff] %v610
    %675 = vst [vmem:[#allocation2 + $0xf0] sm:$0xff] %v611
    %676 = vst [vmem:[#allocation2 + $0xf8] sm:$0xff] %v612
    %v677 = vld [vmem:[#allocation3] sm:$0xf]
    %v678 = vld [vmem:[#allocation3 + $0x4] sm:$0xf]
    %v679 = vld [vmem:[#allocation4] sm:$0xf]
    %v680 = vld [vmem:[#allocation4 + $0x4] sm:$0xf]
    %v681 = vld [vmem:[#allocation5] sm:$0xff]
    %v682 = vld [vmem:[#allocation5 + $0x8] sm:$0xff]
    %v683 = vld [vmem:[#allocation6] sm:$0xff]
    %v684 = vld [vmem:[#allocation6 + $0x8] sm:$0xff]
    %s685 = smul.u32 0, 4
    %s686 = smul.addr %s685, 4
    %s687 = scalar_lea.vmem [#allocation2], %s686
    %v688 = vld [vmem:[%s687] sm:$0xff]
    %v689 = vld [vmem:[%s687 + $0x8] sm:$0xff]
    %v690 = vld [vmem:[%s687 + $0x10] sm:$0xff]
    %v691 = vld [vmem:[%s687 + $0x18] sm:$0xff]
    %v692 = vunpack.c.l.bf16 %v688
    %v693 = vunpack.c.h.bf16 %v688
    %v694 = vunpack.c.l.bf16 %v689
    %v695 = vunpack.c.h.bf16 %v689
    %v696 = vunpack.c.l.bf16 %v690
    %v697 = vunpack.c.h.bf16 %v690
    %v698 = vunpack.c.l.bf16 %v691
    %v699 = vunpack.c.h.bf16 %v691
    %v700 = vld [vmem:[#allocation7] sm:$0xff]
    %v701 = vld [vmem:[#allocation7 + $0x8] sm:$0xff]
    %v702 = vld [vmem:[#allocation7 + $0x10] sm:$0xff]
    %v703 = vld [vmem:[#allocation7 + $0x18] sm:$0xff]
    %v704 = vld [vmem:[#allocation7 + $0x20] sm:$0xff]
    %v705 = vld [vmem:[#allocation7 + $0x28] sm:$0xff]
    %v706 = vld [vmem:[#allocation7 + $0x30] sm:$0xff]
    %v707 = vld [vmem:[#allocation7 + $0x38] sm:$0xff]
    %v708 = vld [vmem:[#allocation7 + $0x40] sm:$0xff]
    %v709 = vld [vmem:[#allocation7 + $0x48] sm:$0xff]
    %v710 = vld [vmem:[#allocation7 + $0x50] sm:$0xff]
    %v711 = vld [vmem:[#allocation7 + $0x58] sm:$0xff]
    %v712 = vld [vmem:[#allocation7 + $0x60] sm:$0xff]
    %v713 = vld [vmem:[#allocation7 + $0x68] sm:$0xff]
    %v714 = vld [vmem:[#allocation7 + $0x70] sm:$0xff]
    %v715 = vld [vmem:[#allocation7 + $0x78] sm:$0xff]
    %v716 = vld [vmem:[#allocation7 + $0x80] sm:$0xff]
    %v717 = vld [vmem:[#allocation7 + $0x88] sm:$0xff]
    %v718 = vld [vmem:[#allocation7 + $0x90] sm:$0xff]
    %v719 = vld [vmem:[#allocation7 + $0x98] sm:$0xff]
    %v720 = vld [vmem:[#allocation7 + $0xa0] sm:$0xff]
    %v721 = vld [vmem:[#allocation7 + $0xa8] sm:$0xff]
    %v722 = vld [vmem:[#allocation7 + $0xb0] sm:$0xff]
    %v723 = vld [vmem:[#allocation7 + $0xb8] sm:$0xff]
    %v724 = vld [vmem:[#allocation7 + $0xc0] sm:$0xff]
    %v725 = vld [vmem:[#allocation7 + $0xc8] sm:$0xff]
    %v726 = vld [vmem:[#allocation7 + $0xd0] sm:$0xff]
    %v727 = vld [vmem:[#allocation7 + $0xd8] sm:$0xff]
    %v728 = vld [vmem:[#allocation7 + $0xe0] sm:$0xff]
    %v729 = vld [vmem:[#allocation7 + $0xe8] sm:$0xff]
    %v730 = vld [vmem:[#allocation7 + $0xf0] sm:$0xff]
    %v731 = vld [vmem:[#allocation7 + $0xf8] sm:$0xff]
    %v734 = vunpack.c.l.b16 %v677
    %v735 = vunpack.c.l.b16 %v678
    %v736 = vpack.c.b16 %v735, %v734
    %v770 = vunpack.c.l.b16 %v700
    %v771 = vunpack.c.h.b16 %v700
    %v772 = vunpack.c.l.b16 %v701
    %v773 = vunpack.c.h.b16 %v701
    %v774 = vunpack.c.l.b16 %v702
    %v775 = vunpack.c.h.b16 %v702
    %v776 = vunpack.c.l.b16 %v703
    %v777 = vunpack.c.h.b16 %v703
    %v778 = vunpack.c.l.b16 %v704
    %v779 = vunpack.c.h.b16 %v704
    %v780 = vunpack.c.l.b16 %v705
    %v781 = vunpack.c.h.b16 %v705
    %v782 = vunpack.c.l.b16 %v706
    %v783 = vunpack.c.h.b16 %v706
    %v784 = vunpack.c.l.b16 %v707
    %v785 = vunpack.c.h.b16 %v707
    %v786 = vunpack.c.l.b16 %v708
    %v787 = vunpack.c.h.b16 %v708
    %v788 = vunpack.c.l.b16 %v709
    %v789 = vunpack.c.h.b16 %v709
    %v790 = vunpack.c.l.b16 %v710
    %v791 = vunpack.c.h.b16 %v710
    %v792 = vunpack.c.l.b16 %v711
    %v793 = vunpack.c.h.b16 %v711
    %v794 = vunpack.c.l.b16 %v712
    %v795 = vunpack.c.h.b16 %v712
    %v796 = vunpack.c.l.b16 %v713
    %v797 = vunpack.c.h.b16 %v713
    %v798 = vunpack.c.l.b16 %v714
    %v799 = vunpack.c.h.b16 %v714
    %v800 = vunpack.c.l.b16 %v715
    %v801 = vunpack.c.h.b16 %v715
    %v802 = vunpack.c.l.b16 %v716
    %v803 = vunpack.c.h.b16 %v716
    %v804 = vunpack.c.l.b16 %v717
    %v805 = vunpack.c.h.b16 %v717
    %v806 = vunpack.c.l.b16 %v718
    %v807 = vunpack.c.h.b16 %v718
    %v808 = vunpack.c.l.b16 %v719
    %v809 = vunpack.c.h.b16 %v719
    %v810 = vunpack.c.l.b16 %v720
    %v811 = vunpack.c.h.b16 %v720
    %v812 = vunpack.c.l.b16 %v721
    %v813 = vunpack.c.h.b16 %v721
    %v814 = vunpack.c.l.b16 %v722
    %v815 = vunpack.c.h.b16 %v722
    %v816 = vunpack.c.l.b16 %v723
    %v817 = vunpack.c.h.b16 %v723
    %v818 = vunpack.c.l.b16 %v724
    %v819 = vunpack.c.h.b16 %v724
    %v820 = vunpack.c.l.b16 %v725
    %v821 = vunpack.c.h.b16 %v725
    %v822 = vunpack.c.l.b16 %v726
    %v823 = vunpack.c.h.b16 %v726
    %v824 = vunpack.c.l.b16 %v727
    %v825 = vunpack.c.h.b16 %v727
    %v826 = vunpack.c.l.b16 %v728
    %v827 = vunpack.c.h.b16 %v728
    %v828 = vunpack.c.l.b16 %v729
    %v829 = vunpack.c.h.b16 %v729
    %v830 = vunpack.c.l.b16 %v730
    %v831 = vunpack.c.h.b16 %v730
    %v832 = vunpack.c.l.b16 %v731
    %v833 = vunpack.c.h.b16 %v731
    %v834 = vpack.c.b16 %v774, %v770
    %v835 = vpack.c.b16 %v775, %v771
    %v836 = vpack.c.b16 %v776, %v772
    %v837 = vpack.c.b16 %v777, %v773
    %v838 = vpack.c.b16 %v782, %v778
    %v839 = vpack.c.b16 %v783, %v779
    %v840 = vpack.c.b16 %v784, %v780
    %v841 = vpack.c.b16 %v785, %v781
    %v842 = vpack.c.b16 %v790, %v786
    %v843 = vpack.c.b16 %v791, %v787
    %v844 = vpack.c.b16 %v792, %v788
    %v845 = vpack.c.b16 %v793, %v789
    %v846 = vpack.c.b16 %v798, %v794
    %v847 = vpack.c.b16 %v799, %v795
    %v848 = vpack.c.b16 %v800, %v796
    %v849 = vpack.c.b16 %v801, %v797
    %v850 = vpack.c.b16 %v806, %v802
    %v851 = vpack.c.b16 %v807, %v803
    %v852 = vpack.c.b16 %v808, %v804
    %v853 = vpack.c.b16 %v809, %v805
    %v854 = vpack.c.b16 %v814, %v810
    %v855 = vpack.c.b16 %v815, %v811
    %v856 = vpack.c.b16 %v816, %v812
    %v857 = vpack.c.b16 %v817, %v813
    %v858 = vpack.c.b16 %v822, %v818
    %v859 = vpack.c.b16 %v823, %v819
    %v860 = vpack.c.b16 %v824, %v820
    %v861 = vpack.c.b16 %v825, %v821
    %v862 = vpack.c.b16 %v830, %v826
    %v863 = vpack.c.b16 %v831, %v827
    %v864 = vpack.c.b16 %v832, %v828
    %v865 = vpack.c.b16 %v833, %v829
    %898 = vmatprep.subr.bf16.mxu0 %v863
    %899 = vmatpush1.bf16.msra.mxu0 %v862
    %900 = vmatprep.subr.bf16.mxu0 %v859
    %901 = vmatpush1.bf16.msra.mxu0 %v858
    %902 = vmatprep.subr.bf16.mxu0 %v855
    %903 = vmatpush1.bf16.msra.mxu0 %v854
    %904 = vmatprep.subr.bf16.mxu0 %v851
    %905 = vmatpush1.bf16.msra.mxu0 %v850
    %906 = vmatprep.subr.bf16.mxu0 %v847
    %907 = vmatpush1.bf16.msra.mxu0 %v846
    %908 = vmatprep.subr.bf16.mxu0 %v843
    %909 = vmatpush1.bf16.msra.mxu0 %v842
    %910 = vmatprep.subr.bf16.mxu0 %v839
    %911 = vmatpush1.bf16.msra.mxu0 %v838
    %912 = vmatprep.subr.bf16.mxu0 %v835
    %913 = vmatpush1.bf16.msra.mxu0 %v834
    %914 = vmatprep.subr.bf16.mxu0 0
    %915 = vmatpush2.bf16.msra.mxu0 0
    %916 = vmatprep.subr.bf16.mxu0 0
    %917 = vmatpush2.bf16.msra.mxu0 0
    %918 = vmatprep.subr.bf16.mxu0 0
    %919 = vmatpush2.bf16.msra.mxu0 0
    %920 = vmatprep.subr.bf16.mxu0 0
    %921 = vmatpush2.bf16.msra.mxu0 0
    %922 = vmatprep.subr.bf16.mxu0 0
    %923 = vmatpush2.bf16.msra.mxu0 0
    %924 = vmatprep.subr.bf16.mxu0 0
    %925 = vmatpush2.bf16.msra.mxu0 0
    %926 = vmatprep.subr.bf16.mxu0 0
    %927 = vmatpush2.bf16.msra.mxu0 0
    %928 = vmatprep.subr.bf16.mxu0 0
    %929 = vmatpush2.bf16.msra.mxu0 0
    %930 = vmatprep.mubr.bf16.mxu0 0
    %931 = vmatmul.mubr.bf16.gmra.mxu0 %v736
    %v932 = vpop.f32.mrf.mxu0
    %v933 = vadd.f32 0.0, %v932
    %v934 = vpop.f32.mrf.mxu0
    %v935 = vadd.f32 0.0, %v934
    %v936 = vpop.f32.mrf.mxu0
    %v937 = vadd.f32 0.0, %v936
    %v938 = vpop.f32.mrf.mxu0
    %v939 = vadd.f32 0.0, %v938
    %940 = vdwg.mxu0
    %941 = vmatprep.subr.bf16.mxu0 %v865
    %942 = vmatpush1.bf16.msra.mxu0 %v864
    %943 = vmatprep.subr.bf16.mxu0 %v861
    %944 = vmatpush1.bf16.msra.mxu0 %v860
    %945 = vmatprep.subr.bf16.mxu0 %v857
    %946 = vmatpush1.bf16.msra.mxu0 %v856
    %947 = vmatprep.subr.bf16.mxu0 %v853
    %948 = vmatpush1.bf16.msra.mxu0 %v852
    %949 = vmatprep.subr.bf16.mxu0 %v849
    %950 = vmatpush1.bf16.msra.mxu0 %v848
    %951 = vmatprep.subr.bf16.mxu0 %v845
    %952 = vmatpush1.bf16.msra.mxu0 %v844
    %953 = vmatprep.subr.bf16.mxu0 %v841
    %954 = vmatpush1.bf16.msra.mxu0 %v840
    %955 = vmatprep.subr.bf16.mxu0 %v837
    %956 = vmatpush1.bf16.msra.mxu0 %v836
    %957 = vmatprep.subr.bf16.mxu0 0
    %958 = vmatpush2.bf16.msra.mxu0 0
    %959 = vmatprep.subr.bf16.mxu0 0
    %960 = vmatpush2.bf16.msra.mxu0 0
    %961 = vmatprep.subr.bf16.mxu0 0
    %962 = vmatpush2.bf16.msra.mxu0 0
    %963 = vmatprep.subr.bf16.mxu0 0
    %964 = vmatpush2.bf16.msra.mxu0 0
    %965 = vmatprep.subr.bf16.mxu0 0
    %966 = vmatpush2.bf16.msra.mxu0 0
    %967 = vmatprep.subr.bf16.mxu0 0
    %968 = vmatpush2.bf16.msra.mxu0 0
    %969 = vmatprep.subr.bf16.mxu0 0
    %970 = vmatpush2.bf16.msra.mxu0 0
    %971 = vmatprep.subr.bf16.mxu0 0
    %972 = vmatpush2.bf16.msra.mxu0 0
    %973 = vmatprep.mubr.bf16.mxu0 0
    %974 = vmatmul.mubr.bf16.gmra.mxu0 %v736
    %v975 = vpop.f32.mrf.mxu0
    %v976 = vadd.f32 0.0, %v975
    %v977 = vpop.f32.mrf.mxu0
    %v978 = vadd.f32 0.0, %v977
    %v979 = vpop.f32.mrf.mxu0
    %v980 = vadd.f32 0.0, %v979
    %v981 = vpop.f32.mrf.mxu0
    %v982 = vadd.f32 0.0, %v981
    %983 = vdwg.mxu0
    %v984 = vadd.f32 %v692, %v933
    %v985 = vadd.f32 %v693, %v935
    %v986 = vadd.f32 %v694, %v976
    %v987 = vadd.f32 %v695, %v978
    %v988 = vadd.f32 %v696, %v937
    %v989 = vadd.f32 %v697, %v939
    %v990 = vadd.f32 %v698, %v980
    %v991 = vadd.f32 %v699, %v982
    %v992 = vxor.u32 %v984, 2147483648
    %v993 = vxor.u32 %v988, 2147483648
    %v994 = vmul.f32 %v992, 1.442695
    %v995 = vpow.pop %v994
    %v996 = vmul.f32 %v993, 1.442695
    %v997 = vpow.pop %v996
    %v998 = vadd.f32 %v995, 1.0
    %v999 = vadd.f32 %v997, 1.0
    %v1000 = vrcp.pop %v998
    %v1001 = vmul.f32 1.0, %v1000
    %v1002 = vrcp.pop %v999
    %v1003 = vmul.f32 1.0, %v1002
    %v1004 = vxor.u32 %v985, 2147483648
    %v1005 = vxor.u32 %v989, 2147483648
    %v1006 = vmul.f32 %v1004, 1.442695
    %v1007 = vpow.pop %v1006
    %v1008 = vmul.f32 %v1005, 1.442695
    %v1009 = vpow.pop %v1008
    %v1010 = vadd.f32 %v1007, 1.0
    %v1011 = vadd.f32 %v1009, 1.0
    %v1012 = vrcp.pop %v1010
    %v1013 = vmul.f32 1.0, %v1012
    %v1014 = vrcp.pop %v1011
    %v1015 = vmul.f32 1.0, %v1014
    %v1016 = vtanh.pop %v986
    %v1017 = vtanh.pop %v990
    %v1018 = vxor.u32 %v987, 2147483648
    %v1019 = vxor.u32 %v991, 2147483648
    %v1020 = vmul.f32 %v1018, 1.442695
    %v1021 = vpow.pop %v1020
    %v1022 = vmul.f32 %v1019, 1.442695
    %v1023 = vpow.pop %v1022
    %v1024 = vadd.f32 %v1021, 1.0
    %v1025 = vadd.f32 %v1023, 1.0
    %v1026 = vrcp.pop %v1024
    %v1027 = vmul.f32 1.0, %v1026
    %v1028 = vrcp.pop %v1025
    %v1029 = vmul.f32 1.0, %v1028
    %v1030 = vmul.f32 %v1013, %v681
    %v1031 = vmul.f32 %v1015, %v682
    %v1032 = vmul.f32 %v1001, %v1016
    %v1033 = vmul.f32 %v1003, %v1017
    %v1034 = vadd.f32 %v1030, %v1032
    %v1035 = vadd.f32 %v1031, %v1033
    %v1036 = vtanh.pop %v1034
    %v1037 = vtanh.pop %v1035
    %v1038 = vmul.f32 %v1027, %v1036
    %v1039 = vmul.f32 %v1029, %v1037
    %v1040 = vpack.c.bf16 %v1039, %v1038
    %v1041 = vld [vmem:[#allocation9] sm:$0xff]
    %v1042 = vld [vmem:[#allocation9 + $0x8] sm:$0xff]
    %v1043 = vld [vmem:[#allocation9 + $0x10] sm:$0xff]
    %v1044 = vld [vmem:[#allocation9 + $0x18] sm:$0xff]
    %v1045 = vld [vmem:[#allocation9 + $0x20] sm:$0xff]
    %v1046 = vld [vmem:[#allocation9 + $0x28] sm:$0xff]
    %v1047 = vld [vmem:[#allocation9 + $0x30] sm:$0xff]
    %v1048 = vld [vmem:[#allocation9 + $0x38] sm:$0xff]
    %v1049 = vld [vmem:[#allocation9 + $0x40] sm:$0xff]
    %v1050 = vld [vmem:[#allocation9 + $0x48] sm:$0xff]
    %v1051 = vld [vmem:[#allocation9 + $0x50] sm:$0xff]
    %v1052 = vld [vmem:[#allocation9 + $0x58] sm:$0xff]
    %v1053 = vld [vmem:[#allocation9 + $0x60] sm:$0xff]
    %v1054 = vld [vmem:[#allocation9 + $0x68] sm:$0xff]
    %v1055 = vld [vmem:[#allocation9 + $0x70] sm:$0xff]
    %v1056 = vld [vmem:[#allocation9 + $0x78] sm:$0xff]
    %v1057 = vld [vmem:[#allocation9 + $0x80] sm:$0xff]
    %v1058 = vld [vmem:[#allocation9 + $0x88] sm:$0xff]
    %v1059 = vld [vmem:[#allocation9 + $0x90] sm:$0xff]
    %v1060 = vld [vmem:[#allocation9 + $0x98] sm:$0xff]
    %v1061 = vld [vmem:[#allocation9 + $0xa0] sm:$0xff]
    %v1062 = vld [vmem:[#allocation9 + $0xa8] sm:$0xff]
    %v1063 = vld [vmem:[#allocation9 + $0xb0] sm:$0xff]
    %v1064 = vld [vmem:[#allocation9 + $0xb8] sm:$0xff]
    %v1065 = vld [vmem:[#allocation9 + $0xc0] sm:$0xff]
    %v1066 = vld [vmem:[#allocation9 + $0xc8] sm:$0xff]
    %v1067 = vld [vmem:[#allocation9 + $0xd0] sm:$0xff]
    %v1068 = vld [vmem:[#allocation9 + $0xd8] sm:$0xff]
    %v1069 = vld [vmem:[#allocation9 + $0xe0] sm:$0xff]
    %v1070 = vld [vmem:[#allocation9 + $0xe8] sm:$0xff]
    %v1071 = vld [vmem:[#allocation9 + $0xf0] sm:$0xff]
    %v1072 = vld [vmem:[#allocation9 + $0xf8] sm:$0xff]
    %v1073 = vld [vmem:[#allocation11] sm:$0xff]
    %v1074 = vld [vmem:[#allocation11 + $0x8] sm:$0xff]
    %v1075 = vld [vmem:[#allocation11 + $0x10] sm:$0xff]
    %v1076 = vld [vmem:[#allocation11 + $0x18] sm:$0xff]
    %v1077 = vld [vmem:[#allocation11 + $0x20] sm:$0xff]
    %v1078 = vld [vmem:[#allocation11 + $0x28] sm:$0xff]
    %v1079 = vld [vmem:[#allocation11 + $0x30] sm:$0xff]
    %v1080 = vld [vmem:[#allocation11 + $0x38] sm:$0xff]
    %v1081 = vld [vmem:[#allocation11 + $0x40] sm:$0xff]
    %v1082 = vld [vmem:[#allocation11 + $0x48] sm:$0xff]
    %v1083 = vld [vmem:[#allocation11 + $0x50] sm:$0xff]
    %v1084 = vld [vmem:[#allocation11 + $0x58] sm:$0xff]
    %v1085 = vld [vmem:[#allocation11 + $0x60] sm:$0xff]
    %v1086 = vld [vmem:[#allocation11 + $0x68] sm:$0xff]
    %v1087 = vld [vmem:[#allocation11 + $0x70] sm:$0xff]
    %v1088 = vld [vmem:[#allocation11 + $0x78] sm:$0xff]
    %v1089 = vld [vmem:[#allocation11 + $0x80] sm:$0xff]
    %v1090 = vld [vmem:[#allocation11 + $0x88] sm:$0xff]
    %v1091 = vld [vmem:[#allocation11 + $0x90] sm:$0xff]
    %v1092 = vld [vmem:[#allocation11 + $0x98] sm:$0xff]
    %v1093 = vld [vmem:[#allocation11 + $0xa0] sm:$0xff]
    %v1094 = vld [vmem:[#allocation11 + $0xa8] sm:$0xff]
    %v1095 = vld [vmem:[#allocation11 + $0xb0] sm:$0xff]
    %v1096 = vld [vmem:[#allocation11 + $0xb8] sm:$0xff]
    %v1097 = vld [vmem:[#allocation11 + $0xc0] sm:$0xff]
    %v1098 = vld [vmem:[#allocation11 + $0xc8] sm:$0xff]
    %v1099 = vld [vmem:[#allocation11 + $0xd0] sm:$0xff]
    %v1100 = vld [vmem:[#allocation11 + $0xd8] sm:$0xff]
    %v1101 = vld [vmem:[#allocation11 + $0xe0] sm:$0xff]
    %v1102 = vld [vmem:[#allocation11 + $0xe8] sm:$0xff]
    %v1103 = vld [vmem:[#allocation11 + $0xf0] sm:$0xff]
    %v1104 = vld [vmem:[#allocation11 + $0xf8] sm:$0xff]
    %v1107 = vunpack.c.l.b16 %v679
    %v1108 = vunpack.c.l.b16 %v680
    %v1109 = vpack.c.b16 %v1108, %v1107
    %v1143 = vunpack.c.l.b16 %v1073
    %v1144 = vunpack.c.h.b16 %v1073
    %v1145 = vunpack.c.l.b16 %v1074
    %v1146 = vunpack.c.h.b16 %v1074
    %v1147 = vunpack.c.l.b16 %v1075
    %v1148 = vunpack.c.h.b16 %v1075
    %v1149 = vunpack.c.l.b16 %v1076
    %v1150 = vunpack.c.h.b16 %v1076
    %v1151 = vunpack.c.l.b16 %v1077
    %v1152 = vunpack.c.h.b16 %v1077
    %v1153 = vunpack.c.l.b16 %v1078
    %v1154 = vunpack.c.h.b16 %v1078
    %v1155 = vunpack.c.l.b16 %v1079
    %v1156 = vunpack.c.h.b16 %v1079
    %v1157 = vunpack.c.l.b16 %v1080
    %v1158 = vunpack.c.h.b16 %v1080
    %v1159 = vunpack.c.l.b16 %v1081
    %v1160 = vunpack.c.h.b16 %v1081
    %v1161 = vunpack.c.l.b16 %v1082
    %v1162 = vunpack.c.h.b16 %v1082
    %v1163 = vunpack.c.l.b16 %v1083
    %v1164 = vunpack.c.h.b16 %v1083
    %v1165 = vunpack.c.l.b16 %v1084
    %v1166 = vunpack.c.h.b16 %v1084
    %v1167 = vunpack.c.l.b16 %v1085
    %v1168 = vunpack.c.h.b16 %v1085
    %v1169 = vunpack.c.l.b16 %v1086
    %v1170 = vunpack.c.h.b16 %v1086
    %v1171 = vunpack.c.l.b16 %v1087
    %v1172 = vunpack.c.h.b16 %v1087
    %v1173 = vunpack.c.l.b16 %v1088
    %v1174 = vunpack.c.h.b16 %v1088
    %v1175 = vunpack.c.l.b16 %v1089
    %v1176 = vunpack.c.h.b16 %v1089
    %v1177 = vunpack.c.l.b16 %v1090
    %v1178 = vunpack.c.h.b16 %v1090
    %v1179 = vunpack.c.l.b16 %v1091
    %v1180 = vunpack.c.h.b16 %v1091
    %v1181 = vunpack.c.l.b16 %v1092
    %v1182 = vunpack.c.h.b16 %v1092
    %v1183 = vunpack.c.l.b16 %v1093
    %v1184 = vunpack.c.h.b16 %v1093
    %v1185 = vunpack.c.l.b16 %v1094
    %v1186 = vunpack.c.h.b16 %v1094
    %v1187 = vunpack.c.l.b16 %v1095
    %v1188 = vunpack.c.h.b16 %v1095
    %v1189 = vunpack.c.l.b16 %v1096
    %v1190 = vunpack.c.h.b16 %v1096
    %v1191 = vunpack.c.l.b16 %v1097
    %v1192 = vunpack.c.h.b16 %v1097
    %v1193 = vunpack.c.l.b16 %v1098
    %v1194 = vunpack.c.h.b16 %v1098
    %v1195 = vunpack.c.l.b16 %v1099
    %v1196 = vunpack.c.h.b16 %v1099
    %v1197 = vunpack.c.l.b16 %v1100
    %v1198 = vunpack.c.h.b16 %v1100
    %v1199 = vunpack.c.l.b16 %v1101
    %v1200 = vunpack.c.h.b16 %v1101
    %v1201 = vunpack.c.l.b16 %v1102
    %v1202 = vunpack.c.h.b16 %v1102
    %v1203 = vunpack.c.l.b16 %v1103
    %v1204 = vunpack.c.h.b16 %v1103
    %v1205 = vunpack.c.l.b16 %v1104
    %v1206 = vunpack.c.h.b16 %v1104
    %v1207 = vpack.c.b16 %v1147, %v1143
    %v1208 = vpack.c.b16 %v1148, %v1144
    %v1209 = vpack.c.b16 %v1149, %v1145
    %v1210 = vpack.c.b16 %v1150, %v1146
    %v1211 = vpack.c.b16 %v1155, %v1151
    %v1212 = vpack.c.b16 %v1156, %v1152
    %v1213 = vpack.c.b16 %v1157, %v1153
    %v1214 = vpack.c.b16 %v1158, %v1154
    %v1215 = vpack.c.b16 %v1163, %v1159
    %v1216 = vpack.c.b16 %v1164, %v1160
    %v1217 = vpack.c.b16 %v1165, %v1161
    %v1218 = vpack.c.b16 %v1166, %v1162
    %v1219 = vpack.c.b16 %v1171, %v1167
    %v1220 = vpack.c.b16 %v1172, %v1168
    %v1221 = vpack.c.b16 %v1173, %v1169
    %v1222 = vpack.c.b16 %v1174, %v1170
    %v1223 = vpack.c.b16 %v1179, %v1175
    %v1224 = vpack.c.b16 %v1180, %v1176
    %v1225 = vpack.c.b16 %v1181, %v1177
    %v1226 = vpack.c.b16 %v1182, %v1178
    %v1227 = vpack.c.b16 %v1187, %v1183
    %v1228 = vpack.c.b16 %v1188, %v1184
    %v1229 = vpack.c.b16 %v1189, %v1185
    %v1230 = vpack.c.b16 %v1190, %v1186
    %v1231 = vpack.c.b16 %v1195, %v1191
    %v1232 = vpack.c.b16 %v1196, %v1192
    %v1233 = vpack.c.b16 %v1197, %v1193
    %v1234 = vpack.c.b16 %v1198, %v1194
    %v1235 = vpack.c.b16 %v1203, %v1199
    %v1236 = vpack.c.b16 %v1204, %v1200
    %v1237 = vpack.c.b16 %v1205, %v1201
    %v1238 = vpack.c.b16 %v1206, %v1202
    %1271 = vmatprep.subr.bf16.mxu0 %v1236
    %1272 = vmatpush1.bf16.msra.mxu0 %v1235
    %1273 = vmatprep.subr.bf16.mxu0 %v1232
    %1274 = vmatpush1.bf16.msra.mxu0 %v1231
    %1275 = vmatprep.subr.bf16.mxu0 %v1228
    %1276 = vmatpush1.bf16.msra.mxu0 %v1227
    %1277 = vmatprep.subr.bf16.mxu0 %v1224
    %1278 = vmatpush1.bf16.msra.mxu0 %v1223
    %1279 = vmatprep.subr.bf16.mxu0 %v1220
    %1280 = vmatpush1.bf16.msra.mxu0 %v1219
    %1281 = vmatprep.subr.bf16.mxu0 %v1216
    %1282 = vmatpush1.bf16.msra.mxu0 %v1215
    %1283 = vmatprep.subr.bf16.mxu0 %v1212
    %1284 = vmatpush1.bf16.msra.mxu0 %v1211
    %1285 = vmatprep.subr.bf16.mxu0 %v1208
    %1286 = vmatpush1.bf16.msra.mxu0 %v1207
    %1287 = vmatprep.subr.bf16.mxu0 0
    %1288 = vmatpush2.bf16.msra.mxu0 0
    %1289 = vmatprep.subr.bf16.mxu0 0
    %1290 = vmatpush2.bf16.msra.mxu0 0
    %1291 = vmatprep.subr.bf16.mxu0 0
    %1292 = vmatpush2.bf16.msra.mxu0 0
    %1293 = vmatprep.subr.bf16.mxu0 0
    %1294 = vmatpush2.bf16.msra.mxu0 0
    %1295 = vmatprep.subr.bf16.mxu0 0
    %1296 = vmatpush2.bf16.msra.mxu0 0
    %1297 = vmatprep.subr.bf16.mxu0 0
    %1298 = vmatpush2.bf16.msra.mxu0 0
    %1299 = vmatprep.subr.bf16.mxu0 0
    %1300 = vmatpush2.bf16.msra.mxu0 0
    %1301 = vmatprep.subr.bf16.mxu0 0
    %1302 = vmatpush2.bf16.msra.mxu0 0
    %1303 = vmatprep.mubr.bf16.mxu0 0
    %1304 = vmatmul.mubr.bf16.gmra.mxu0 %v1109
    %v1305 = vpop.f32.mrf.mxu0
    %v1306 = vadd.f32 0.0, %v1305
    %v1307 = vpop.f32.mrf.mxu0
    %v1308 = vadd.f32 0.0, %v1307
    %v1309 = vpop.f32.mrf.mxu0
    %v1310 = vadd.f32 0.0, %v1309
    %v1311 = vpop.f32.mrf.mxu0
    %v1312 = vadd.f32 0.0, %v1311
    %1313 = vdwg.mxu0
    %1314 = vmatprep.subr.bf16.mxu0 %v1238
    %1315 = vmatpush1.bf16.msra.mxu0 %v1237
    %1316 = vmatprep.subr.bf16.mxu0 %v1234
    %1317 = vmatpush1.bf16.msra.mxu0 %v1233
    %1318 = vmatprep.subr.bf16.mxu0 %v1230
    %1319 = vmatpush1.bf16.msra.mxu0 %v1229
    %1320 = vmatprep.subr.bf16.mxu0 %v1226
    %1321 = vmatpush1.bf16.msra.mxu0 %v1225
    %1322 = vmatprep.subr.bf16.mxu0 %v1222
    %1323 = vmatpush1.bf16.msra.mxu0 %v1221
    %1324 = vmatprep.subr.bf16.mxu0 %v1218
    %1325 = vmatpush1.bf16.msra.mxu0 %v1217
    %1326 = vmatprep.subr.bf16.mxu0 %v1214
    %1327 = vmatpush1.bf16.msra.mxu0 %v1213
    %1328 = vmatprep.subr.bf16.mxu0 %v1210
    %1329 = vmatpush1.bf16.msra.mxu0 %v1209
    %1330 = vmatprep.subr.bf16.mxu0 0
    %1331 = vmatpush2.bf16.msra.mxu0 0
    %1332 = vmatprep.subr.bf16.mxu0 0
    %1333 = vmatpush2.bf16.msra.mxu0 0
    %1334 = vmatprep.subr.bf16.mxu0 0
    %1335 = vmatpush2.bf16.msra.mxu0 0
    %1336 = vmatprep.subr.bf16.mxu0 0
    %1337 = vmatpush2.bf16.msra.mxu0 0
    %1338 = vmatprep.subr.bf16.mxu0 0
    %1339 = vmatpush2.bf16.msra.mxu0 0
    %1340 = vmatprep.subr.bf16.mxu0 0
    %1341 = vmatpush2.bf16.msra.mxu0 0
    %1342 = vmatprep.subr.bf16.mxu0 0
    %1343 = vmatpush2.bf16.msra.mxu0 0
    %1344 = vmatprep.subr.bf16.mxu0 0
    %1345 = vmatpush2.bf16.msra.mxu0 0
    %1346 = vmatprep.mubr.bf16.mxu0 0
    %1347 = vmatmul.mubr.bf16.gmra.mxu0 %v1109
    %v1348 = vpop.f32.mrf.mxu0
    %v1349 = vadd.f32 0.0, %v1348
    %v1350 = vpop.f32.mrf.mxu0
    %v1351 = vadd.f32 0.0, %v1350
    %v1352 = vpop.f32.mrf.mxu0
    %v1353 = vadd.f32 0.0, %v1352
    %v1354 = vpop.f32.mrf.mxu0
    %v1355 = vadd.f32 0.0, %v1354
    %1356 = vdwg.mxu0
    %v1389 = vunpack.c.l.b16 %v1041
    %v1390 = vunpack.c.h.b16 %v1041
    %v1391 = vunpack.c.l.b16 %v1042
    %v1392 = vunpack.c.h.b16 %v1042
    %v1393 = vunpack.c.l.b16 %v1043
    %v1394 = vunpack.c.h.b16 %v1043
    %v1395 = vunpack.c.l.b16 %v1044
    %v1396 = vunpack.c.h.b16 %v1044
    %v1397 = vunpack.c.l.b16 %v1045
    %v1398 = vunpack.c.h.b16 %v1045
    %v1399 = vunpack.c.l.b16 %v1046
    %v1400 = vunpack.c.h.b16 %v1046
    %v1401 = vunpack.c.l.b16 %v1047
    %v1402 = vunpack.c.h.b16 %v1047
    %v1403 = vunpack.c.l.b16 %v1048
    %v1404 = vunpack.c.h.b16 %v1048
    %v1405 = vunpack.c.l.b16 %v1049
    %v1406 = vunpack.c.h.b16 %v1049
    %v1407 = vunpack.c.l.b16 %v1050
    %v1408 = vunpack.c.h.b16 %v1050
    %v1409 = vunpack.c.l.b16 %v1051
    %v1410 = vunpack.c.h.b16 %v1051
    %v1411 = vunpack.c.l.b16 %v1052
    %v1412 = vunpack.c.h.b16 %v1052
    %v1413 = vunpack.c.l.b16 %v1053
    %v1414 = vunpack.c.h.b16 %v1053
    %v1415 = vunpack.c.l.b16 %v1054
    %v1416 = vunpack.c.h.b16 %v1054
    %v1417 = vunpack.c.l.b16 %v1055
    %v1418 = vunpack.c.h.b16 %v1055
    %v1419 = vunpack.c.l.b16 %v1056
    %v1420 = vunpack.c.h.b16 %v1056
    %v1421 = vunpack.c.l.b16 %v1057
    %v1422 = vunpack.c.h.b16 %v1057
    %v1423 = vunpack.c.l.b16 %v1058
    %v1424 = vunpack.c.h.b16 %v1058
    %v1425 = vunpack.c.l.b16 %v1059
    %v1426 = vunpack.c.h.b16 %v1059
    %v1427 = vunpack.c.l.b16 %v1060
    %v1428 = vunpack.c.h.b16 %v1060
    %v1429 = vunpack.c.l.b16 %v1061
    %v1430 = vunpack.c.h.b16 %v1061
    %v1431 = vunpack.c.l.b16 %v1062
    %v1432 = vunpack.c.h.b16 %v1062
    %v1433 = vunpack.c.l.b16 %v1063
    %v1434 = vunpack.c.h.b16 %v1063
    %v1435 = vunpack.c.l.b16 %v1064
    %v1436 = vunpack.c.h.b16 %v1064
    %v1437 = vunpack.c.l.b16 %v1065
    %v1438 = vunpack.c.h.b16 %v1065
    %v1439 = vunpack.c.l.b16 %v1066
    %v1440 = vunpack.c.h.b16 %v1066
    %v1441 = vunpack.c.l.b16 %v1067
    %v1442 = vunpack.c.h.b16 %v1067
    %v1443 = vunpack.c.l.b16 %v1068
    %v1444 = vunpack.c.h.b16 %v1068
    %v1445 = vunpack.c.l.b16 %v1069
    %v1446 = vunpack.c.h.b16 %v1069
    %v1447 = vunpack.c.l.b16 %v1070
    %v1448 = vunpack.c.h.b16 %v1070
    %v1449 = vunpack.c.l.b16 %v1071
    %v1450 = vunpack.c.h.b16 %v1071
    %v1451 = vunpack.c.l.b16 %v1072
    %v1452 = vunpack.c.h.b16 %v1072
    %v1453 = vpack.c.b16 %v1393, %v1389
    %v1454 = vpack.c.b16 %v1394, %v1390
    %v1455 = vpack.c.b16 %v1395, %v1391
    %v1456 = vpack.c.b16 %v1396, %v1392
    %v1457 = vpack.c.b16 %v1401, %v1397
    %v1458 = vpack.c.b16 %v1402, %v1398
    %v1459 = vpack.c.b16 %v1403, %v1399
    %v1460 = vpack.c.b16 %v1404, %v1400
    %v1461 = vpack.c.b16 %v1409, %v1405
    %v1462 = vpack.c.b16 %v1410, %v1406
    %v1463 = vpack.c.b16 %v1411, %v1407
    %v1464 = vpack.c.b16 %v1412, %v1408
    %v1465 = vpack.c.b16 %v1417, %v1413
    %v1466 = vpack.c.b16 %v1418, %v1414
    %v1467 = vpack.c.b16 %v1419, %v1415
    %v1468 = vpack.c.b16 %v1420, %v1416
    %v1469 = vpack.c.b16 %v1425, %v1421
    %v1470 = vpack.c.b16 %v1426, %v1422
    %v1471 = vpack.c.b16 %v1427, %v1423
    %v1472 = vpack.c.b16 %v1428, %v1424
    %v1473 = vpack.c.b16 %v1433, %v1429
    %v1474 = vpack.c.b16 %v1434, %v1430
    %v1475 = vpack.c.b16 %v1435, %v1431
    %v1476 = vpack.c.b16 %v1436, %v1432
    %v1477 = vpack.c.b16 %v1441, %v1437
    %v1478 = vpack.c.b16 %v1442, %v1438
    %v1479 = vpack.c.b16 %v1443, %v1439
    %v1480 = vpack.c.b16 %v1444, %v1440
    %v1481 = vpack.c.b16 %v1449, %v1445
    %v1482 = vpack.c.b16 %v1450, %v1446
    %v1483 = vpack.c.b16 %v1451, %v1447
    %v1484 = vpack.c.b16 %v1452, %v1448
    %1517 = vmatprep.subr.bf16.mxu0 %v1482
    %1518 = vmatpush1.bf16.msra.mxu0 %v1481
    %1519 = vmatprep.subr.bf16.mxu0 %v1478
    %1520 = vmatpush1.bf16.msra.mxu0 %v1477
    %1521 = vmatprep.subr.bf16.mxu0 %v1474
    %1522 = vmatpush1.bf16.msra.mxu0 %v1473
    %1523 = vmatprep.subr.bf16.mxu0 %v1470
    %1524 = vmatpush1.bf16.msra.mxu0 %v1469
    %1525 = vmatprep.subr.bf16.mxu0 %v1466
    %1526 = vmatpush1.bf16.msra.mxu0 %v1465
    %1527 = vmatprep.subr.bf16.mxu0 %v1462
    %1528 = vmatpush1.bf16.msra.mxu0 %v1461
    %1529 = vmatprep.subr.bf16.mxu0 %v1458
    %1530 = vmatpush1.bf16.msra.mxu0 %v1457
    %1531 = vmatprep.subr.bf16.mxu0 %v1454
    %1532 = vmatpush1.bf16.msra.mxu0 %v1453
    %1533 = vmatprep.subr.bf16.mxu0 0
    %1534 = vmatpush2.bf16.msra.mxu0 0
    %1535 = vmatprep.subr.bf16.mxu0 0
    %1536 = vmatpush2.bf16.msra.mxu0 0
    %1537 = vmatprep.subr.bf16.mxu0 0
    %1538 = vmatpush2.bf16.msra.mxu0 0
    %1539 = vmatprep.subr.bf16.mxu0 0
    %1540 = vmatpush2.bf16.msra.mxu0 0
    %1541 = vmatprep.subr.bf16.mxu0 0
    %1542 = vmatpush2.bf16.msra.mxu0 0
    %1543 = vmatprep.subr.bf16.mxu0 0
    %1544 = vmatpush2.bf16.msra.mxu0 0
    %1545 = vmatprep.subr.bf16.mxu0 0
    %1546 = vmatpush2.bf16.msra.mxu0 0
    %1547 = vmatprep.subr.bf16.mxu0 0
    %1548 = vmatpush2.bf16.msra.mxu0 0
    %1549 = vmatprep.mubr.bf16.mxu0 0
    %1550 = vmatmul.mubr.bf16.gmra.mxu0 %v1040
    %v1551 = vpop.f32.mrf.mxu0
    %v1552 = vadd.f32 %v1306, %v1551
    %v1553 = vpop.f32.mrf.mxu0
    %v1554 = vadd.f32 %v1308, %v1553
    %v1555 = vpop.f32.mrf.mxu0
    %v1556 = vadd.f32 %v1310, %v1555
    %v1557 = vpop.f32.mrf.mxu0
    %v1558 = vadd.f32 %v1312, %v1557
    %1559 = vdwg.mxu0
    %1560 = vmatprep.subr.bf16.mxu0 %v1484
    %1561 = vmatpush1.bf16.msra.mxu0 %v1483
    %1562 = vmatprep.subr.bf16.mxu0 %v1480
    %1563 = vmatpush1.bf16.msra.mxu0 %v1479
    %1564 = vmatprep.subr.bf16.mxu0 %v1476
    %1565 = vmatpush1.bf16.msra.mxu0 %v1475
    %1566 = vmatprep.subr.bf16.mxu0 %v1472
    %1567 = vmatpush1.bf16.msra.mxu0 %v1471
    %1568 = vmatprep.subr.bf16.mxu0 %v1468
    %1569 = vmatpush1.bf16.msra.mxu0 %v1467
    %1570 = vmatprep.subr.bf16.mxu0 %v1464
    %1571 = vmatpush1.bf16.msra.mxu0 %v1463
    %1572 = vmatprep.subr.bf16.mxu0 %v1460
    %1573 = vmatpush1.bf16.msra.mxu0 %v1459
    %1574 = vmatprep.subr.bf16.mxu0 %v1456
    %1575 = vmatpush1.bf16.msra.mxu0 %v1455
    %1576 = vmatprep.subr.bf16.mxu0 0
    %1577 = vmatpush2.bf16.msra.mxu0 0
    %1578 = vmatprep.subr.bf16.mxu0 0
    %1579 = vmatpush2.bf16.msra.mxu0 0
    %1580 = vmatprep.subr.bf16.mxu0 0
    %1581 = vmatpush2.bf16.msra.mxu0 0
    %1582 = vmatprep.subr.bf16.mxu0 0
    %1583 = vmatpush2.bf16.msra.mxu0 0
    %1584 = vmatprep.subr.bf16.mxu0 0
    %1585 = vmatpush2.bf16.msra.mxu0 0
    %1586 = vmatprep.subr.bf16.mxu0 0
    %1587 = vmatpush2.bf16.msra.mxu0 0
    %1588 = vmatprep.subr.bf16.mxu0 0
    %1589 = vmatpush2.bf16.msra.mxu0 0
    %1590 = vmatprep.subr.bf16.mxu0 0
    %1591 = vmatpush2.bf16.msra.mxu0 0
    %1592 = vmatprep.mubr.bf16.mxu0 0
    %1593 = vmatmul.mubr.bf16.gmra.mxu0 %v1040
    %v1594 = vpop.f32.mrf.mxu0
    %v1595 = vadd.f32 %v1349, %v1594
    %v1596 = vpop.f32.mrf.mxu0
    %v1597 = vadd.f32 %v1351, %v1596
    %v1598 = vpop.f32.mrf.mxu0
    %v1599 = vadd.f32 %v1353, %v1598
    %v1600 = vpop.f32.mrf.mxu0
    %v1601 = vadd.f32 %v1355, %v1600
    %1602 = vdwg.mxu0
    %v1603 = vld [vmem:[%s6] sm:$0xf]
    %v1605 = vlaneseq
    %v1606 = vshrl.u32 %v1605, 7
    %v1607 = vsub.s32 0, %v1606
    %v1608 = vrot.slane %v1603, %v1607
    %v1609 = vlaneseq
    %v1610 = vshrl.u32 %v1609, 7
    %v1611 = vsub.s32 1, %v1610
    %v1612 = vrot.slane %v1603, %v1611
    %v1613 = vlaneseq
    %v1614 = vshrl.u32 %v1613, 7
    %v1615 = vsub.s32 2, %v1614
    %v1616 = vrot.slane %v1603, %v1615
    %v1617 = vlaneseq
    %v1618 = vshrl.u32 %v1617, 7
    %v1619 = vsub.s32 3, %v1618
    %v1620 = vrot.slane %v1603, %v1619
    %v1625 = vadd.f32 %v1552, %v1608
    %v1626 = vadd.f32 %v1554, %v1612
    %v1627 = vadd.f32 %v1595, %v1616
    %v1628 = vadd.f32 %v1597, %v1620
    %v1629 = vadd.f32 %v1556, %v1608
    %v1630 = vadd.f32 %v1558, %v1612
    %v1631 = vadd.f32 %v1599, %v1616
    %v1632 = vadd.f32 %v1601, %v1620
    %v1633 = vxor.u32 %v1625, 2147483648
    %v1634 = vxor.u32 %v1629, 2147483648
    %v1635 = vmul.f32 %v1633, 1.442695
    %v1636 = vpow.pop %v1635
    %v1637 = vmul.f32 %v1634, 1.442695
    %v1638 = vpow.pop %v1637
    %v1639 = vadd.f32 %v1636, 1.0
    %v1640 = vadd.f32 %v1638, 1.0
    %v1641 = vrcp.pop %v1639
    %v1642 = vmul.f32 1.0, %v1641
    %v1643 = vrcp.pop %v1640
    %v1644 = vmul.f32 1.0, %v1643
    %v1645 = vxor.u32 %v1626, 2147483648
    %v1646 = vxor.u32 %v1630, 2147483648
    %v1647 = vmul.f32 %v1645, 1.442695
    %v1648 = vpow.pop %v1647
    %v1649 = vmul.f32 %v1646, 1.442695
    %v1650 = vpow.pop %v1649
    %v1651 = vadd.f32 %v1648, 1.0
    %v1652 = vadd.f32 %v1650, 1.0
    %v1653 = vrcp.pop %v1651
    %v1654 = vmul.f32 1.0, %v1653
    %v1655 = vrcp.pop %v1652
    %v1656 = vmul.f32 1.0, %v1655
    %v1657 = vtanh.pop %v1627
    %v1658 = vtanh.pop %v1631
    %v1659 = vxor.u32 %v1628, 2147483648
    %v1660 = vxor.u32 %v1632, 2147483648
    %v1661 = vmul.f32 %v1659, 1.442695
    %v1662 = vpow.pop %v1661
    %v1663 = vmul.f32 %v1660, 1.442695
    %v1664 = vpow.pop %v1663
    %v1665 = vadd.f32 %v1662, 1.0
    %v1666 = vadd.f32 %v1664, 1.0
    %v1667 = vrcp.pop %v1665
    %v1668 = vmul.f32 1.0, %v1667
    %v1669 = vrcp.pop %v1666
    %v1670 = vmul.f32 1.0, %v1669
    %v1671 = vmul.f32 %v1654, %v683
    %v1672 = vmul.f32 %v1656, %v684
    %v1673 = vmul.f32 %v1642, %v1657
    %v1674 = vmul.f32 %v1644, %v1658
    %v1675 = vadd.f32 %v1671, %v1673
    %v1676 = vadd.f32 %v1672, %v1674
    %v1677 = vtanh.pop %v1675
    %v1678 = vtanh.pop %v1676
    %v1679 = vmul.f32 %v1668, %v1677
    %v1680 = vmul.f32 %v1670, %v1678
    %v1681 = vpack.c.bf16 %v1680, %v1679
    %s1682 = smul.u32 2, 4
    %s1683 = smul.addr %s1682, 4
    %s1684 = scalar_lea.vmem [#allocation2], %s1683
    %v1685 = vld [vmem:[%s1684] sm:$0xff]
    %v1686 = vld [vmem:[%s1684 + $0x8] sm:$0xff]
    %v1687 = vld [vmem:[%s1684 + $0x10] sm:$0xff]
    %v1688 = vld [vmem:[%s1684 + $0x18] sm:$0xff]
    %v1689 = vunpack.c.l.bf16 %v1685
    %v1690 = vunpack.c.h.bf16 %v1685
    %v1691 = vunpack.c.l.bf16 %v1686
    %v1692 = vunpack.c.h.bf16 %v1686
    %v1693 = vunpack.c.l.bf16 %v1687
    %v1694 = vunpack.c.h.bf16 %v1687
    %v1695 = vunpack.c.l.bf16 %v1688
    %v1696 = vunpack.c.h.bf16 %v1688
    %1697 = vmatprep.subr.bf16.mxu0 %v863
    %1698 = vmatpush1.bf16.msra.mxu0 %v862
    %1699 = vmatprep.subr.bf16.mxu0 %v859
    %1700 = vmatpush1.bf16.msra.mxu0 %v858
    %1701 = vmatprep.subr.bf16.mxu0 %v855
    %1702 = vmatpush1.bf16.msra.mxu0 %v854
    %1703 = vmatprep.subr.bf16.mxu0 %v851
    %1704 = vmatpush1.bf16.msra.mxu0 %v850
    %1705 = vmatprep.subr.bf16.mxu0 %v847
    %1706 = vmatpush1.bf16.msra.mxu0 %v846
    %1707 = vmatprep.subr.bf16.mxu0 %v843
    %1708 = vmatpush1.bf16.msra.mxu0 %v842
    %1709 = vmatprep.subr.bf16.mxu0 %v839
    %1710 = vmatpush1.bf16.msra.mxu0 %v838
    %1711 = vmatprep.subr.bf16.mxu0 %v835
    %1712 = vmatpush1.bf16.msra.mxu0 %v834
    %1713 = vmatprep.subr.bf16.mxu0 0
    %1714 = vmatpush2.bf16.msra.mxu0 0
    %1715 = vmatprep.subr.bf16.mxu0 0
    %1716 = vmatpush2.bf16.msra.mxu0 0
    %1717 = vmatprep.subr.bf16.mxu0 0
    %1718 = vmatpush2.bf16.msra.mxu0 0
    %1719 = vmatprep.subr.bf16.mxu0 0
    %1720 = vmatpush2.bf16.msra.mxu0 0
    %1721 = vmatprep.subr.bf16.mxu0 0
    %1722 = vmatpush2.bf16.msra.mxu0 0
    %1723 = vmatprep.subr.bf16.mxu0 0
    %1724 = vmatpush2.bf16.msra.mxu0 0
    %1725 = vmatprep.subr.bf16.mxu0 0
    %1726 = vmatpush2.bf16.msra.mxu0 0
    %1727 = vmatprep.subr.bf16.mxu0 0
    %1728 = vmatpush2.bf16.msra.mxu0 0
    %1729 = vmatprep.mubr.bf16.mxu0 0
    %1730 = vmatmul.mubr.bf16.gmra.mxu0 %v1040
    %v1731 = vpop.f32.mrf.mxu0
    %v1732 = vadd.f32 0.0, %v1731
    %v1733 = vpop.f32.mrf.mxu0
    %v1734 = vadd.f32 0.0, %v1733
    %v1735 = vpop.f32.mrf.mxu0
    %v1736 = vadd.f32 0.0, %v1735
    %v1737 = vpop.f32.mrf.mxu0
    %v1738 = vadd.f32 0.0, %v1737
    %1739 = vdwg.mxu0
    %1740 = vmatprep.subr.bf16.mxu0 %v865
    %1741 = vmatpush1.bf16.msra.mxu0 %v864
    %1742 = vmatprep.subr.bf16.mxu0 %v861
    %1743 = vmatpush1.bf16.msra.mxu0 %v860
    %1744 = vmatprep.subr.bf16.mxu0 %v857
    %1745 = vmatpush1.bf16.msra.mxu0 %v856
    %1746 = vmatprep.subr.bf16.mxu0 %v853
    %1747 = vmatpush1.bf16.msra.mxu0 %v852
    %1748 = vmatprep.subr.bf16.mxu0 %v849
    %1749 = vmatpush1.bf16.msra.mxu0 %v848
    %1750 = vmatprep.subr.bf16.mxu0 %v845
    %1751 = vmatpush1.bf16.msra.mxu0 %v844
    %1752 = vmatprep.subr.bf16.mxu0 %v841
    %1753 = vmatpush1.bf16.msra.mxu0 %v840
    %1754 = vmatprep.subr.bf16.mxu0 %v837
    %1755 = vmatpush1.bf16.msra.mxu0 %v836
    %1756 = vmatprep.subr.bf16.mxu0 0
    %1757 = vmatpush2.bf16.msra.mxu0 0
    %1758 = vmatprep.subr.bf16.mxu0 0
    %1759 = vmatpush2.bf16.msra.mxu0 0
    %1760 = vmatprep.subr.bf16.mxu0 0
    %1761 = vmatpush2.bf16.msra.mxu0 0
    %1762 = vmatprep.subr.bf16.mxu0 0
    %1763 = vmatpush2.bf16.msra.mxu0 0
    %1764 = vmatprep.subr.bf16.mxu0 0
    %1765 = vmatpush2.bf16.msra.mxu0 0
    %1766 = vmatprep.subr.bf16.mxu0 0
    %1767 = vmatpush2.bf16.msra.mxu0 0
    %1768 = vmatprep.subr.bf16.mxu0 0
    %1769 = vmatpush2.bf16.msra.mxu0 0
    %1770 = vmatprep.subr.bf16.mxu0 0
    %1771 = vmatpush2.bf16.msra.mxu0 0
    %1772 = vmatprep.mubr.bf16.mxu0 0
    %1773 = vmatmul.mubr.bf16.gmra.mxu0 %v1040
    %v1774 = vpop.f32.mrf.mxu0
    %v1775 = vadd.f32 0.0, %v1774
    %v1776 = vpop.f32.mrf.mxu0
    %v1777 = vadd.f32 0.0, %v1776
    %v1778 = vpop.f32.mrf.mxu0
    %v1779 = vadd.f32 0.0, %v1778
    %v1780 = vpop.f32.mrf.mxu0
    %v1781 = vadd.f32 0.0, %v1780
    %1782 = vdwg.mxu0
    %v1783 = vadd.f32 %v1689, %v1732
    %v1784 = vadd.f32 %v1690, %v1734
    %v1785 = vadd.f32 %v1691, %v1775
    %v1786 = vadd.f32 %v1692, %v1777
    %v1787 = vadd.f32 %v1693, %v1736
    %v1788 = vadd.f32 %v1694, %v1738
    %v1789 = vadd.f32 %v1695, %v1779
    %v1790 = vadd.f32 %v1696, %v1781
    %v1791 = vxor.u32 %v1783, 2147483648
    %v1792 = vxor.u32 %v1787, 2147483648
    %v1793 = vmul.f32 %v1791, 1.442695
    %v1794 = vpow.pop %v1793
    %v1795 = vmul.f32 %v1792, 1.442695
    %v1796 = vpow.pop %v1795
    %v1797 = vadd.f32 %v1794, 1.0
    %v1798 = vadd.f32 %v1796, 1.0
    %v1799 = vrcp.pop %v1797
    %v1800 = vmul.f32 1.0, %v1799
    %v1801 = vrcp.pop %v1798
    %v1802 = vmul.f32 1.0, %v1801
    %v1803 = vxor.u32 %v1784, 2147483648
    %v1804 = vxor.u32 %v1788, 2147483648
    %v1805 = vmul.f32 %v1803, 1.442695
    %v1806 = vpow.pop %v1805
    %v1807 = vmul.f32 %v1804, 1.442695
    %v1808 = vpow.pop %v1807
    %v1809 = vadd.f32 %v1806, 1.0
    %v1810 = vadd.f32 %v1808, 1.0
    %v1811 = vrcp.pop %v1809
    %v1812 = vmul.f32 1.0, %v1811
    %v1813 = vrcp.pop %v1810
    %v1814 = vmul.f32 1.0, %v1813
    %v1815 = vtanh.pop %v1785
    %v1816 = vtanh.pop %v1789
    %v1817 = vxor.u32 %v1786, 2147483648
    %v1818 = vxor.u32 %v1790, 2147483648
    %v1819 = vmul.f32 %v1817, 1.442695
    %v1820 = vpow.pop %v1819
    %v1821 = vmul.f32 %v1818, 1.442695
    %v1822 = vpow.pop %v1821
    %v1823 = vadd.f32 %v1820, 1.0
    %v1824 = vadd.f32 %v1822, 1.0
    %v1825 = vrcp.pop %v1823
    %v1826 = vmul.f32 1.0, %v1825
    %v1827 = vrcp.pop %v1824
    %v1828 = vmul.f32 1.0, %v1827
    %v1829 = vmul.f32 %v1812, %v1034
    %v1830 = vmul.f32 %v1814, %v1035
    %v1831 = vmul.f32 %v1800, %v1815
    %v1832 = vmul.f32 %v1802, %v1816
    %v1833 = vadd.f32 %v1829, %v1831
    %v1834 = vadd.f32 %v1830, %v1832
    %v1835 = vtanh.pop %v1833
    %v1836 = vtanh.pop %v1834
    %v1837 = vmul.f32 %v1826, %v1835
    %v1838 = vmul.f32 %v1828, %v1836
    %v1839 = vpack.c.bf16 %v1838, %v1837
    %1840 = vmatprep.subr.bf16.mxu0 %v1236
    %1841 = vmatpush1.bf16.msra.mxu0 %v1235
    %1842 = vmatprep.subr.bf16.mxu0 %v1232
    %1843 = vmatpush1.bf16.msra.mxu0 %v1231
    %1844 = vmatprep.subr.bf16.mxu0 %v1228
    %1845 = vmatpush1.bf16.msra.mxu0 %v1227
    %1846 = vmatprep.subr.bf16.mxu0 %v1224
    %1847 = vmatpush1.bf16.msra.mxu0 %v1223
    %1848 = vmatprep.subr.bf16.mxu0 %v1220
    %1849 = vmatpush1.bf16.msra.mxu0 %v1219
    %1850 = vmatprep.subr.bf16.mxu0 %v1216
    %1851 = vmatpush1.bf16.msra.mxu0 %v1215
    %1852 = vmatprep.subr.bf16.mxu0 %v1212
    %1853 = vmatpush1.bf16.msra.mxu0 %v1211
    %1854 = vmatprep.subr.bf16.mxu0 %v1208
    %1855 = vmatpush1.bf16.msra.mxu0 %v1207
    %1856 = vmatprep.subr.bf16.mxu0 0
    %1857 = vmatpush2.bf16.msra.mxu0 0
    %1858 = vmatprep.subr.bf16.mxu0 0
    %1859 = vmatpush2.bf16.msra.mxu0 0
    %1860 = vmatprep.subr.bf16.mxu0 0
    %1861 = vmatpush2.bf16.msra.mxu0 0
    %1862 = vmatprep.subr.bf16.mxu0 0
    %1863 = vmatpush2.bf16.msra.mxu0 0
    %1864 = vmatprep.subr.bf16.mxu0 0
    %1865 = vmatpush2.bf16.msra.mxu0 0
    %1866 = vmatprep.subr.bf16.mxu0 0
    %1867 = vmatpush2.bf16.msra.mxu0 0
    %1868 = vmatprep.subr.bf16.mxu0 0
    %1869 = vmatpush2.bf16.msra.mxu0 0
    %1870 = vmatprep.subr.bf16.mxu0 0
    %1871 = vmatpush2.bf16.msra.mxu0 0
    %1872 = vmatprep.mubr.bf16.mxu0 0
    %1873 = vmatmul.mubr.bf16.gmra.mxu0 %v1681
    %v1874 = vpop.f32.mrf.mxu0
    %v1875 = vadd.f32 0.0, %v1874
    %v1876 = vpop.f32.mrf.mxu0
    %v1877 = vadd.f32 0.0, %v1876
    %v1878 = vpop.f32.mrf.mxu0
    %v1879 = vadd.f32 0.0, %v1878
    %v1880 = vpop.f32.mrf.mxu0
    %v1881 = vadd.f32 0.0, %v1880
    %1882 = vdwg.mxu0
    %1883 = vmatprep.subr.bf16.mxu0 %v1238
    %1884 = vmatpush1.bf16.msra.mxu0 %v1237
    %1885 = vmatprep.subr.bf16.mxu0 %v1234
    %1886 = vmatpush1.bf16.msra.mxu0 %v1233
    %1887 = vmatprep.subr.bf16.mxu0 %v1230
    %1888 = vmatpush1.bf16.msra.mxu0 %v1229
    %1889 = vmatprep.subr.bf16.mxu0 %v1226
    %1890 = vmatpush1.bf16.msra.mxu0 %v1225
    %1891 = vmatprep.subr.bf16.mxu0 %v1222
    %1892 = vmatpush1.bf16.msra.mxu0 %v1221
    %1893 = vmatprep.subr.bf16.mxu0 %v1218
    %1894 = vmatpush1.bf16.msra.mxu0 %v1217
    %1895 = vmatprep.subr.bf16.mxu0 %v1214
    %1896 = vmatpush1.bf16.msra.mxu0 %v1213
    %1897 = vmatprep.subr.bf16.mxu0 %v1210
    %1898 = vmatpush1.bf16.msra.mxu0 %v1209
    %1899 = vmatprep.subr.bf16.mxu0 0
    %1900 = vmatpush2.bf16.msra.mxu0 0
    %1901 = vmatprep.subr.bf16.mxu0 0
    %1902 = vmatpush2.bf16.msra.mxu0 0
    %1903 = vmatprep.subr.bf16.mxu0 0
    %1904 = vmatpush2.bf16.msra.mxu0 0
    %1905 = vmatprep.subr.bf16.mxu0 0
    %1906 = vmatpush2.bf16.msra.mxu0 0
    %1907 = vmatprep.subr.bf16.mxu0 0
    %1908 = vmatpush2.bf16.msra.mxu0 0
    %1909 = vmatprep.subr.bf16.mxu0 0
    %1910 = vmatpush2.bf16.msra.mxu0 0
    %1911 = vmatprep.subr.bf16.mxu0 0
    %1912 = vmatpush2.bf16.msra.mxu0 0
    %1913 = vmatprep.subr.bf16.mxu0 0
    %1914 = vmatpush2.bf16.msra.mxu0 0
    %1915 = vmatprep.mubr.bf16.mxu0 0
    %1916 = vmatmul.mubr.bf16.gmra.mxu0 %v1681
    %v1917 = vpop.f32.mrf.mxu0
    %v1918 = vadd.f32 0.0, %v1917
    %v1919 = vpop.f32.mrf.mxu0
    %v1920 = vadd.f32 0.0, %v1919
    %v1921 = vpop.f32.mrf.mxu0
    %v1922 = vadd.f32 0.0, %v1921
    %v1923 = vpop.f32.mrf.mxu0
    %v1924 = vadd.f32 0.0, %v1923
    %1925 = vdwg.mxu0
    %1926 = vmatprep.subr.bf16.mxu0 %v1482
    %1927 = vmatpush1.bf16.msra.mxu0 %v1481
    %1928 = vmatprep.subr.bf16.mxu0 %v1478
    %1929 = vmatpush1.bf16.msra.mxu0 %v1477
    %1930 = vmatprep.subr.bf16.mxu0 %v1474
    %1931 = vmatpush1.bf16.msra.mxu0 %v1473
    %1932 = vmatprep.subr.bf16.mxu0 %v1470
    %1933 = vmatpush1.bf16.msra.mxu0 %v1469
    %1934 = vmatprep.subr.bf16.mxu0 %v1466
    %1935 = vmatpush1.bf16.msra.mxu0 %v1465
    %1936 = vmatprep.subr.bf16.mxu0 %v1462
    %1937 = vmatpush1.bf16.msra.mxu0 %v1461
    %1938 = vmatprep.subr.bf16.mxu0 %v1458
    %1939 = vmatpush1.bf16.msra.mxu0 %v1457
    %1940 = vmatprep.subr.bf16.mxu0 %v1454
    %1941 = vmatpush1.bf16.msra.mxu0 %v1453
    %1942 = vmatprep.subr.bf16.mxu0 0
    %1943 = vmatpush2.bf16.msra.mxu0 0
    %1944 = vmatprep.subr.bf16.mxu0 0
    %1945 = vmatpush2.bf16.msra.mxu0 0
    %1946 = vmatprep.subr.bf16.mxu0 0
    %1947 = vmatpush2.bf16.msra.mxu0 0
    %1948 = vmatprep.subr.bf16.mxu0 0
    %1949 = vmatpush2.bf16.msra.mxu0 0
    %1950 = vmatprep.subr.bf16.mxu0 0
    %1951 = vmatpush2.bf16.msra.mxu0 0
    %1952 = vmatprep.subr.bf16.mxu0 0
    %1953 = vmatpush2.bf16.msra.mxu0 0
    %1954 = vmatprep.subr.bf16.mxu0 0
    %1955 = vmatpush2.bf16.msra.mxu0 0
    %1956 = vmatprep.subr.bf16.mxu0 0
    %1957 = vmatpush2.bf16.msra.mxu0 0
    %1958 = vmatprep.mubr.bf16.mxu0 0
    %1959 = vmatmul.mubr.bf16.gmra.mxu0 %v1839
    %v1960 = vpop.f32.mrf.mxu0
    %v1961 = vadd.f32 %v1875, %v1960
    %v1962 = vpop.f32.mrf.mxu0
    %v1963 = vadd.f32 %v1877, %v1962
    %v1964 = vpop.f32.mrf.mxu0
    %v1965 = vadd.f32 %v1879, %v1964
    %v1966 = vpop.f32.mrf.mxu0
    %v1967 = vadd.f32 %v1881, %v1966
    %1968 = vdwg.mxu0
    %1969 = vmatprep.subr.bf16.mxu0 %v1484
    %1970 = vmatpush1.bf16.msra.mxu0 %v1483
    %1971 = vmatprep.subr.bf16.mxu0 %v1480
    %1972 = vmatpush1.bf16.msra.mxu0 %v1479
    %1973 = vmatprep.subr.bf16.mxu0 %v1476
    %1974 = vmatpush1.bf16.msra.mxu0 %v1475
    %1975 = vmatprep.subr.bf16.mxu0 %v1472
    %1976 = vmatpush1.bf16.msra.mxu0 %v1471
    %1977 = vmatprep.subr.bf16.mxu0 %v1468
    %1978 = vmatpush1.bf16.msra.mxu0 %v1467
    %1979 = vmatprep.subr.bf16.mxu0 %v1464
    %1980 = vmatpush1.bf16.msra.mxu0 %v1463
    %1981 = vmatprep.subr.bf16.mxu0 %v1460
    %1982 = vmatpush1.bf16.msra.mxu0 %v1459
    %1983 = vmatprep.subr.bf16.mxu0 %v1456
    %1984 = vmatpush1.bf16.msra.mxu0 %v1455
    %1985 = vmatprep.subr.bf16.mxu0 0
    %1986 = vmatpush2.bf16.msra.mxu0 0
    %1987 = vmatprep.subr.bf16.mxu0 0
    %1988 = vmatpush2.bf16.msra.mxu0 0
    %1989 = vmatprep.subr.bf16.mxu0 0
    %1990 = vmatpush2.bf16.msra.mxu0 0
    %1991 = vmatprep.subr.bf16.mxu0 0
    %1992 = vmatpush2.bf16.msra.mxu0 0
    %1993 = vmatprep.subr.bf16.mxu0 0
    %1994 = vmatpush2.bf16.msra.mxu0 0
    %1995 = vmatprep.subr.bf16.mxu0 0
    %1996 = vmatpush2.bf16.msra.mxu0 0
    %1997 = vmatprep.subr.bf16.mxu0 0
    %1998 = vmatpush2.bf16.msra.mxu0 0
    %1999 = vmatprep.subr.bf16.mxu0 0
    %2000 = vmatpush2.bf16.msra.mxu0 0
    %2001 = vmatprep.mubr.bf16.mxu0 0
    %2002 = vmatmul.mubr.bf16.gmra.mxu0 %v1839
    %v2003 = vpop.f32.mrf.mxu0
    %v2004 = vadd.f32 %v1918, %v2003
    %v2005 = vpop.f32.mrf.mxu0
    %v2006 = vadd.f32 %v1920, %v2005
    %v2007 = vpop.f32.mrf.mxu0
    %v2008 = vadd.f32 %v1922, %v2007
    %v2009 = vpop.f32.mrf.mxu0
    %v2010 = vadd.f32 %v1924, %v2009
    %2011 = vdwg.mxu0
    %v2012 = vadd.f32 %v1961, %v1608
    %v2013 = vadd.f32 %v1963, %v1612
    %v2014 = vadd.f32 %v2004, %v1616
    %v2015 = vadd.f32 %v2006, %v1620
    %v2016 = vadd.f32 %v1965, %v1608
    %v2017 = vadd.f32 %v1967, %v1612
    %v2018 = vadd.f32 %v2008, %v1616
    %v2019 = vadd.f32 %v2010, %v1620
    %v2020 = vxor.u32 %v2012, 2147483648
    %v2021 = vxor.u32 %v2016, 2147483648
    %v2022 = vmul.f32 %v2020, 1.442695
    %v2023 = vpow.pop %v2022
    %v2024 = vmul.f32 %v2021, 1.442695
    %v2025 = vpow.pop %v2024
    %v2026 = vadd.f32 %v2023, 1.0
    %v2027 = vadd.f32 %v2025, 1.0
    %v2028 = vrcp.pop %v2026
    %v2029 = vmul.f32 1.0, %v2028
    %v2030 = vrcp.pop %v2027
    %v2031 = vmul.f32 1.0, %v2030
    %v2032 = vxor.u32 %v2013, 2147483648
    %v2033 = vxor.u32 %v2017, 2147483648
    %v2034 = vmul.f32 %v2032, 1.442695
    %v2035 = vpow.pop %v2034
    %v2036 = vmul.f32 %v2033, 1.442695
    %v2037 = vpow.pop %v2036
    %v2038 = vadd.f32 %v2035, 1.0
    %v2039 = vadd.f32 %v2037, 1.0
    %v2040 = vrcp.pop %v2038
    %v2041 = vmul.f32 1.0, %v2040
    %v2042 = vrcp.pop %v2039
    %v2043 = vmul.f32 1.0, %v2042
    %v2044 = vtanh.pop %v2014
    %v2045 = vtanh.pop %v2018
    %v2046 = vxor.u32 %v2015, 2147483648
    %v2047 = vxor.u32 %v2019, 2147483648
    %v2048 = vmul.f32 %v2046, 1.442695
    %v2049 = vpow.pop %v2048
    %v2050 = vmul.f32 %v2047, 1.442695
    %v2051 = vpow.pop %v2050
    %v2052 = vadd.f32 %v2049, 1.0
    %v2053 = vadd.f32 %v2051, 1.0
    %v2054 = vrcp.pop %v2052
    %v2055 = vmul.f32 1.0, %v2054
    %v2056 = vrcp.pop %v2053
    %v2057 = vmul.f32 1.0, %v2056
    %v2058 = vmul.f32 %v2041, %v1675
    %v2059 = vmul.f32 %v2043, %v1676
    %v2060 = vmul.f32 %v2029, %v2044
    %v2061 = vmul.f32 %v2031, %v2045
    %v2062 = vadd.f32 %v2058, %v2060
    %v2063 = vadd.f32 %v2059, %v2061
    %v2064 = vtanh.pop %v2062
    %v2065 = vtanh.pop %v2063
    %v2066 = vmul.f32 %v2055, %v2064
    %v2067 = vmul.f32 %v2057, %v2065
    %v2068 = vpack.c.bf16 %v2067, %v2066
    %s2069 = smul.u32 4, 4
    %s2070 = smul.addr %s2069, 4
    %s2071 = scalar_lea.vmem [#allocation2], %s2070
    %v2072 = vld [vmem:[%s2071] sm:$0xff]
    %v2073 = vld [vmem:[%s2071 + $0x8] sm:$0xff]
    %v2074 = vld [vmem:[%s2071 + $0x10] sm:$0xff]
    %v2075 = vld [vmem:[%s2071 + $0x18] sm:$0xff]
    %v2076 = vunpack.c.l.bf16 %v2072
    %v2077 = vunpack.c.h.bf16 %v2072
    %v2078 = vunpack.c.l.bf16 %v2073
    %v2079 = vunpack.c.h.bf16 %v2073
    %v2080 = vunpack.c.l.bf16 %v2074
    %v2081 = vunpack.c.h.bf16 %v2074
    %v2082 = vunpack.c.l.bf16 %v2075
    %v2083 = vunpack.c.h.bf16 %v2075
    %2084 = vmatprep.subr.bf16.mxu0 %v863
    %2085 = vmatpush1.bf16.msra.mxu0 %v862
    %2086 = vmatprep.subr.bf16.mxu0 %v859
    %2087 = vmatpush1.bf16.msra.mxu0 %v858
    %2088 = vmatprep.subr.bf16.mxu0 %v855
    %2089 = vmatpush1.bf16.msra.mxu0 %v854
    %2090 = vmatprep.subr.bf16.mxu0 %v851
    %2091 = vmatpush1.bf16.msra.mxu0 %v850
    %2092 = vmatprep.subr.bf16.mxu0 %v847
    %2093 = vmatpush1.bf16.msra.mxu0 %v846
    %2094 = vmatprep.subr.bf16.mxu0 %v843
    %2095 = vmatpush1.bf16.msra.mxu0 %v842
    %2096 = vmatprep.subr.bf16.mxu0 %v839
    %2097 = vmatpush1.bf16.msra.mxu0 %v838
    %2098 = vmatprep.subr.bf16.mxu0 %v835
    %2099 = vmatpush1.bf16.msra.mxu0 %v834
    %2100 = vmatprep.subr.bf16.mxu0 0
    %2101 = vmatpush2.bf16.msra.mxu0 0
    %2102 = vmatprep.subr.bf16.mxu0 0
    %2103 = vmatpush2.bf16.msra.mxu0 0
    %2104 = vmatprep.subr.bf16.mxu0 0
    %2105 = vmatpush2.bf16.msra.mxu0 0
    %2106 = vmatprep.subr.bf16.mxu0 0
    %2107 = vmatpush2.bf16.msra.mxu0 0
    %2108 = vmatprep.subr.bf16.mxu0 0
    %2109 = vmatpush2.bf16.msra.mxu0 0
    %2110 = vmatprep.subr.bf16.mxu0 0
    %2111 = vmatpush2.bf16.msra.mxu0 0
    %2112 = vmatprep.subr.bf16.mxu0 0
    %2113 = vmatpush2.bf16.msra.mxu0 0
    %2114 = vmatprep.subr.bf16.mxu0 0
    %2115 = vmatpush2.bf16.msra.mxu0 0
    %2116 = vmatprep.mubr.bf16.mxu0 0
    %2117 = vmatmul.mubr.bf16.gmra.mxu0 %v1839
    %v2118 = vpop.f32.mrf.mxu0
    %v2119 = vadd.f32 0.0, %v2118
    %v2120 = vpop.f32.mrf.mxu0
    %v2121 = vadd.f32 0.0, %v2120
    %v2122 = vpop.f32.mrf.mxu0
    %v2123 = vadd.f32 0.0, %v2122
    %v2124 = vpop.f32.mrf.mxu0
    %v2125 = vadd.f32 0.0, %v2124
    %2126 = vdwg.mxu0
    %2127 = vmatprep.subr.bf16.mxu0 %v865
    %2128 = vmatpush1.bf16.msra.mxu0 %v864
    %2129 = vmatprep.subr.bf16.mxu0 %v861
    %2130 = vmatpush1.bf16.msra.mxu0 %v860
    %2131 = vmatprep.subr.bf16.mxu0 %v857
    %2132 = vmatpush1.bf16.msra.mxu0 %v856
    %2133 = vmatprep.subr.bf16.mxu0 %v853
    %2134 = vmatpush1.bf16.msra.mxu0 %v852
    %2135 = vmatprep.subr.bf16.mxu0 %v849
    %2136 = vmatpush1.bf16.msra.mxu0 %v848
    %2137 = vmatprep.subr.bf16.mxu0 %v845
    %2138 = vmatpush1.bf16.msra.mxu0 %v844
    %2139 = vmatprep.subr.bf16.mxu0 %v841
    %2140 = vmatpush1.bf16.msra.mxu0 %v840
    %2141 = vmatprep.subr.bf16.mxu0 %v837
    %2142 = vmatpush1.bf16.msra.mxu0 %v836
    %2143 = vmatprep.subr.bf16.mxu0 0
    %2144 = vmatpush2.bf16.msra.mxu0 0
    %2145 = vmatprep.subr.bf16.mxu0 0
    %2146 = vmatpush2.bf16.msra.mxu0 0
    %2147 = vmatprep.subr.bf16.mxu0 0
    %2148 = vmatpush2.bf16.msra.mxu0 0
    %2149 = vmatprep.subr.bf16.mxu0 0
    %2150 = vmatpush2.bf16.msra.mxu0 0
    %2151 = vmatprep.subr.bf16.mxu0 0
    %2152 = vmatpush2.bf16.msra.mxu0 0
    %2153 = vmatprep.subr.bf16.mxu0 0
    %2154 = vmatpush2.bf16.msra.mxu0 0
    %2155 = vmatprep.subr.bf16.mxu0 0
    %2156 = vmatpush2.bf16.msra.mxu0 0
    %2157 = vmatprep.subr.bf16.mxu0 0
    %2158 = vmatpush2.bf16.msra.mxu0 0
    %2159 = vmatprep.mubr.bf16.mxu0 0
    %2160 = vmatmul.mubr.bf16.gmra.mxu0 %v1839
    %v2161 = vpop.f32.mrf.mxu0
    %v2162 = vadd.f32 0.0, %v2161
    %v2163 = vpop.f32.mrf.mxu0
    %v2164 = vadd.f32 0.0, %v2163
    %v2165 = vpop.f32.mrf.mxu0
    %v2166 = vadd.f32 0.0, %v2165
    %v2167 = vpop.f32.mrf.mxu0
    %v2168 = vadd.f32 0.0, %v2167
    %2169 = vdwg.mxu0
    %v2170 = vadd.f32 %v2076, %v2119
    %v2171 = vadd.f32 %v2077, %v2121
    %v2172 = vadd.f32 %v2078, %v2162
    %v2173 = vadd.f32 %v2079, %v2164
    %v2174 = vadd.f32 %v2080, %v2123
    %v2175 = vadd.f32 %v2081, %v2125
    %v2176 = vadd.f32 %v2082, %v2166
    %v2177 = vadd.f32 %v2083, %v2168
    %v2178 = vxor.u32 %v2170, 2147483648
    %v2179 = vxor.u32 %v2174, 2147483648
    %v2180 = vmul.f32 %v2178, 1.442695
    %v2181 = vpow.pop %v2180
    %v2182 = vmul.f32 %v2179, 1.442695
    %v2183 = vpow.pop %v2182
    %v2184 = vadd.f32 %v2181, 1.0
    %v2185 = vadd.f32 %v2183, 1.0
    %v2186 = vrcp.pop %v2184
    %v2187 = vmul.f32 1.0, %v2186
    %v2188 = vrcp.pop %v2185
    %v2189 = vmul.f32 1.0, %v2188
    %v2190 = vxor.u32 %v2171, 2147483648
    %v2191 = vxor.u32 %v2175, 2147483648
    %v2192 = vmul.f32 %v2190, 1.442695
    %v2193 = vpow.pop %v2192
    %v2194 = vmul.f32 %v2191, 1.442695
    %v2195 = vpow.pop %v2194
    %v2196 = vadd.f32 %v2193, 1.0
    %v2197 = vadd.f32 %v2195, 1.0
    %v2198 = vrcp.pop %v2196
    %v2199 = vmul.f32 1.0, %v2198
    %v2200 = vrcp.pop %v2197
    %v2201 = vmul.f32 1.0, %v2200
    %v2202 = vtanh.pop %v2172
    %v2203 = vtanh.pop %v2176
    %v2204 = vxor.u32 %v2173, 2147483648
    %v2205 = vxor.u32 %v2177, 2147483648
    %v2206 = vmul.f32 %v2204, 1.442695
    %v2207 = vpow.pop %v2206
    %v2208 = vmul.f32 %v2205, 1.442695
    %v2209 = vpow.pop %v2208
    %v2210 = vadd.f32 %v2207, 1.0
    %v2211 = vadd.f32 %v2209, 1.0
    %v2212 = vrcp.pop %v2210
    %v2213 = vmul.f32 1.0, %v2212
    %v2214 = vrcp.pop %v2211
    %v2215 = vmul.f32 1.0, %v2214
    %v2216 = vmul.f32 %v2199, %v1833
    %v2217 = vmul.f32 %v2201, %v1834
    %v2218 = vmul.f32 %v2187, %v2202
    %v2219 = vmul.f32 %v2189, %v2203
    %v2220 = vadd.f32 %v2216, %v2218
    %v2221 = vadd.f32 %v2217, %v2219
    %v2222 = vtanh.pop %v2220
    %v2223 = vtanh.pop %v2221
    %v2224 = vmul.f32 %v2213, %v2222
    %v2225 = vmul.f32 %v2215, %v2223
    %v2226 = vpack.c.bf16 %v2225, %v2224
    %2227 = vmatprep.subr.bf16.mxu0 %v1236
    %2228 = vmatpush1.bf16.msra.mxu0 %v1235
    %2229 = vmatprep.subr.bf16.mxu0 %v1232
    %2230 = vmatpush1.bf16.msra.mxu0 %v1231
    %2231 = vmatprep.subr.bf16.mxu0 %v1228
    %2232 = vmatpush1.bf16.msra.mxu0 %v1227
    %2233 = vmatprep.subr.bf16.mxu0 %v1224
    %2234 = vmatpush1.bf16.msra.mxu0 %v1223
    %2235 = vmatprep.subr.bf16.mxu0 %v1220
    %2236 = vmatpush1.bf16.msra.mxu0 %v1219
    %2237 = vmatprep.subr.bf16.mxu0 %v1216
    %2238 = vmatpush1.bf16.msra.mxu0 %v1215
    %2239 = vmatprep.subr.bf16.mxu0 %v1212
    %2240 = vmatpush1.bf16.msra.mxu0 %v1211
    %2241 = vmatprep.subr.bf16.mxu0 %v1208
    %2242 = vmatpush1.bf16.msra.mxu0 %v1207
    %2243 = vmatprep.subr.bf16.mxu0 0
    %2244 = vmatpush2.bf16.msra.mxu0 0
    %2245 = vmatprep.subr.bf16.mxu0 0
    %2246 = vmatpush2.bf16.msra.mxu0 0
    %2247 = vmatprep.subr.bf16.mxu0 0
    %2248 = vmatpush2.bf16.msra.mxu0 0
    %2249 = vmatprep.subr.bf16.mxu0 0
    %2250 = vmatpush2.bf16.msra.mxu0 0
    %2251 = vmatprep.subr.bf16.mxu0 0
    %2252 = vmatpush2.bf16.msra.mxu0 0
    %2253 = vmatprep.subr.bf16.mxu0 0
    %2254 = vmatpush2.bf16.msra.mxu0 0
    %2255 = vmatprep.subr.bf16.mxu0 0
    %2256 = vmatpush2.bf16.msra.mxu0 0
    %2257 = vmatprep.subr.bf16.mxu0 0
    %2258 = vmatpush2.bf16.msra.mxu0 0
    %2259 = vmatprep.mubr.bf16.mxu0 0
    %2260 = vmatmul.mubr.bf16.gmra.mxu0 %v2068
    %v2261 = vpop.f32.mrf.mxu0
    %v2262 = vadd.f32 0.0, %v2261
    %v2263 = vpop.f32.mrf.mxu0
    %v2264 = vadd.f32 0.0, %v2263
    %v2265 = vpop.f32.mrf.mxu0
    %v2266 = vadd.f32 0.0, %v2265
    %v2267 = vpop.f32.mrf.mxu0
    %v2268 = vadd.f32 0.0, %v2267
    %2269 = vdwg.mxu0
    %2270 = vmatprep.subr.bf16.mxu0 %v1238
    %2271 = vmatpush1.bf16.msra.mxu0 %v1237
    %2272 = vmatprep.subr.bf16.mxu0 %v1234
    %2273 = vmatpush1.bf16.msra.mxu0 %v1233
    %2274 = vmatprep.subr.bf16.mxu0 %v1230
    %2275 = vmatpush1.bf16.msra.mxu0 %v1229
    %2276 = vmatprep.subr.bf16.mxu0 %v1226
    %2277 = vmatpush1.bf16.msra.mxu0 %v1225
    %2278 = vmatprep.subr.bf16.mxu0 %v1222
    %2279 = vmatpush1.bf16.msra.mxu0 %v1221
    %2280 = vmatprep.subr.bf16.mxu0 %v1218
    %2281 = vmatpush1.bf16.msra.mxu0 %v1217
    %2282 = vmatprep.subr.bf16.mxu0 %v1214
    %2283 = vmatpush1.bf16.msra.mxu0 %v1213
    %2284 = vmatprep.subr.bf16.mxu0 %v1210
    %2285 = vmatpush1.bf16.msra.mxu0 %v1209
    %2286 = vmatprep.subr.bf16.mxu0 0
    %2287 = vmatpush2.bf16.msra.mxu0 0
    %2288 = vmatprep.subr.bf16.mxu0 0
    %2289 = vmatpush2.bf16.msra.mxu0 0
    %2290 = vmatprep.subr.bf16.mxu0 0
    %2291 = vmatpush2.bf16.msra.mxu0 0
    %2292 = vmatprep.subr.bf16.mxu0 0
    %2293 = vmatpush2.bf16.msra.mxu0 0
    %2294 = vmatprep.subr.bf16.mxu0 0
    %2295 = vmatpush2.bf16.msra.mxu0 0
    %2296 = vmatprep.subr.bf16.mxu0 0
    %2297 = vmatpush2.bf16.msra.mxu0 0
    %2298 = vmatprep.subr.bf16.mxu0 0
    %2299 = vmatpush2.bf16.msra.mxu0 0
    %2300 = vmatprep.subr.bf16.mxu0 0
    %2301 = vmatpush2.bf16.msra.mxu0 0
    %2302 = vmatprep.mubr.bf16.mxu0 0
    %2303 = vmatmul.mubr.bf16.gmra.mxu0 %v2068
    %v2304 = vpop.f32.mrf.mxu0
    %v2305 = vadd.f32 0.0, %v2304
    %v2306 = vpop.f32.mrf.mxu0
    %v2307 = vadd.f32 0.0, %v2306
    %v2308 = vpop.f32.mrf.mxu0
    %v2309 = vadd.f32 0.0, %v2308
    %v2310 = vpop.f32.mrf.mxu0
    %v2311 = vadd.f32 0.0, %v2310
    %2312 = vdwg.mxu0
    %2313 = vmatprep.subr.bf16.mxu0 %v1482
    %2314 = vmatpush1.bf16.msra.mxu0 %v1481
    %2315 = vmatprep.subr.bf16.mxu0 %v1478
    %2316 = vmatpush1.bf16.msra.mxu0 %v1477
    %2317 = vmatprep.subr.bf16.mxu0 %v1474
    %2318 = vmatpush1.bf16.msra.mxu0 %v1473
    %2319 = vmatprep.subr.bf16.mxu0 %v1470
    %2320 = vmatpush1.bf16.msra.mxu0 %v1469
    %2321 = vmatprep.subr.bf16.mxu0 %v1466
    %2322 = vmatpush1.bf16.msra.mxu0 %v1465
    %2323 = vmatprep.subr.bf16.mxu0 %v1462
    %2324 = vmatpush1.bf16.msra.mxu0 %v1461
    %2325 = vmatprep.subr.bf16.mxu0 %v1458
    %2326 = vmatpush1.bf16.msra.mxu0 %v1457
    %2327 = vmatprep.subr.bf16.mxu0 %v1454
    %2328 = vmatpush1.bf16.msra.mxu0 %v1453
    %2329 = vmatprep.subr.bf16.mxu0 0
    %2330 = vmatpush2.bf16.msra.mxu0 0
    %2331 = vmatprep.subr.bf16.mxu0 0
    %2332 = vmatpush2.bf16.msra.mxu0 0
    %2333 = vmatprep.subr.bf16.mxu0 0
    %2334 = vmatpush2.bf16.msra.mxu0 0
    %2335 = vmatprep.subr.bf16.mxu0 0
    %2336 = vmatpush2.bf16.msra.mxu0 0
    %2337 = vmatprep.subr.bf16.mxu0 0
    %2338 = vmatpush2.bf16.msra.mxu0 0
    %2339 = vmatprep.subr.bf16.mxu0 0
    %2340 = vmatpush2.bf16.msra.mxu0 0
    %2341 = vmatprep.subr.bf16.mxu0 0
    %2342 = vmatpush2.bf16.msra.mxu0 0
    %2343 = vmatprep.subr.bf16.mxu0 0
    %2344 = vmatpush2.bf16.msra.mxu0 0
    %2345 = vmatprep.mubr.bf16.mxu0 0
    %2346 = vmatmul.mubr.bf16.gmra.mxu0 %v2226
    %v2347 = vpop.f32.mrf.mxu0
    %v2348 = vadd.f32 %v2262, %v2347
    %v2349 = vpop.f32.mrf.mxu0
    %v2350 = vadd.f32 %v2264, %v2349
    %v2351 = vpop.f32.mrf.mxu0
    %v2352 = vadd.f32 %v2266, %v2351
    %v2353 = vpop.f32.mrf.mxu0
    %v2354 = vadd.f32 %v2268, %v2353
    %2355 = vdwg.mxu0
    %2356 = vmatprep.subr.bf16.mxu0 %v1484
    %2357 = vmatpush1.bf16.msra.mxu0 %v1483
    %2358 = vmatprep.subr.bf16.mxu0 %v1480
    %2359 = vmatpush1.bf16.msra.mxu0 %v1479
    %2360 = vmatprep.subr.bf16.mxu0 %v1476
    %2361 = vmatpush1.bf16.msra.mxu0 %v1475
    %2362 = vmatprep.subr.bf16.mxu0 %v1472
    %2363 = vmatpush1.bf16.msra.mxu0 %v1471
    %2364 = vmatprep.subr.bf16.mxu0 %v1468
    %2365 = vmatpush1.bf16.msra.mxu0 %v1467
    %2366 = vmatprep.subr.bf16.mxu0 %v1464
    %2367 = vmatpush1.bf16.msra.mxu0 %v1463
    %2368 = vmatprep.subr.bf16.mxu0 %v1460
    %2369 = vmatpush1.bf16.msra.mxu0 %v1459
    %2370 = vmatprep.subr.bf16.mxu0 %v1456
    %2371 = vmatpush1.bf16.msra.mxu0 %v1455
    %2372 = vmatprep.subr.bf16.mxu0 0
    %2373 = vmatpush2.bf16.msra.mxu0 0
    %2374 = vmatprep.subr.bf16.mxu0 0
    %2375 = vmatpush2.bf16.msra.mxu0 0
    %2376 = vmatprep.subr.bf16.mxu0 0
    %2377 = vmatpush2.bf16.msra.mxu0 0
    %2378 = vmatprep.subr.bf16.mxu0 0
    %2379 = vmatpush2.bf16.msra.mxu0 0
    %2380 = vmatprep.subr.bf16.mxu0 0
    %2381 = vmatpush2.bf16.msra.mxu0 0
    %2382 = vmatprep.subr.bf16.mxu0 0
    %2383 = vmatpush2.bf16.msra.mxu0 0
    %2384 = vmatprep.subr.bf16.mxu0 0
    %2385 = vmatpush2.bf16.msra.mxu0 0
    %2386 = vmatprep.subr.bf16.mxu0 0
    %2387 = vmatpush2.bf16.msra.mxu0 0
    %2388 = vmatprep.mubr.bf16.mxu0 0
    %2389 = vmatmul.mubr.bf16.gmra.mxu0 %v2226
    %v2390 = vpop.f32.mrf.mxu0
    %v2391 = vadd.f32 %v2305, %v2390
    %v2392 = vpop.f32.mrf.mxu0
    %v2393 = vadd.f32 %v2307, %v2392
    %v2394 = vpop.f32.mrf.mxu0
    %v2395 = vadd.f32 %v2309, %v2394
    %v2396 = vpop.f32.mrf.mxu0
    %v2397 = vadd.f32 %v2311, %v2396
    %2398 = vdwg.mxu0
    %v2399 = vadd.f32 %v2348, %v1608
    %v2400 = vadd.f32 %v2350, %v1612
    %v2401 = vadd.f32 %v2391, %v1616
    %v2402 = vadd.f32 %v2393, %v1620
    %v2403 = vadd.f32 %v2352, %v1608
    %v2404 = vadd.f32 %v2354, %v1612
    %v2405 = vadd.f32 %v2395, %v1616
    %v2406 = vadd.f32 %v2397, %v1620
    %v2407 = vxor.u32 %v2399, 2147483648
    %v2408 = vxor.u32 %v2403, 2147483648
    %v2409 = vmul.f32 %v2407, 1.442695
    %v2410 = vpow.pop %v2409
    %v2411 = vmul.f32 %v2408, 1.442695
    %v2412 = vpow.pop %v2411
    %v2413 = vadd.f32 %v2410, 1.0
    %v2414 = vadd.f32 %v2412, 1.0
    %v2415 = vrcp.pop %v2413
    %v2416 = vmul.f32 1.0, %v2415
    %v2417 = vrcp.pop %v2414
    %v2418 = vmul.f32 1.0, %v2417
    %v2419 = vxor.u32 %v2400, 2147483648
    %v2420 = vxor.u32 %v2404, 2147483648
    %v2421 = vmul.f32 %v2419, 1.442695
    %v2422 = vpow.pop %v2421
    %v2423 = vmul.f32 %v2420, 1.442695
    %v2424 = vpow.pop %v2423
    %v2425 = vadd.f32 %v2422, 1.0
    %v2426 = vadd.f32 %v2424, 1.0
    %v2427 = vrcp.pop %v2425
    %v2428 = vmul.f32 1.0, %v2427
    %v2429 = vrcp.pop %v2426
    %v2430 = vmul.f32 1.0, %v2429
    %v2431 = vtanh.pop %v2401
    %v2432 = vtanh.pop %v2405
    %v2433 = vxor.u32 %v2402, 2147483648
    %v2434 = vxor.u32 %v2406, 2147483648
    %v2435 = vmul.f32 %v2433, 1.442695
    %v2436 = vpow.pop %v2435
    %v2437 = vmul.f32 %v2434, 1.442695
    %v2438 = vpow.pop %v2437
    %v2439 = vadd.f32 %v2436, 1.0
    %v2440 = vadd.f32 %v2438, 1.0
    %v2441 = vrcp.pop %v2439
    %v2442 = vmul.f32 1.0, %v2441
    %v2443 = vrcp.pop %v2440
    %v2444 = vmul.f32 1.0, %v2443
    %v2445 = vmul.f32 %v2428, %v2062
    %v2446 = vmul.f32 %v2430, %v2063
    %v2447 = vmul.f32 %v2416, %v2431
    %v2448 = vmul.f32 %v2418, %v2432
    %v2449 = vadd.f32 %v2445, %v2447
    %v2450 = vadd.f32 %v2446, %v2448
    %v2451 = vtanh.pop %v2449
    %v2452 = vtanh.pop %v2450
    %v2453 = vmul.f32 %v2442, %v2451
    %v2454 = vmul.f32 %v2444, %v2452
    %v2455 = vpack.c.bf16 %v2454, %v2453
    %s2456 = smul.u32 6, 4
    %s2457 = smul.addr %s2456, 4
    %s2458 = scalar_lea.vmem [#allocation2], %s2457
    %v2459 = vld [vmem:[%s2458] sm:$0xff]
    %v2460 = vld [vmem:[%s2458 + $0x8] sm:$0xff]
    %v2461 = vld [vmem:[%s2458 + $0x10] sm:$0xff]
    %v2462 = vld [vmem:[%s2458 + $0x18] sm:$0xff]
    %v2463 = vunpack.c.l.bf16 %v2459
    %v2464 = vunpack.c.h.bf16 %v2459
    %v2465 = vunpack.c.l.bf16 %v2460
    %v2466 = vunpack.c.h.bf16 %v2460
    %v2467 = vunpack.c.l.bf16 %v2461
    %v2468 = vunpack.c.h.bf16 %v2461
    %v2469 = vunpack.c.l.bf16 %v2462
    %v2470 = vunpack.c.h.bf16 %v2462
    %2471 = vmatprep.subr.bf16.mxu0 %v863
    %2472 = vmatpush1.bf16.msra.mxu0 %v862
    %2473 = vmatprep.subr.bf16.mxu0 %v859
    %2474 = vmatpush1.bf16.msra.mxu0 %v858
    %2475 = vmatprep.subr.bf16.mxu0 %v855
    %2476 = vmatpush1.bf16.msra.mxu0 %v854
    %2477 = vmatprep.subr.bf16.mxu0 %v851
    %2478 = vmatpush1.bf16.msra.mxu0 %v850
    %2479 = vmatprep.subr.bf16.mxu0 %v847
    %2480 = vmatpush1.bf16.msra.mxu0 %v846
    %2481 = vmatprep.subr.bf16.mxu0 %v843
    %2482 = vmatpush1.bf16.msra.mxu0 %v842
    %2483 = vmatprep.subr.bf16.mxu0 %v839
    %2484 = vmatpush1.bf16.msra.mxu0 %v838
    %2485 = vmatprep.subr.bf16.mxu0 %v835
    %2486 = vmatpush1.bf16.msra.mxu0 %v834
    %2487 = vmatprep.subr.bf16.mxu0 0
    %2488 = vmatpush2.bf16.msra.mxu0 0
    %2489 = vmatprep.subr.bf16.mxu0 0
    %2490 = vmatpush2.bf16.msra.mxu0 0
    %2491 = vmatprep.subr.bf16.mxu0 0
    %2492 = vmatpush2.bf16.msra.mxu0 0
    %2493 = vmatprep.subr.bf16.mxu0 0
    %2494 = vmatpush2.bf16.msra.mxu0 0
    %2495 = vmatprep.subr.bf16.mxu0 0
    %2496 = vmatpush2.bf16.msra.mxu0 0
    %2497 = vmatprep.subr.bf16.mxu0 0
    %2498 = vmatpush2.bf16.msra.mxu0 0
    %2499 = vmatprep.subr.bf16.mxu0 0
    %2500 = vmatpush2.bf16.msra.mxu0 0
    %2501 = vmatprep.subr.bf16.mxu0 0
    %2502 = vmatpush2.bf16.msra.mxu0 0
    %2503 = vmatprep.mubr.bf16.mxu0 0
    %2504 = vmatmul.mubr.bf16.gmra.mxu0 %v2226
    %v2505 = vpop.f32.mrf.mxu0
    %v2506 = vadd.f32 0.0, %v2505
    %v2507 = vpop.f32.mrf.mxu0
    %v2508 = vadd.f32 0.0, %v2507
    %v2509 = vpop.f32.mrf.mxu0
    %v2510 = vadd.f32 0.0, %v2509
    %v2511 = vpop.f32.mrf.mxu0
    %v2512 = vadd.f32 0.0, %v2511
    %2513 = vdwg.mxu0
    %2514 = vmatprep.subr.bf16.mxu0 %v865
    %2515 = vmatpush1.bf16.msra.mxu0 %v864
    %2516 = vmatprep.subr.bf16.mxu0 %v861
    %2517 = vmatpush1.bf16.msra.mxu0 %v860
    %2518 = vmatprep.subr.bf16.mxu0 %v857
    %2519 = vmatpush1.bf16.msra.mxu0 %v856
    %2520 = vmatprep.subr.bf16.mxu0 %v853
    %2521 = vmatpush1.bf16.msra.mxu0 %v852
    %2522 = vmatprep.subr.bf16.mxu0 %v849
    %2523 = vmatpush1.bf16.msra.mxu0 %v848
    %2524 = vmatprep.subr.bf16.mxu0 %v845
    %2525 = vmatpush1.bf16.msra.mxu0 %v844
    %2526 = vmatprep.subr.bf16.mxu0 %v841
    %2527 = vmatpush1.bf16.msra.mxu0 %v840
    %2528 = vmatprep.subr.bf16.mxu0 %v837
    %2529 = vmatpush1.bf16.msra.mxu0 %v836
    %2530 = vmatprep.subr.bf16.mxu0 0
    %2531 = vmatpush2.bf16.msra.mxu0 0
    %2532 = vmatprep.subr.bf16.mxu0 0
    %2533 = vmatpush2.bf16.msra.mxu0 0
    %2534 = vmatprep.subr.bf16.mxu0 0
    %2535 = vmatpush2.bf16.msra.mxu0 0
    %2536 = vmatprep.subr.bf16.mxu0 0
    %2537 = vmatpush2.bf16.msra.mxu0 0
    %2538 = vmatprep.subr.bf16.mxu0 0
    %2539 = vmatpush2.bf16.msra.mxu0 0
    %2540 = vmatprep.subr.bf16.mxu0 0
    %2541 = vmatpush2.bf16.msra.mxu0 0
    %2542 = vmatprep.subr.bf16.mxu0 0
    %2543 = vmatpush2.bf16.msra.mxu0 0
    %2544 = vmatprep.subr.bf16.mxu0 0
    %2545 = vmatpush2.bf16.msra.mxu0 0
    %2546 = vmatprep.mubr.bf16.mxu0 0
    %2547 = vmatmul.mubr.bf16.gmra.mxu0 %v2226
    %v2548 = vpop.f32.mrf.mxu0
    %v2549 = vadd.f32 0.0, %v2548
    %v2550 = vpop.f32.mrf.mxu0
    %v2551 = vadd.f32 0.0, %v2550
    %v2552 = vpop.f32.mrf.mxu0
    %v2553 = vadd.f32 0.0, %v2552
    %v2554 = vpop.f32.mrf.mxu0
    %v2555 = vadd.f32 0.0, %v2554
    %2556 = vdwg.mxu0
    %v2557 = vadd.f32 %v2463, %v2506
    %v2558 = vadd.f32 %v2464, %v2508
    %v2559 = vadd.f32 %v2465, %v2549
    %v2560 = vadd.f32 %v2466, %v2551
    %v2561 = vadd.f32 %v2467, %v2510
    %v2562 = vadd.f32 %v2468, %v2512
    %v2563 = vadd.f32 %v2469, %v2553
    %v2564 = vadd.f32 %v2470, %v2555
    %v2565 = vxor.u32 %v2557, 2147483648
    %v2566 = vxor.u32 %v2561, 2147483648
    %v2567 = vmul.f32 %v2565, 1.442695
    %v2568 = vpow.pop %v2567
    %v2569 = vmul.f32 %v2566, 1.442695
    %v2570 = vpow.pop %v2569
    %v2571 = vadd.f32 %v2568, 1.0
    %v2572 = vadd.f32 %v2570, 1.0
    %v2573 = vrcp.pop %v2571
    %v2574 = vmul.f32 1.0, %v2573
    %v2575 = vrcp.pop %v2572
    %v2576 = vmul.f32 1.0, %v2575
    %v2577 = vxor.u32 %v2558, 2147483648
    %v2578 = vxor.u32 %v2562, 2147483648
    %v2579 = vmul.f32 %v2577, 1.442695
    %v2580 = vpow.pop %v2579
    %v2581 = vmul.f32 %v2578, 1.442695
    %v2582 = vpow.pop %v2581
    %v2583 = vadd.f32 %v2580, 1.0
    %v2584 = vadd.f32 %v2582, 1.0
    %v2585 = vrcp.pop %v2583
    %v2586 = vmul.f32 1.0, %v2585
    %v2587 = vrcp.pop %v2584
    %v2588 = vmul.f32 1.0, %v2587
    %v2589 = vtanh.pop %v2559
    %v2590 = vtanh.pop %v2563
    %v2591 = vxor.u32 %v2560, 2147483648
    %v2592 = vxor.u32 %v2564, 2147483648
    %v2593 = vmul.f32 %v2591, 1.442695
    %v2594 = vpow.pop %v2593
    %v2595 = vmul.f32 %v2592, 1.442695
    %v2596 = vpow.pop %v2595
    %v2597 = vadd.f32 %v2594, 1.0
    %v2598 = vadd.f32 %v2596, 1.0
    %v2599 = vrcp.pop %v2597
    %v2600 = vmul.f32 1.0, %v2599
    %v2601 = vrcp.pop %v2598
    %v2602 = vmul.f32 1.0, %v2601
    %v2603 = vmul.f32 %v2586, %v2220
    %v2604 = vmul.f32 %v2588, %v2221
    %v2605 = vmul.f32 %v2574, %v2589
    %v2606 = vmul.f32 %v2576, %v2590
    %v2607 = vadd.f32 %v2603, %v2605
    %v2608 = vadd.f32 %v2604, %v2606
    %v2609 = vtanh.pop %v2607
    %v2610 = vtanh.pop %v2608
    %v2611 = vmul.f32 %v2600, %v2609
    %v2612 = vmul.f32 %v2602, %v2610
    %v2613 = vpack.c.bf16 %v2612, %v2611
    %2614 = vmatprep.subr.bf16.mxu0 %v1236
    %2615 = vmatpush1.bf16.msra.mxu0 %v1235
    %2616 = vmatprep.subr.bf16.mxu0 %v1232
    %2617 = vmatpush1.bf16.msra.mxu0 %v1231
    %2618 = vmatprep.subr.bf16.mxu0 %v1228
    %2619 = vmatpush1.bf16.msra.mxu0 %v1227
    %2620 = vmatprep.subr.bf16.mxu0 %v1224
    %2621 = vmatpush1.bf16.msra.mxu0 %v1223
    %2622 = vmatprep.subr.bf16.mxu0 %v1220
    %2623 = vmatpush1.bf16.msra.mxu0 %v1219
    %2624 = vmatprep.subr.bf16.mxu0 %v1216
    %2625 = vmatpush1.bf16.msra.mxu0 %v1215
    %2626 = vmatprep.subr.bf16.mxu0 %v1212
    %2627 = vmatpush1.bf16.msra.mxu0 %v1211
    %2628 = vmatprep.subr.bf16.mxu0 %v1208
    %2629 = vmatpush1.bf16.msra.mxu0 %v1207
    %2630 = vmatprep.subr.bf16.mxu0 0
    %2631 = vmatpush2.bf16.msra.mxu0 0
    %2632 = vmatprep.subr.bf16.mxu0 0
    %2633 = vmatpush2.bf16.msra.mxu0 0
    %2634 = vmatprep.subr.bf16.mxu0 0
    %2635 = vmatpush2.bf16.msra.mxu0 0
    %2636 = vmatprep.subr.bf16.mxu0 0
    %2637 = vmatpush2.bf16.msra.mxu0 0
    %2638 = vmatprep.subr.bf16.mxu0 0
    %2639 = vmatpush2.bf16.msra.mxu0 0
    %2640 = vmatprep.subr.bf16.mxu0 0
    %2641 = vmatpush2.bf16.msra.mxu0 0
    %2642 = vmatprep.subr.bf16.mxu0 0
    %2643 = vmatpush2.bf16.msra.mxu0 0
    %2644 = vmatprep.subr.bf16.mxu0 0
    %2645 = vmatpush2.bf16.msra.mxu0 0
    %2646 = vmatprep.mubr.bf16.mxu0 0
    %2647 = vmatmul.mubr.bf16.gmra.mxu0 %v2455
    %v2648 = vpop.f32.mrf.mxu0
    %v2649 = vadd.f32 0.0, %v2648
    %v2650 = vpop.f32.mrf.mxu0
    %v2651 = vadd.f32 0.0, %v2650
    %v2652 = vpop.f32.mrf.mxu0
    %v2653 = vadd.f32 0.0, %v2652
    %v2654 = vpop.f32.mrf.mxu0
    %v2655 = vadd.f32 0.0, %v2654
    %2656 = vdwg.mxu0
    %2657 = vmatprep.subr.bf16.mxu0 %v1238
    %2658 = vmatpush1.bf16.msra.mxu0 %v1237
    %2659 = vmatprep.subr.bf16.mxu0 %v1234
    %2660 = vmatpush1.bf16.msra.mxu0 %v1233
    %2661 = vmatprep.subr.bf16.mxu0 %v1230
    %2662 = vmatpush1.bf16.msra.mxu0 %v1229
    %2663 = vmatprep.subr.bf16.mxu0 %v1226
    %2664 = vmatpush1.bf16.msra.mxu0 %v1225
    %2665 = vmatprep.subr.bf16.mxu0 %v1222
    %2666 = vmatpush1.bf16.msra.mxu0 %v1221
    %2667 = vmatprep.subr.bf16.mxu0 %v1218
    %2668 = vmatpush1.bf16.msra.mxu0 %v1217
    %2669 = vmatprep.subr.bf16.mxu0 %v1214
    %2670 = vmatpush1.bf16.msra.mxu0 %v1213
    %2671 = vmatprep.subr.bf16.mxu0 %v1210
    %2672 = vmatpush1.bf16.msra.mxu0 %v1209
    %2673 = vmatprep.subr.bf16.mxu0 0
    %2674 = vmatpush2.bf16.msra.mxu0 0
    %2675 = vmatprep.subr.bf16.mxu0 0
    %2676 = vmatpush2.bf16.msra.mxu0 0
    %2677 = vmatprep.subr.bf16.mxu0 0
    %2678 = vmatpush2.bf16.msra.mxu0 0
    %2679 = vmatprep.subr.bf16.mxu0 0
    %2680 = vmatpush2.bf16.msra.mxu0 0
    %2681 = vmatprep.subr.bf16.mxu0 0
    %2682 = vmatpush2.bf16.msra.mxu0 0
    %2683 = vmatprep.subr.bf16.mxu0 0
    %2684 = vmatpush2.bf16.msra.mxu0 0
    %2685 = vmatprep.subr.bf16.mxu0 0
    %2686 = vmatpush2.bf16.msra.mxu0 0
    %2687 = vmatprep.subr.bf16.mxu0 0
    %2688 = vmatpush2.bf16.msra.mxu0 0
    %2689 = vmatprep.mubr.bf16.mxu0 0
    %2690 = vmatmul.mubr.bf16.gmra.mxu0 %v2455
    %v2691 = vpop.f32.mrf.mxu0
    %v2692 = vadd.f32 0.0, %v2691
    %v2693 = vpop.f32.mrf.mxu0
    %v2694 = vadd.f32 0.0, %v2693
    %v2695 = vpop.f32.mrf.mxu0
    %v2696 = vadd.f32 0.0, %v2695
    %v2697 = vpop.f32.mrf.mxu0
    %v2698 = vadd.f32 0.0, %v2697
    %2699 = vdwg.mxu0
    %2700 = vmatprep.subr.bf16.mxu0 %v1482
    %2701 = vmatpush1.bf16.msra.mxu0 %v1481
    %2702 = vmatprep.subr.bf16.mxu0 %v1478
    %2703 = vmatpush1.bf16.msra.mxu0 %v1477
    %2704 = vmatprep.subr.bf16.mxu0 %v1474
    %2705 = vmatpush1.bf16.msra.mxu0 %v1473
    %2706 = vmatprep.subr.bf16.mxu0 %v1470
    %2707 = vmatpush1.bf16.msra.mxu0 %v1469
    %2708 = vmatprep.subr.bf16.mxu0 %v1466
    %2709 = vmatpush1.bf16.msra.mxu0 %v1465
    %2710 = vmatprep.subr.bf16.mxu0 %v1462
    %2711 = vmatpush1.bf16.msra.mxu0 %v1461
    %2712 = vmatprep.subr.bf16.mxu0 %v1458
    %2713 = vmatpush1.bf16.msra.mxu0 %v1457
    %2714 = vmatprep.subr.bf16.mxu0 %v1454
    %2715 = vmatpush1.bf16.msra.mxu0 %v1453
    %2716 = vmatprep.subr.bf16.mxu0 0
    %2717 = vmatpush2.bf16.msra.mxu0 0
    %2718 = vmatprep.subr.bf16.mxu0 0
    %2719 = vmatpush2.bf16.msra.mxu0 0
    %2720 = vmatprep.subr.bf16.mxu0 0
    %2721 = vmatpush2.bf16.msra.mxu0 0
    %2722 = vmatprep.subr.bf16.mxu0 0
    %2723 = vmatpush2.bf16.msra.mxu0 0
    %2724 = vmatprep.subr.bf16.mxu0 0
    %2725 = vmatpush2.bf16.msra.mxu0 0
    %2726 = vmatprep.subr.bf16.mxu0 0
    %2727 = vmatpush2.bf16.msra.mxu0 0
    %2728 = vmatprep.subr.bf16.mxu0 0
    %2729 = vmatpush2.bf16.msra.mxu0 0
    %2730 = vmatprep.subr.bf16.mxu0 0
    %2731 = vmatpush2.bf16.msra.mxu0 0
    %2732 = vmatprep.mubr.bf16.mxu0 0
    %2733 = vmatmul.mubr.bf16.gmra.mxu0 %v2613
    %v2734 = vpop.f32.mrf.mxu0
    %v2735 = vadd.f32 %v2649, %v2734
    %v2736 = vpop.f32.mrf.mxu0
    %v2737 = vadd.f32 %v2651, %v2736
    %v2738 = vpop.f32.mrf.mxu0
    %v2739 = vadd.f32 %v2653, %v2738
    %v2740 = vpop.f32.mrf.mxu0
    %v2741 = vadd.f32 %v2655, %v2740
    %2742 = vdwg.mxu0
    %2743 = vmatprep.subr.bf16.mxu0 %v1484
    %2744 = vmatpush1.bf16.msra.mxu0 %v1483
    %2745 = vmatprep.subr.bf16.mxu0 %v1480
    %2746 = vmatpush1.bf16.msra.mxu0 %v1479
    %2747 = vmatprep.subr.bf16.mxu0 %v1476
    %2748 = vmatpush1.bf16.msra.mxu0 %v1475
    %2749 = vmatprep.subr.bf16.mxu0 %v1472
    %2750 = vmatpush1.bf16.msra.mxu0 %v1471
    %2751 = vmatprep.subr.bf16.mxu0 %v1468
    %2752 = vmatpush1.bf16.msra.mxu0 %v1467
    %2753 = vmatprep.subr.bf16.mxu0 %v1464
    %2754 = vmatpush1.bf16.msra.mxu0 %v1463
    %2755 = vmatprep.subr.bf16.mxu0 %v1460
    %2756 = vmatpush1.bf16.msra.mxu0 %v1459
    %2757 = vmatprep.subr.bf16.mxu0 %v1456
    %2758 = vmatpush1.bf16.msra.mxu0 %v1455
    %2759 = vmatprep.subr.bf16.mxu0 0
    %2760 = vmatpush2.bf16.msra.mxu0 0
    %2761 = vmatprep.subr.bf16.mxu0 0
    %2762 = vmatpush2.bf16.msra.mxu0 0
    %2763 = vmatprep.subr.bf16.mxu0 0
    %2764 = vmatpush2.bf16.msra.mxu0 0
    %2765 = vmatprep.subr.bf16.mxu0 0
    %2766 = vmatpush2.bf16.msra.mxu0 0
    %2767 = vmatprep.subr.bf16.mxu0 0
    %2768 = vmatpush2.bf16.msra.mxu0 0
    %2769 = vmatprep.subr.bf16.mxu0 0
    %2770 = vmatpush2.bf16.msra.mxu0 0
    %2771 = vmatprep.subr.bf16.mxu0 0
    %2772 = vmatpush2.bf16.msra.mxu0 0
    %2773 = vmatprep.subr.bf16.mxu0 0
    %2774 = vmatpush2.bf16.msra.mxu0 0
    %2775 = vmatprep.mubr.bf16.mxu0 0
    %2776 = vmatmul.mubr.bf16.gmra.mxu0 %v2613
    %v2777 = vpop.f32.mrf.mxu0
    %v2778 = vadd.f32 %v2692, %v2777
    %v2779 = vpop.f32.mrf.mxu0
    %v2780 = vadd.f32 %v2694, %v2779
    %v2781 = vpop.f32.mrf.mxu0
    %v2782 = vadd.f32 %v2696, %v2781
    %v2783 = vpop.f32.mrf.mxu0
    %v2784 = vadd.f32 %v2698, %v2783
    %2785 = vdwg.mxu0
    %v2786 = vadd.f32 %v2735, %v1608
    %v2787 = vadd.f32 %v2737, %v1612
    %v2788 = vadd.f32 %v2778, %v1616
    %v2789 = vadd.f32 %v2780, %v1620
    %v2790 = vadd.f32 %v2739, %v1608
    %v2791 = vadd.f32 %v2741, %v1612
    %v2792 = vadd.f32 %v2782, %v1616
    %v2793 = vadd.f32 %v2784, %v1620
    %v2794 = vxor.u32 %v2786, 2147483648
    %v2795 = vxor.u32 %v2790, 2147483648
    %v2796 = vmul.f32 %v2794, 1.442695
    %v2797 = vpow.pop %v2796
    %v2798 = vmul.f32 %v2795, 1.442695
    %v2799 = vpow.pop %v2798
    %v2800 = vadd.f32 %v2797, 1.0
    %v2801 = vadd.f32 %v2799, 1.0
    %v2802 = vrcp.pop %v2800
    %v2803 = vmul.f32 1.0, %v2802
    %v2804 = vrcp.pop %v2801
    %v2805 = vmul.f32 1.0, %v2804
    %v2806 = vxor.u32 %v2787, 2147483648
    %v2807 = vxor.u32 %v2791, 2147483648
    %v2808 = vmul.f32 %v2806, 1.442695
    %v2809 = vpow.pop %v2808
    %v2810 = vmul.f32 %v2807, 1.442695
    %v2811 = vpow.pop %v2810
    %v2812 = vadd.f32 %v2809, 1.0
    %v2813 = vadd.f32 %v2811, 1.0
    %v2814 = vrcp.pop %v2812
    %v2815 = vmul.f32 1.0, %v2814
    %v2816 = vrcp.pop %v2813
    %v2817 = vmul.f32 1.0, %v2816
    %v2818 = vtanh.pop %v2788
    %v2819 = vtanh.pop %v2792
    %v2820 = vxor.u32 %v2789, 2147483648
    %v2821 = vxor.u32 %v2793, 2147483648
    %v2822 = vmul.f32 %v2820, 1.442695
    %v2823 = vpow.pop %v2822
    %v2824 = vmul.f32 %v2821, 1.442695
    %v2825 = vpow.pop %v2824
    %v2826 = vadd.f32 %v2823, 1.0
    %v2827 = vadd.f32 %v2825, 1.0
    %v2828 = vrcp.pop %v2826
    %v2829 = vmul.f32 1.0, %v2828
    %v2830 = vrcp.pop %v2827
    %v2831 = vmul.f32 1.0, %v2830
    %v2832 = vmul.f32 %v2815, %v2449
    %v2833 = vmul.f32 %v2817, %v2450
    %v2834 = vmul.f32 %v2803, %v2818
    %v2835 = vmul.f32 %v2805, %v2819
    %v2836 = vadd.f32 %v2832, %v2834
    %v2837 = vadd.f32 %v2833, %v2835
    %v2838 = vtanh.pop %v2836
    %v2839 = vtanh.pop %v2837
    %v2840 = vmul.f32 %v2829, %v2838
    %v2841 = vmul.f32 %v2831, %v2839
    %v2842 = vpack.c.bf16 %v2841, %v2840
    %s2843 = smul.u32 8, 4
    %s2844 = smul.addr %s2843, 4
    %s2845 = scalar_lea.vmem [#allocation2], %s2844
    %v2846 = vld [vmem:[%s2845] sm:$0xff]
    %v2847 = vld [vmem:[%s2845 + $0x8] sm:$0xff]
    %v2848 = vld [vmem:[%s2845 + $0x10] sm:$0xff]
    %v2849 = vld [vmem:[%s2845 + $0x18] sm:$0xff]
    %v2850 = vunpack.c.l.bf16 %v2846
    %v2851 = vunpack.c.h.bf16 %v2846
    %v2852 = vunpack.c.l.bf16 %v2847
    %v2853 = vunpack.c.h.bf16 %v2847
    %v2854 = vunpack.c.l.bf16 %v2848
    %v2855 = vunpack.c.h.bf16 %v2848
    %v2856 = vunpack.c.l.bf16 %v2849
    %v2857 = vunpack.c.h.bf16 %v2849
    %2858 = vmatprep.subr.bf16.mxu0 %v863
    %2859 = vmatpush1.bf16.msra.mxu0 %v862
    %2860 = vmatprep.subr.bf16.mxu0 %v859
    %2861 = vmatpush1.bf16.msra.mxu0 %v858
    %2862 = vmatprep.subr.bf16.mxu0 %v855
    %2863 = vmatpush1.bf16.msra.mxu0 %v854
    %2864 = vmatprep.subr.bf16.mxu0 %v851
    %2865 = vmatpush1.bf16.msra.mxu0 %v850
    %2866 = vmatprep.subr.bf16.mxu0 %v847
    %2867 = vmatpush1.bf16.msra.mxu0 %v846
    %2868 = vmatprep.subr.bf16.mxu0 %v843
    %2869 = vmatpush1.bf16.msra.mxu0 %v842
    %2870 = vmatprep.subr.bf16.mxu0 %v839
    %2871 = vmatpush1.bf16.msra.mxu0 %v838
    %2872 = vmatprep.subr.bf16.mxu0 %v835
    %2873 = vmatpush1.bf16.msra.mxu0 %v834
    %2874 = vmatprep.subr.bf16.mxu0 0
    %2875 = vmatpush2.bf16.msra.mxu0 0
    %2876 = vmatprep.subr.bf16.mxu0 0
    %2877 = vmatpush2.bf16.msra.mxu0 0
    %2878 = vmatprep.subr.bf16.mxu0 0
    %2879 = vmatpush2.bf16.msra.mxu0 0
    %2880 = vmatprep.subr.bf16.mxu0 0
    %2881 = vmatpush2.bf16.msra.mxu0 0
    %2882 = vmatprep.subr.bf16.mxu0 0
    %2883 = vmatpush2.bf16.msra.mxu0 0
    %2884 = vmatprep.subr.bf16.mxu0 0
    %2885 = vmatpush2.bf16.msra.mxu0 0
    %2886 = vmatprep.subr.bf16.mxu0 0
    %2887 = vmatpush2.bf16.msra.mxu0 0
    %2888 = vmatprep.subr.bf16.mxu0 0
    %2889 = vmatpush2.bf16.msra.mxu0 0
    %2890 = vmatprep.mubr.bf16.mxu0 0
    %2891 = vmatmul.mubr.bf16.gmra.mxu0 %v2613
    %v2892 = vpop.f32.mrf.mxu0
    %v2893 = vadd.f32 0.0, %v2892
    %v2894 = vpop.f32.mrf.mxu0
    %v2895 = vadd.f32 0.0, %v2894
    %v2896 = vpop.f32.mrf.mxu0
    %v2897 = vadd.f32 0.0, %v2896
    %v2898 = vpop.f32.mrf.mxu0
    %v2899 = vadd.f32 0.0, %v2898
    %2900 = vdwg.mxu0
    %2901 = vmatprep.subr.bf16.mxu0 %v865
    %2902 = vmatpush1.bf16.msra.mxu0 %v864
    %2903 = vmatprep.subr.bf16.mxu0 %v861
    %2904 = vmatpush1.bf16.msra.mxu0 %v860
    %2905 = vmatprep.subr.bf16.mxu0 %v857
    %2906 = vmatpush1.bf16.msra.mxu0 %v856
    %2907 = vmatprep.subr.bf16.mxu0 %v853
    %2908 = vmatpush1.bf16.msra.mxu0 %v852
    %2909 = vmatprep.subr.bf16.mxu0 %v849
    %2910 = vmatpush1.bf16.msra.mxu0 %v848
    %2911 = vmatprep.subr.bf16.mxu0 %v845
    %2912 = vmatpush1.bf16.msra.mxu0 %v844
    %2913 = vmatprep.subr.bf16.mxu0 %v841
    %2914 = vmatpush1.bf16.msra.mxu0 %v840
    %2915 = vmatprep.subr.bf16.mxu0 %v837
    %2916 = vmatpush1.bf16.msra.mxu0 %v836
    %2917 = vmatprep.subr.bf16.mxu0 0
    %2918 = vmatpush2.bf16.msra.mxu0 0
    %2919 = vmatprep.subr.bf16.mxu0 0
    %2920 = vmatpush2.bf16.msra.mxu0 0
    %2921 = vmatprep.subr.bf16.mxu0 0
    %2922 = vmatpush2.bf16.msra.mxu0 0
    %2923 = vmatprep.subr.bf16.mxu0 0
    %2924 = vmatpush2.bf16.msra.mxu0 0
    %2925 = vmatprep.subr.bf16.mxu0 0
    %2926 = vmatpush2.bf16.msra.mxu0 0
    %2927 = vmatprep.subr.bf16.mxu0 0
    %2928 = vmatpush2.bf16.msra.mxu0 0
    %2929 = vmatprep.subr.bf16.mxu0 0
    %2930 = vmatpush2.bf16.msra.mxu0 0
    %2931 = vmatprep.subr.bf16.mxu0 0
    %2932 = vmatpush2.bf16.msra.mxu0 0
    %2933 = vmatprep.mubr.bf16.mxu0 0
    %2934 = vmatmul.mubr.bf16.gmra.mxu0 %v2613
    %v2935 = vpop.f32.mrf.mxu0
    %v2936 = vadd.f32 0.0, %v2935
    %v2937 = vpop.f32.mrf.mxu0
    %v2938 = vadd.f32 0.0, %v2937
    %v2939 = vpop.f32.mrf.mxu0
    %v2940 = vadd.f32 0.0, %v2939
    %v2941 = vpop.f32.mrf.mxu0
    %v2942 = vadd.f32 0.0, %v2941
    %2943 = vdwg.mxu0
    %v2944 = vadd.f32 %v2850, %v2893
    %v2945 = vadd.f32 %v2851, %v2895
    %v2946 = vadd.f32 %v2852, %v2936
    %v2947 = vadd.f32 %v2853, %v2938
    %v2948 = vadd.f32 %v2854, %v2897
    %v2949 = vadd.f32 %v2855, %v2899
    %v2950 = vadd.f32 %v2856, %v2940
    %v2951 = vadd.f32 %v2857, %v2942
    %v2952 = vxor.u32 %v2944, 2147483648
    %v2953 = vxor.u32 %v2948, 2147483648
    %v2954 = vmul.f32 %v2952, 1.442695
    %v2955 = vpow.pop %v2954
    %v2956 = vmul.f32 %v2953, 1.442695
    %v2957 = vpow.pop %v2956
    %v2958 = vadd.f32 %v2955, 1.0
    %v2959 = vadd.f32 %v2957, 1.0
    %v2960 = vrcp.pop %v2958
    %v2961 = vmul.f32 1.0, %v2960
    %v2962 = vrcp.pop %v2959
    %v2963 = vmul.f32 1.0, %v2962
    %v2964 = vxor.u32 %v2945, 2147483648
    %v2965 = vxor.u32 %v2949, 2147483648
    %v2966 = vmul.f32 %v2964, 1.442695
    %v2967 = vpow.pop %v2966
    %v2968 = vmul.f32 %v2965, 1.442695
    %v2969 = vpow.pop %v2968
    %v2970 = vadd.f32 %v2967, 1.0
    %v2971 = vadd.f32 %v2969, 1.0
    %v2972 = vrcp.pop %v2970
    %v2973 = vmul.f32 1.0, %v2972
    %v2974 = vrcp.pop %v2971
    %v2975 = vmul.f32 1.0, %v2974
    %v2976 = vtanh.pop %v2946
    %v2977 = vtanh.pop %v2950
    %v2978 = vxor.u32 %v2947, 2147483648
    %v2979 = vxor.u32 %v2951, 2147483648
    %v2980 = vmul.f32 %v2978, 1.442695
    %v2981 = vpow.pop %v2980
    %v2982 = vmul.f32 %v2979, 1.442695
    %v2983 = vpow.pop %v2982
    %v2984 = vadd.f32 %v2981, 1.0
    %v2985 = vadd.f32 %v2983, 1.0
    %v2986 = vrcp.pop %v2984
    %v2987 = vmul.f32 1.0, %v2986
    %v2988 = vrcp.pop %v2985
    %v2989 = vmul.f32 1.0, %v2988
    %v2990 = vmul.f32 %v2973, %v2607
    %v2991 = vmul.f32 %v2975, %v2608
    %v2992 = vmul.f32 %v2961, %v2976
    %v2993 = vmul.f32 %v2963, %v2977
    %v2994 = vadd.f32 %v2990, %v2992
    %v2995 = vadd.f32 %v2991, %v2993
    %v2996 = vtanh.pop %v2994
    %v2997 = vtanh.pop %v2995
    %v2998 = vmul.f32 %v2987, %v2996
    %v2999 = vmul.f32 %v2989, %v2997
    %v3000 = vpack.c.bf16 %v2999, %v2998
    %3001 = vmatprep.subr.bf16.mxu0 %v1236
    %3002 = vmatpush1.bf16.msra.mxu0 %v1235
    %3003 = vmatprep.subr.bf16.mxu0 %v1232
    %3004 = vmatpush1.bf16.msra.mxu0 %v1231
    %3005 = vmatprep.subr.bf16.mxu0 %v1228
    %3006 = vmatpush1.bf16.msra.mxu0 %v1227
    %3007 = vmatprep.subr.bf16.mxu0 %v1224
    %3008 = vmatpush1.bf16.msra.mxu0 %v1223
    %3009 = vmatprep.subr.bf16.mxu0 %v1220
    %3010 = vmatpush1.bf16.msra.mxu0 %v1219
    %3011 = vmatprep.subr.bf16.mxu0 %v1216
    %3012 = vmatpush1.bf16.msra.mxu0 %v1215
    %3013 = vmatprep.subr.bf16.mxu0 %v1212
    %3014 = vmatpush1.bf16.msra.mxu0 %v1211
    %3015 = vmatprep.subr.bf16.mxu0 %v1208
    %3016 = vmatpush1.bf16.msra.mxu0 %v1207
    %3017 = vmatprep.subr.bf16.mxu0 0
    %3018 = vmatpush2.bf16.msra.mxu0 0
    %3019 = vmatprep.subr.bf16.mxu0 0
    %3020 = vmatpush2.bf16.msra.mxu0 0
    %3021 = vmatprep.subr.bf16.mxu0 0
    %3022 = vmatpush2.bf16.msra.mxu0 0
    %3023 = vmatprep.subr.bf16.mxu0 0
    %3024 = vmatpush2.bf16.msra.mxu0 0
    %3025 = vmatprep.subr.bf16.mxu0 0
    %3026 = vmatpush2.bf16.msra.mxu0 0
    %3027 = vmatprep.subr.bf16.mxu0 0
    %3028 = vmatpush2.bf16.msra.mxu0 0
    %3029 = vmatprep.subr.bf16.mxu0 0
    %3030 = vmatpush2.bf16.msra.mxu0 0
    %3031 = vmatprep.subr.bf16.mxu0 0
    %3032 = vmatpush2.bf16.msra.mxu0 0
    %3033 = vmatprep.mubr.bf16.mxu0 0
    %3034 = vmatmul.mubr.bf16.gmra.mxu0 %v2842
    %v3035 = vpop.f32.mrf.mxu0
    %v3036 = vadd.f32 0.0, %v3035
    %v3037 = vpop.f32.mrf.mxu0
    %v3038 = vadd.f32 0.0, %v3037
    %v3039 = vpop.f32.mrf.mxu0
    %v3040 = vadd.f32 0.0, %v3039
    %v3041 = vpop.f32.mrf.mxu0
    %v3042 = vadd.f32 0.0, %v3041
    %3043 = vdwg.mxu0
    %3044 = vmatprep.subr.bf16.mxu0 %v1238
    %3045 = vmatpush1.bf16.msra.mxu0 %v1237
    %3046 = vmatprep.subr.bf16.mxu0 %v1234
    %3047 = vmatpush1.bf16.msra.mxu0 %v1233
    %3048 = vmatprep.subr.bf16.mxu0 %v1230
    %3049 = vmatpush1.bf16.msra.mxu0 %v1229
    %3050 = vmatprep.subr.bf16.mxu0 %v1226
    %3051 = vmatpush1.bf16.msra.mxu0 %v1225
    %3052 = vmatprep.subr.bf16.mxu0 %v1222
    %3053 = vmatpush1.bf16.msra.mxu0 %v1221
    %3054 = vmatprep.subr.bf16.mxu0 %v1218
    %3055 = vmatpush1.bf16.msra.mxu0 %v1217
    %3056 = vmatprep.subr.bf16.mxu0 %v1214
    %3057 = vmatpush1.bf16.msra.mxu0 %v1213
    %3058 = vmatprep.subr.bf16.mxu0 %v1210
    %3059 = vmatpush1.bf16.msra.mxu0 %v1209
    %3060 = vmatprep.subr.bf16.mxu0 0
    %3061 = vmatpush2.bf16.msra.mxu0 0
    %3062 = vmatprep.subr.bf16.mxu0 0
    %3063 = vmatpush2.bf16.msra.mxu0 0
    %3064 = vmatprep.subr.bf16.mxu0 0
    %3065 = vmatpush2.bf16.msra.mxu0 0
    %3066 = vmatprep.subr.bf16.mxu0 0
    %3067 = vmatpush2.bf16.msra.mxu0 0
    %3068 = vmatprep.subr.bf16.mxu0 0
    %3069 = vmatpush2.bf16.msra.mxu0 0
    %3070 = vmatprep.subr.bf16.mxu0 0
    %3071 = vmatpush2.bf16.msra.mxu0 0
    %3072 = vmatprep.subr.bf16.mxu0 0
    %3073 = vmatpush2.bf16.msra.mxu0 0
    %3074 = vmatprep.subr.bf16.mxu0 0
    %3075 = vmatpush2.bf16.msra.mxu0 0
    %3076 = vmatprep.mubr.bf16.mxu0 0
    %3077 = vmatmul.mubr.bf16.gmra.mxu0 %v2842
    %v3078 = vpop.f32.mrf.mxu0
    %v3079 = vadd.f32 0.0, %v3078
    %v3080 = vpop.f32.mrf.mxu0
    %v3081 = vadd.f32 0.0, %v3080
    %v3082 = vpop.f32.mrf.mxu0
    %v3083 = vadd.f32 0.0, %v3082
    %v3084 = vpop.f32.mrf.mxu0
    %v3085 = vadd.f32 0.0, %v3084
    %3086 = vdwg.mxu0
    %3087 = vmatprep.subr.bf16.mxu0 %v1482
    %3088 = vmatpush1.bf16.msra.mxu0 %v1481
    %3089 = vmatprep.subr.bf16.mxu0 %v1478
    %3090 = vmatpush1.bf16.msra.mxu0 %v1477
    %3091 = vmatprep.subr.bf16.mxu0 %v1474
    %3092 = vmatpush1.bf16.msra.mxu0 %v1473
    %3093 = vmatprep.subr.bf16.mxu0 %v1470
    %3094 = vmatpush1.bf16.msra.mxu0 %v1469
    %3095 = vmatprep.subr.bf16.mxu0 %v1466
    %3096 = vmatpush1.bf16.msra.mxu0 %v1465
    %3097 = vmatprep.subr.bf16.mxu0 %v1462
    %3098 = vmatpush1.bf16.msra.mxu0 %v1461
    %3099 = vmatprep.subr.bf16.mxu0 %v1458
    %3100 = vmatpush1.bf16.msra.mxu0 %v1457
    %3101 = vmatprep.subr.bf16.mxu0 %v1454
    %3102 = vmatpush1.bf16.msra.mxu0 %v1453
    %3103 = vmatprep.subr.bf16.mxu0 0
    %3104 = vmatpush2.bf16.msra.mxu0 0
    %3105 = vmatprep.subr.bf16.mxu0 0
    %3106 = vmatpush2.bf16.msra.mxu0 0
    %3107 = vmatprep.subr.bf16.mxu0 0
    %3108 = vmatpush2.bf16.msra.mxu0 0
    %3109 = vmatprep.subr.bf16.mxu0 0
    %3110 = vmatpush2.bf16.msra.mxu0 0
    %3111 = vmatprep.subr.bf16.mxu0 0
    %3112 = vmatpush2.bf16.msra.mxu0 0
    %3113 = vmatprep.subr.bf16.mxu0 0
    %3114 = vmatpush2.bf16.msra.mxu0 0
    %3115 = vmatprep.subr.bf16.mxu0 0
    %3116 = vmatpush2.bf16.msra.mxu0 0
    %3117 = vmatprep.subr.bf16.mxu0 0
    %3118 = vmatpush2.bf16.msra.mxu0 0
    %3119 = vmatprep.mubr.bf16.mxu0 0
    %3120 = vmatmul.mubr.bf16.gmra.mxu0 %v3000
    %v3121 = vpop.f32.mrf.mxu0
    %v3122 = vadd.f32 %v3036, %v3121
    %v3123 = vpop.f32.mrf.mxu0
    %v3124 = vadd.f32 %v3038, %v3123
    %v3125 = vpop.f32.mrf.mxu0
    %v3126 = vadd.f32 %v3040, %v3125
    %v3127 = vpop.f32.mrf.mxu0
    %v3128 = vadd.f32 %v3042, %v3127
    %3129 = vdwg.mxu0
    %3130 = vmatprep.subr.bf16.mxu0 %v1484
    %3131 = vmatpush1.bf16.msra.mxu0 %v1483
    %3132 = vmatprep.subr.bf16.mxu0 %v1480
    %3133 = vmatpush1.bf16.msra.mxu0 %v1479
    %3134 = vmatprep.subr.bf16.mxu0 %v1476
    %3135 = vmatpush1.bf16.msra.mxu0 %v1475
    %3136 = vmatprep.subr.bf16.mxu0 %v1472
    %3137 = vmatpush1.bf16.msra.mxu0 %v1471
    %3138 = vmatprep.subr.bf16.mxu0 %v1468
    %3139 = vmatpush1.bf16.msra.mxu0 %v1467
    %3140 = vmatprep.subr.bf16.mxu0 %v1464
    %3141 = vmatpush1.bf16.msra.mxu0 %v1463
    %3142 = vmatprep.subr.bf16.mxu0 %v1460
    %3143 = vmatpush1.bf16.msra.mxu0 %v1459
    %3144 = vmatprep.subr.bf16.mxu0 %v1456
    %3145 = vmatpush1.bf16.msra.mxu0 %v1455
    %3146 = vmatprep.subr.bf16.mxu0 0
    %3147 = vmatpush2.bf16.msra.mxu0 0
    %3148 = vmatprep.subr.bf16.mxu0 0
    %3149 = vmatpush2.bf16.msra.mxu0 0
    %3150 = vmatprep.subr.bf16.mxu0 0
    %3151 = vmatpush2.bf16.msra.mxu0 0
    %3152 = vmatprep.subr.bf16.mxu0 0
    %3153 = vmatpush2.bf16.msra.mxu0 0
    %3154 = vmatprep.subr.bf16.mxu0 0
    %3155 = vmatpush2.bf16.msra.mxu0 0
    %3156 = vmatprep.subr.bf16.mxu0 0
    %3157 = vmatpush2.bf16.msra.mxu0 0
    %3158 = vmatprep.subr.bf16.mxu0 0
    %3159 = vmatpush2.bf16.msra.mxu0 0
    %3160 = vmatprep.subr.bf16.mxu0 0
    %3161 = vmatpush2.bf16.msra.mxu0 0
    %3162 = vmatprep.mubr.bf16.mxu0 0
    %3163 = vmatmul.mubr.bf16.gmra.mxu0 %v3000
    %v3164 = vpop.f32.mrf.mxu0
    %v3165 = vadd.f32 %v3079, %v3164
    %v3166 = vpop.f32.mrf.mxu0
    %v3167 = vadd.f32 %v3081, %v3166
    %v3168 = vpop.f32.mrf.mxu0
    %v3169 = vadd.f32 %v3083, %v3168
    %v3170 = vpop.f32.mrf.mxu0
    %v3171 = vadd.f32 %v3085, %v3170
    %3172 = vdwg.mxu0
    %v3173 = vadd.f32 %v3122, %v1608
    %v3174 = vadd.f32 %v3124, %v1612
    %v3175 = vadd.f32 %v3165, %v1616
    %v3176 = vadd.f32 %v3167, %v1620
    %v3177 = vadd.f32 %v3126, %v1608
    %v3178 = vadd.f32 %v3128, %v1612
    %v3179 = vadd.f32 %v3169, %v1616
    %v3180 = vadd.f32 %v3171, %v1620
    %v3181 = vxor.u32 %v3173, 2147483648
    %v3182 = vxor.u32 %v3177, 2147483648
    %v3183 = vmul.f32 %v3181, 1.442695
    %v3184 = vpow.pop %v3183
    %v3185 = vmul.f32 %v3182, 1.442695
    %v3186 = vpow.pop %v3185
    %v3187 = vadd.f32 %v3184, 1.0
    %v3188 = vadd.f32 %v3186, 1.0
    %v3189 = vrcp.pop %v3187
    %v3190 = vmul.f32 1.0, %v3189
    %v3191 = vrcp.pop %v3188
    %v3192 = vmul.f32 1.0, %v3191
    %v3193 = vxor.u32 %v3174, 2147483648
    %v3194 = vxor.u32 %v3178, 2147483648
    %v3195 = vmul.f32 %v3193, 1.442695
    %v3196 = vpow.pop %v3195
    %v3197 = vmul.f32 %v3194, 1.442695
    %v3198 = vpow.pop %v3197
    %v3199 = vadd.f32 %v3196, 1.0
    %v3200 = vadd.f32 %v3198, 1.0
    %v3201 = vrcp.pop %v3199
    %v3202 = vmul.f32 1.0, %v3201
    %v3203 = vrcp.pop %v3200
    %v3204 = vmul.f32 1.0, %v3203
    %v3205 = vtanh.pop %v3175
    %v3206 = vtanh.pop %v3179
    %v3207 = vxor.u32 %v3176, 2147483648
    %v3208 = vxor.u32 %v3180, 2147483648
    %v3209 = vmul.f32 %v3207, 1.442695
    %v3210 = vpow.pop %v3209
    %v3211 = vmul.f32 %v3208, 1.442695
    %v3212 = vpow.pop %v3211
    %v3213 = vadd.f32 %v3210, 1.0
    %v3214 = vadd.f32 %v3212, 1.0
    %v3215 = vrcp.pop %v3213
    %v3216 = vmul.f32 1.0, %v3215
    %v3217 = vrcp.pop %v3214
    %v3218 = vmul.f32 1.0, %v3217
    %v3219 = vmul.f32 %v3202, %v2836
    %v3220 = vmul.f32 %v3204, %v2837
    %v3221 = vmul.f32 %v3190, %v3205
    %v3222 = vmul.f32 %v3192, %v3206
    %v3223 = vadd.f32 %v3219, %v3221
    %v3224 = vadd.f32 %v3220, %v3222
    %v3225 = vtanh.pop %v3223
    %v3226 = vtanh.pop %v3224
    %v3227 = vmul.f32 %v3216, %v3225
    %v3228 = vmul.f32 %v3218, %v3226
    %v3229 = vpack.c.bf16 %v3228, %v3227
    %s3230 = smul.u32 10, 4
    %s3231 = smul.addr %s3230, 4
    %s3232 = scalar_lea.vmem [#allocation2], %s3231
    %v3233 = vld [vmem:[%s3232] sm:$0xff]
    %v3234 = vld [vmem:[%s3232 + $0x8] sm:$0xff]
    %v3235 = vld [vmem:[%s3232 + $0x10] sm:$0xff]
    %v3236 = vld [vmem:[%s3232 + $0x18] sm:$0xff]
    %v3237 = vunpack.c.l.bf16 %v3233
    %v3238 = vunpack.c.h.bf16 %v3233
    %v3239 = vunpack.c.l.bf16 %v3234
    %v3240 = vunpack.c.h.bf16 %v3234
    %v3241 = vunpack.c.l.bf16 %v3235
    %v3242 = vunpack.c.h.bf16 %v3235
    %v3243 = vunpack.c.l.bf16 %v3236
    %v3244 = vunpack.c.h.bf16 %v3236
    %3245 = vmatprep.subr.bf16.mxu0 %v863
    %3246 = vmatpush1.bf16.msra.mxu0 %v862
    %3247 = vmatprep.subr.bf16.mxu0 %v859
    %3248 = vmatpush1.bf16.msra.mxu0 %v858
    %3249 = vmatprep.subr.bf16.mxu0 %v855
    %3250 = vmatpush1.bf16.msra.mxu0 %v854
    %3251 = vmatprep.subr.bf16.mxu0 %v851
    %3252 = vmatpush1.bf16.msra.mxu0 %v850
    %3253 = vmatprep.subr.bf16.mxu0 %v847
    %3254 = vmatpush1.bf16.msra.mxu0 %v846
    %3255 = vmatprep.subr.bf16.mxu0 %v843
    %3256 = vmatpush1.bf16.msra.mxu0 %v842
    %3257 = vmatprep.subr.bf16.mxu0 %v839
    %3258 = vmatpush1.bf16.msra.mxu0 %v838
    %3259 = vmatprep.subr.bf16.mxu0 %v835
    %3260 = vmatpush1.bf16.msra.mxu0 %v834
    %3261 = vmatprep.subr.bf16.mxu0 0
    %3262 = vmatpush2.bf16.msra.mxu0 0
    %3263 = vmatprep.subr.bf16.mxu0 0
    %3264 = vmatpush2.bf16.msra.mxu0 0
    %3265 = vmatprep.subr.bf16.mxu0 0
    %3266 = vmatpush2.bf16.msra.mxu0 0
    %3267 = vmatprep.subr.bf16.mxu0 0
    %3268 = vmatpush2.bf16.msra.mxu0 0
    %3269 = vmatprep.subr.bf16.mxu0 0
    %3270 = vmatpush2.bf16.msra.mxu0 0
    %3271 = vmatprep.subr.bf16.mxu0 0
    %3272 = vmatpush2.bf16.msra.mxu0 0
    %3273 = vmatprep.subr.bf16.mxu0 0
    %3274 = vmatpush2.bf16.msra.mxu0 0
    %3275 = vmatprep.subr.bf16.mxu0 0
    %3276 = vmatpush2.bf16.msra.mxu0 0
    %3277 = vmatprep.mubr.bf16.mxu0 0
    %3278 = vmatmul.mubr.bf16.gmra.mxu0 %v3000
    %v3279 = vpop.f32.mrf.mxu0
    %v3280 = vadd.f32 0.0, %v3279
    %v3281 = vpop.f32.mrf.mxu0
    %v3282 = vadd.f32 0.0, %v3281
    %v3283 = vpop.f32.mrf.mxu0
    %v3284 = vadd.f32 0.0, %v3283
    %v3285 = vpop.f32.mrf.mxu0
    %v3286 = vadd.f32 0.0, %v3285
    %3287 = vdwg.mxu0
    %3288 = vmatprep.subr.bf16.mxu0 %v865
    %3289 = vmatpush1.bf16.msra.mxu0 %v864
    %3290 = vmatprep.subr.bf16.mxu0 %v861
    %3291 = vmatpush1.bf16.msra.mxu0 %v860
    %3292 = vmatprep.subr.bf16.mxu0 %v857
    %3293 = vmatpush1.bf16.msra.mxu0 %v856
    %3294 = vmatprep.subr.bf16.mxu0 %v853
    %3295 = vmatpush1.bf16.msra.mxu0 %v852
    %3296 = vmatprep.subr.bf16.mxu0 %v849
    %3297 = vmatpush1.bf16.msra.mxu0 %v848
    %3298 = vmatprep.subr.bf16.mxu0 %v845
    %3299 = vmatpush1.bf16.msra.mxu0 %v844
    %3300 = vmatprep.subr.bf16.mxu0 %v841
    %3301 = vmatpush1.bf16.msra.mxu0 %v840
    %3302 = vmatprep.subr.bf16.mxu0 %v837
    %3303 = vmatpush1.bf16.msra.mxu0 %v836
    %3304 = vmatprep.subr.bf16.mxu0 0
    %3305 = vmatpush2.bf16.msra.mxu0 0
    %3306 = vmatprep.subr.bf16.mxu0 0
    %3307 = vmatpush2.bf16.msra.mxu0 0
    %3308 = vmatprep.subr.bf16.mxu0 0
    %3309 = vmatpush2.bf16.msra.mxu0 0
    %3310 = vmatprep.subr.bf16.mxu0 0
    %3311 = vmatpush2.bf16.msra.mxu0 0
    %3312 = vmatprep.subr.bf16.mxu0 0
    %3313 = vmatpush2.bf16.msra.mxu0 0
    %3314 = vmatprep.subr.bf16.mxu0 0
    %3315 = vmatpush2.bf16.msra.mxu0 0
    %3316 = vmatprep.subr.bf16.mxu0 0
    %3317 = vmatpush2.bf16.msra.mxu0 0
    %3318 = vmatprep.subr.bf16.mxu0 0
    %3319 = vmatpush2.bf16.msra.mxu0 0
    %3320 = vmatprep.mubr.bf16.mxu0 0
    %3321 = vmatmul.mubr.bf16.gmra.mxu0 %v3000
    %v3322 = vpop.f32.mrf.mxu0
    %v3323 = vadd.f32 0.0, %v3322
    %v3324 = vpop.f32.mrf.mxu0
    %v3325 = vadd.f32 0.0, %v3324
    %v3326 = vpop.f32.mrf.mxu0
    %v3327 = vadd.f32 0.0, %v3326
    %v3328 = vpop.f32.mrf.mxu0
    %v3329 = vadd.f32 0.0, %v3328
    %3330 = vdwg.mxu0
    %v3331 = vadd.f32 %v3237, %v3280
    %v3332 = vadd.f32 %v3238, %v3282
    %v3333 = vadd.f32 %v3239, %v3323
    %v3334 = vadd.f32 %v3240, %v3325
    %v3335 = vadd.f32 %v3241, %v3284
    %v3336 = vadd.f32 %v3242, %v3286
    %v3337 = vadd.f32 %v3243, %v3327
    %v3338 = vadd.f32 %v3244, %v3329
    %v3339 = vxor.u32 %v3331, 2147483648
    %v3340 = vxor.u32 %v3335, 2147483648
    %v3341 = vmul.f32 %v3339, 1.442695
    %v3342 = vpow.pop %v3341
    %v3343 = vmul.f32 %v3340, 1.442695
    %v3344 = vpow.pop %v3343
    %v3345 = vadd.f32 %v3342, 1.0
    %v3346 = vadd.f32 %v3344, 1.0
    %v3347 = vrcp.pop %v3345
    %v3348 = vmul.f32 1.0, %v3347
    %v3349 = vrcp.pop %v3346
    %v3350 = vmul.f32 1.0, %v3349
    %v3351 = vxor.u32 %v3332, 2147483648
    %v3352 = vxor.u32 %v3336, 2147483648
    %v3353 = vmul.f32 %v3351, 1.442695
    %v3354 = vpow.pop %v3353
    %v3355 = vmul.f32 %v3352, 1.442695
    %v3356 = vpow.pop %v3355
    %v3357 = vadd.f32 %v3354, 1.0
    %v3358 = vadd.f32 %v3356, 1.0
    %v3359 = vrcp.pop %v3357
    %v3360 = vmul.f32 1.0, %v3359
    %v3361 = vrcp.pop %v3358
    %v3362 = vmul.f32 1.0, %v3361
    %v3363 = vtanh.pop %v3333
    %v3364 = vtanh.pop %v3337
    %v3365 = vxor.u32 %v3334, 2147483648
    %v3366 = vxor.u32 %v3338, 2147483648
    %v3367 = vmul.f32 %v3365, 1.442695
    %v3368 = vpow.pop %v3367
    %v3369 = vmul.f32 %v3366, 1.442695
    %v3370 = vpow.pop %v3369
    %v3371 = vadd.f32 %v3368, 1.0
    %v3372 = vadd.f32 %v3370, 1.0
    %v3373 = vrcp.pop %v3371
    %v3374 = vmul.f32 1.0, %v3373
    %v3375 = vrcp.pop %v3372
    %v3376 = vmul.f32 1.0, %v3375
    %v3377 = vmul.f32 %v3360, %v2994
    %v3378 = vmul.f32 %v3362, %v2995
    %v3379 = vmul.f32 %v3348, %v3363
    %v3380 = vmul.f32 %v3350, %v3364
    %v3381 = vadd.f32 %v3377, %v3379
    %v3382 = vadd.f32 %v3378, %v3380
    %v3383 = vtanh.pop %v3381
    %v3384 = vtanh.pop %v3382
    %v3385 = vmul.f32 %v3374, %v3383
    %v3386 = vmul.f32 %v3376, %v3384
    %v3387 = vpack.c.bf16 %v3386, %v3385
    %3388 = vmatprep.subr.bf16.mxu0 %v1236
    %3389 = vmatpush1.bf16.msra.mxu0 %v1235
    %3390 = vmatprep.subr.bf16.mxu0 %v1232
    %3391 = vmatpush1.bf16.msra.mxu0 %v1231
    %3392 = vmatprep.subr.bf16.mxu0 %v1228
    %3393 = vmatpush1.bf16.msra.mxu0 %v1227
    %3394 = vmatprep.subr.bf16.mxu0 %v1224
    %3395 = vmatpush1.bf16.msra.mxu0 %v1223
    %3396 = vmatprep.subr.bf16.mxu0 %v1220
    %3397 = vmatpush1.bf16.msra.mxu0 %v1219
    %3398 = vmatprep.subr.bf16.mxu0 %v1216
    %3399 = vmatpush1.bf16.msra.mxu0 %v1215
    %3400 = vmatprep.subr.bf16.mxu0 %v1212
    %3401 = vmatpush1.bf16.msra.mxu0 %v1211
    %3402 = vmatprep.subr.bf16.mxu0 %v1208
    %3403 = vmatpush1.bf16.msra.mxu0 %v1207
    %3404 = vmatprep.subr.bf16.mxu0 0
    %3405 = vmatpush2.bf16.msra.mxu0 0
    %3406 = vmatprep.subr.bf16.mxu0 0
    %3407 = vmatpush2.bf16.msra.mxu0 0
    %3408 = vmatprep.subr.bf16.mxu0 0
    %3409 = vmatpush2.bf16.msra.mxu0 0
    %3410 = vmatprep.subr.bf16.mxu0 0
    %3411 = vmatpush2.bf16.msra.mxu0 0
    %3412 = vmatprep.subr.bf16.mxu0 0
    %3413 = vmatpush2.bf16.msra.mxu0 0
    %3414 = vmatprep.subr.bf16.mxu0 0
    %3415 = vmatpush2.bf16.msra.mxu0 0
    %3416 = vmatprep.subr.bf16.mxu0 0
    %3417 = vmatpush2.bf16.msra.mxu0 0
    %3418 = vmatprep.subr.bf16.mxu0 0
    %3419 = vmatpush2.bf16.msra.mxu0 0
    %3420 = vmatprep.mubr.bf16.mxu0 0
    %3421 = vmatmul.mubr.bf16.gmra.mxu0 %v3229
    %v3422 = vpop.f32.mrf.mxu0
    %v3423 = vadd.f32 0.0, %v3422
    %v3424 = vpop.f32.mrf.mxu0
    %v3425 = vadd.f32 0.0, %v3424
    %v3426 = vpop.f32.mrf.mxu0
    %v3427 = vadd.f32 0.0, %v3426
    %v3428 = vpop.f32.mrf.mxu0
    %v3429 = vadd.f32 0.0, %v3428
    %3430 = vdwg.mxu0
    %3431 = vmatprep.subr.bf16.mxu0 %v1238
    %3432 = vmatpush1.bf16.msra.mxu0 %v1237
    %3433 = vmatprep.subr.bf16.mxu0 %v1234
    %3434 = vmatpush1.bf16.msra.mxu0 %v1233
    %3435 = vmatprep.subr.bf16.mxu0 %v1230
    %3436 = vmatpush1.bf16.msra.mxu0 %v1229
    %3437 = vmatprep.subr.bf16.mxu0 %v1226
    %3438 = vmatpush1.bf16.msra.mxu0 %v1225
    %3439 = vmatprep.subr.bf16.mxu0 %v1222
    %3440 = vmatpush1.bf16.msra.mxu0 %v1221
    %3441 = vmatprep.subr.bf16.mxu0 %v1218
    %3442 = vmatpush1.bf16.msra.mxu0 %v1217
    %3443 = vmatprep.subr.bf16.mxu0 %v1214
    %3444 = vmatpush1.bf16.msra.mxu0 %v1213
    %3445 = vmatprep.subr.bf16.mxu0 %v1210
    %3446 = vmatpush1.bf16.msra.mxu0 %v1209
    %3447 = vmatprep.subr.bf16.mxu0 0
    %3448 = vmatpush2.bf16.msra.mxu0 0
    %3449 = vmatprep.subr.bf16.mxu0 0
    %3450 = vmatpush2.bf16.msra.mxu0 0
    %3451 = vmatprep.subr.bf16.mxu0 0
    %3452 = vmatpush2.bf16.msra.mxu0 0
    %3453 = vmatprep.subr.bf16.mxu0 0
    %3454 = vmatpush2.bf16.msra.mxu0 0
    %3455 = vmatprep.subr.bf16.mxu0 0
    %3456 = vmatpush2.bf16.msra.mxu0 0
    %3457 = vmatprep.subr.bf16.mxu0 0
    %3458 = vmatpush2.bf16.msra.mxu0 0
    %3459 = vmatprep.subr.bf16.mxu0 0
    %3460 = vmatpush2.bf16.msra.mxu0 0
    %3461 = vmatprep.subr.bf16.mxu0 0
    %3462 = vmatpush2.bf16.msra.mxu0 0
    %3463 = vmatprep.mubr.bf16.mxu0 0
    %3464 = vmatmul.mubr.bf16.gmra.mxu0 %v3229
    %v3465 = vpop.f32.mrf.mxu0
    %v3466 = vadd.f32 0.0, %v3465
    %v3467 = vpop.f32.mrf.mxu0
    %v3468 = vadd.f32 0.0, %v3467
    %v3469 = vpop.f32.mrf.mxu0
    %v3470 = vadd.f32 0.0, %v3469
    %v3471 = vpop.f32.mrf.mxu0
    %v3472 = vadd.f32 0.0, %v3471
    %3473 = vdwg.mxu0
    %3474 = vmatprep.subr.bf16.mxu0 %v1482
    %3475 = vmatpush1.bf16.msra.mxu0 %v1481
    %3476 = vmatprep.subr.bf16.mxu0 %v1478
    %3477 = vmatpush1.bf16.msra.mxu0 %v1477
    %3478 = vmatprep.subr.bf16.mxu0 %v1474
    %3479 = vmatpush1.bf16.msra.mxu0 %v1473
    %3480 = vmatprep.subr.bf16.mxu0 %v1470
    %3481 = vmatpush1.bf16.msra.mxu0 %v1469
    %3482 = vmatprep.subr.bf16.mxu0 %v1466
    %3483 = vmatpush1.bf16.msra.mxu0 %v1465
    %3484 = vmatprep.subr.bf16.mxu0 %v1462
    %3485 = vmatpush1.bf16.msra.mxu0 %v1461
    %3486 = vmatprep.subr.bf16.mxu0 %v1458
    %3487 = vmatpush1.bf16.msra.mxu0 %v1457
    %3488 = vmatprep.subr.bf16.mxu0 %v1454
    %3489 = vmatpush1.bf16.msra.mxu0 %v1453
    %3490 = vmatprep.subr.bf16.mxu0 0
    %3491 = vmatpush2.bf16.msra.mxu0 0
    %3492 = vmatprep.subr.bf16.mxu0 0
    %3493 = vmatpush2.bf16.msra.mxu0 0
    %3494 = vmatprep.subr.bf16.mxu0 0
    %3495 = vmatpush2.bf16.msra.mxu0 0
    %3496 = vmatprep.subr.bf16.mxu0 0
    %3497 = vmatpush2.bf16.msra.mxu0 0
    %3498 = vmatprep.subr.bf16.mxu0 0
    %3499 = vmatpush2.bf16.msra.mxu0 0
    %3500 = vmatprep.subr.bf16.mxu0 0
    %3501 = vmatpush2.bf16.msra.mxu0 0
    %3502 = vmatprep.subr.bf16.mxu0 0
    %3503 = vmatpush2.bf16.msra.mxu0 0
    %3504 = vmatprep.subr.bf16.mxu0 0
    %3505 = vmatpush2.bf16.msra.mxu0 0
    %3506 = vmatprep.mubr.bf16.mxu0 0
    %3507 = vmatmul.mubr.bf16.gmra.mxu0 %v3387
    %v3508 = vpop.f32.mrf.mxu0
    %v3509 = vadd.f32 %v3423, %v3508
    %v3510 = vpop.f32.mrf.mxu0
    %v3511 = vadd.f32 %v3425, %v3510
    %v3512 = vpop.f32.mrf.mxu0
    %v3513 = vadd.f32 %v3427, %v3512
    %v3514 = vpop.f32.mrf.mxu0
    %v3515 = vadd.f32 %v3429, %v3514
    %3516 = vdwg.mxu0
    %3517 = vmatprep.subr.bf16.mxu0 %v1484
    %3518 = vmatpush1.bf16.msra.mxu0 %v1483
    %3519 = vmatprep.subr.bf16.mxu0 %v1480
    %3520 = vmatpush1.bf16.msra.mxu0 %v1479
    %3521 = vmatprep.subr.bf16.mxu0 %v1476
    %3522 = vmatpush1.bf16.msra.mxu0 %v1475
    %3523 = vmatprep.subr.bf16.mxu0 %v1472
    %3524 = vmatpush1.bf16.msra.mxu0 %v1471
    %3525 = vmatprep.subr.bf16.mxu0 %v1468
    %3526 = vmatpush1.bf16.msra.mxu0 %v1467
    %3527 = vmatprep.subr.bf16.mxu0 %v1464
    %3528 = vmatpush1.bf16.msra.mxu0 %v1463
    %3529 = vmatprep.subr.bf16.mxu0 %v1460
    %3530 = vmatpush1.bf16.msra.mxu0 %v1459
    %3531 = vmatprep.subr.bf16.mxu0 %v1456
    %3532 = vmatpush1.bf16.msra.mxu0 %v1455
    %3533 = vmatprep.subr.bf16.mxu0 0
    %3534 = vmatpush2.bf16.msra.mxu0 0
    %3535 = vmatprep.subr.bf16.mxu0 0
    %3536 = vmatpush2.bf16.msra.mxu0 0
    %3537 = vmatprep.subr.bf16.mxu0 0
    %3538 = vmatpush2.bf16.msra.mxu0 0
    %3539 = vmatprep.subr.bf16.mxu0 0
    %3540 = vmatpush2.bf16.msra.mxu0 0
    %3541 = vmatprep.subr.bf16.mxu0 0
    %3542 = vmatpush2.bf16.msra.mxu0 0
    %3543 = vmatprep.subr.bf16.mxu0 0
    %3544 = vmatpush2.bf16.msra.mxu0 0
    %3545 = vmatprep.subr.bf16.mxu0 0
    %3546 = vmatpush2.bf16.msra.mxu0 0
    %3547 = vmatprep.subr.bf16.mxu0 0
    %3548 = vmatpush2.bf16.msra.mxu0 0
    %3549 = vmatprep.mubr.bf16.mxu0 0
    %3550 = vmatmul.mubr.bf16.gmra.mxu0 %v3387
    %v3551 = vpop.f32.mrf.mxu0
    %v3552 = vadd.f32 %v3466, %v3551
    %v3553 = vpop.f32.mrf.mxu0
    %v3554 = vadd.f32 %v3468, %v3553
    %v3555 = vpop.f32.mrf.mxu0
    %v3556 = vadd.f32 %v3470, %v3555
    %v3557 = vpop.f32.mrf.mxu0
    %v3558 = vadd.f32 %v3472, %v3557
    %3559 = vdwg.mxu0
    %v3560 = vadd.f32 %v3509, %v1608
    %v3561 = vadd.f32 %v3511, %v1612
    %v3562 = vadd.f32 %v3552, %v1616
    %v3563 = vadd.f32 %v3554, %v1620
    %v3564 = vadd.f32 %v3513, %v1608
    %v3565 = vadd.f32 %v3515, %v1612
    %v3566 = vadd.f32 %v3556, %v1616
    %v3567 = vadd.f32 %v3558, %v1620
    %v3568 = vxor.u32 %v3560, 2147483648
    %v3569 = vxor.u32 %v3564, 2147483648
    %v3570 = vmul.f32 %v3568, 1.442695
    %v3571 = vpow.pop %v3570
    %v3572 = vmul.f32 %v3569, 1.442695
    %v3573 = vpow.pop %v3572
    %v3574 = vadd.f32 %v3571, 1.0
    %v3575 = vadd.f32 %v3573, 1.0
    %v3576 = vrcp.pop %v3574
    %v3577 = vmul.f32 1.0, %v3576
    %v3578 = vrcp.pop %v3575
    %v3579 = vmul.f32 1.0, %v3578
    %v3580 = vxor.u32 %v3561, 2147483648
    %v3581 = vxor.u32 %v3565, 2147483648
    %v3582 = vmul.f32 %v3580, 1.442695
    %v3583 = vpow.pop %v3582
    %v3584 = vmul.f32 %v3581, 1.442695
    %v3585 = vpow.pop %v3584
    %v3586 = vadd.f32 %v3583, 1.0
    %v3587 = vadd.f32 %v3585, 1.0
    %v3588 = vrcp.pop %v3586
    %v3589 = vmul.f32 1.0, %v3588
    %v3590 = vrcp.pop %v3587
    %v3591 = vmul.f32 1.0, %v3590
    %v3592 = vtanh.pop %v3562
    %v3593 = vtanh.pop %v3566
    %v3594 = vxor.u32 %v3563, 2147483648
    %v3595 = vxor.u32 %v3567, 2147483648
    %v3596 = vmul.f32 %v3594, 1.442695
    %v3597 = vpow.pop %v3596
    %v3598 = vmul.f32 %v3595, 1.442695
    %v3599 = vpow.pop %v3598
    %v3600 = vadd.f32 %v3597, 1.0
    %v3601 = vadd.f32 %v3599, 1.0
    %v3602 = vrcp.pop %v3600
    %v3603 = vmul.f32 1.0, %v3602
    %v3604 = vrcp.pop %v3601
    %v3605 = vmul.f32 1.0, %v3604
    %v3606 = vmul.f32 %v3589, %v3223
    %v3607 = vmul.f32 %v3591, %v3224
    %v3608 = vmul.f32 %v3577, %v3592
    %v3609 = vmul.f32 %v3579, %v3593
    %v3610 = vadd.f32 %v3606, %v3608
    %v3611 = vadd.f32 %v3607, %v3609
    %v3612 = vtanh.pop %v3610
    %v3613 = vtanh.pop %v3611
    %v3614 = vmul.f32 %v3603, %v3612
    %v3615 = vmul.f32 %v3605, %v3613
    %v3616 = vpack.c.bf16 %v3615, %v3614
    %s3617 = smul.u32 12, 4
    %s3618 = smul.addr %s3617, 4
    %s3619 = scalar_lea.vmem [#allocation2], %s3618
    %v3620 = vld [vmem:[%s3619] sm:$0xff]
    %v3621 = vld [vmem:[%s3619 + $0x8] sm:$0xff]
    %v3622 = vld [vmem:[%s3619 + $0x10] sm:$0xff]
    %v3623 = vld [vmem:[%s3619 + $0x18] sm:$0xff]
    %v3624 = vunpack.c.l.bf16 %v3620
    %v3625 = vunpack.c.h.bf16 %v3620
    %v3626 = vunpack.c.l.bf16 %v3621
    %v3627 = vunpack.c.h.bf16 %v3621
    %v3628 = vunpack.c.l.bf16 %v3622
    %v3629 = vunpack.c.h.bf16 %v3622
    %v3630 = vunpack.c.l.bf16 %v3623
    %v3631 = vunpack.c.h.bf16 %v3623
    %3632 = vmatprep.subr.bf16.mxu0 %v863
    %3633 = vmatpush1.bf16.msra.mxu0 %v862
    %3634 = vmatprep.subr.bf16.mxu0 %v859
    %3635 = vmatpush1.bf16.msra.mxu0 %v858
    %3636 = vmatprep.subr.bf16.mxu0 %v855
    %3637 = vmatpush1.bf16.msra.mxu0 %v854
    %3638 = vmatprep.subr.bf16.mxu0 %v851
    %3639 = vmatpush1.bf16.msra.mxu0 %v850
    %3640 = vmatprep.subr.bf16.mxu0 %v847
    %3641 = vmatpush1.bf16.msra.mxu0 %v846
    %3642 = vmatprep.subr.bf16.mxu0 %v843
    %3643 = vmatpush1.bf16.msra.mxu0 %v842
    %3644 = vmatprep.subr.bf16.mxu0 %v839
    %3645 = vmatpush1.bf16.msra.mxu0 %v838
    %3646 = vmatprep.subr.bf16.mxu0 %v835
    %3647 = vmatpush1.bf16.msra.mxu0 %v834
    %3648 = vmatprep.subr.bf16.mxu0 0
    %3649 = vmatpush2.bf16.msra.mxu0 0
    %3650 = vmatprep.subr.bf16.mxu0 0
    %3651 = vmatpush2.bf16.msra.mxu0 0
    %3652 = vmatprep.subr.bf16.mxu0 0
    %3653 = vmatpush2.bf16.msra.mxu0 0
    %3654 = vmatprep.subr.bf16.mxu0 0
    %3655 = vmatpush2.bf16.msra.mxu0 0
    %3656 = vmatprep.subr.bf16.mxu0 0
    %3657 = vmatpush2.bf16.msra.mxu0 0
    %3658 = vmatprep.subr.bf16.mxu0 0
    %3659 = vmatpush2.bf16.msra.mxu0 0
    %3660 = vmatprep.subr.bf16.mxu0 0
    %3661 = vmatpush2.bf16.msra.mxu0 0
    %3662 = vmatprep.subr.bf16.mxu0 0
    %3663 = vmatpush2.bf16.msra.mxu0 0
    %3664 = vmatprep.mubr.bf16.mxu0 0
    %3665 = vmatmul.mubr.bf16.gmra.mxu0 %v3387
    %v3666 = vpop.f32.mrf.mxu0
    %v3667 = vadd.f32 0.0, %v3666
    %v3668 = vpop.f32.mrf.mxu0
    %v3669 = vadd.f32 0.0, %v3668
    %v3670 = vpop.f32.mrf.mxu0
    %v3671 = vadd.f32 0.0, %v3670
    %v3672 = vpop.f32.mrf.mxu0
    %v3673 = vadd.f32 0.0, %v3672
    %3674 = vdwg.mxu0
    %3675 = vmatprep.subr.bf16.mxu0 %v865
    %3676 = vmatpush1.bf16.msra.mxu0 %v864
    %3677 = vmatprep.subr.bf16.mxu0 %v861
    %3678 = vmatpush1.bf16.msra.mxu0 %v860
    %3679 = vmatprep.subr.bf16.mxu0 %v857
    %3680 = vmatpush1.bf16.msra.mxu0 %v856
    %3681 = vmatprep.subr.bf16.mxu0 %v853
    %3682 = vmatpush1.bf16.msra.mxu0 %v852
    %3683 = vmatprep.subr.bf16.mxu0 %v849
    %3684 = vmatpush1.bf16.msra.mxu0 %v848
    %3685 = vmatprep.subr.bf16.mxu0 %v845
    %3686 = vmatpush1.bf16.msra.mxu0 %v844
    %3687 = vmatprep.subr.bf16.mxu0 %v841
    %3688 = vmatpush1.bf16.msra.mxu0 %v840
    %3689 = vmatprep.subr.bf16.mxu0 %v837
    %3690 = vmatpush1.bf16.msra.mxu0 %v836
    %3691 = vmatprep.subr.bf16.mxu0 0
    %3692 = vmatpush2.bf16.msra.mxu0 0
    %3693 = vmatprep.subr.bf16.mxu0 0
    %3694 = vmatpush2.bf16.msra.mxu0 0
    %3695 = vmatprep.subr.bf16.mxu0 0
    %3696 = vmatpush2.bf16.msra.mxu0 0
    %3697 = vmatprep.subr.bf16.mxu0 0
    %3698 = vmatpush2.bf16.msra.mxu0 0
    %3699 = vmatprep.subr.bf16.mxu0 0
    %3700 = vmatpush2.bf16.msra.mxu0 0
    %3701 = vmatprep.subr.bf16.mxu0 0
    %3702 = vmatpush2.bf16.msra.mxu0 0
    %3703 = vmatprep.subr.bf16.mxu0 0
    %3704 = vmatpush2.bf16.msra.mxu0 0
    %3705 = vmatprep.subr.bf16.mxu0 0
    %3706 = vmatpush2.bf16.msra.mxu0 0
    %3707 = vmatprep.mubr.bf16.mxu0 0
    %3708 = vmatmul.mubr.bf16.gmra.mxu0 %v3387
    %v3709 = vpop.f32.mrf.mxu0
    %v3710 = vadd.f32 0.0, %v3709
    %v3711 = vpop.f32.mrf.mxu0
    %v3712 = vadd.f32 0.0, %v3711
    %v3713 = vpop.f32.mrf.mxu0
    %v3714 = vadd.f32 0.0, %v3713
    %v3715 = vpop.f32.mrf.mxu0
    %v3716 = vadd.f32 0.0, %v3715
    %3717 = vdwg.mxu0
    %v3718 = vadd.f32 %v3624, %v3667
    %v3719 = vadd.f32 %v3625, %v3669
    %v3720 = vadd.f32 %v3626, %v3710
    %v3721 = vadd.f32 %v3627, %v3712
    %v3722 = vadd.f32 %v3628, %v3671
    %v3723 = vadd.f32 %v3629, %v3673
    %v3724 = vadd.f32 %v3630, %v3714
    %v3725 = vadd.f32 %v3631, %v3716
    %v3726 = vxor.u32 %v3718, 2147483648
    %v3727 = vxor.u32 %v3722, 2147483648
    %v3728 = vmul.f32 %v3726, 1.442695
    %v3729 = vpow.pop %v3728
    %v3730 = vmul.f32 %v3727, 1.442695
    %v3731 = vpow.pop %v3730
    %v3732 = vadd.f32 %v3729, 1.0
    %v3733 = vadd.f32 %v3731, 1.0
    %v3734 = vrcp.pop %v3732
    %v3735 = vmul.f32 1.0, %v3734
    %v3736 = vrcp.pop %v3733
    %v3737 = vmul.f32 1.0, %v3736
    %v3738 = vxor.u32 %v3719, 2147483648
    %v3739 = vxor.u32 %v3723, 2147483648
    %v3740 = vmul.f32 %v3738, 1.442695
    %v3741 = vpow.pop %v3740
    %v3742 = vmul.f32 %v3739, 1.442695
    %v3743 = vpow.pop %v3742
    %v3744 = vadd.f32 %v3741, 1.0
    %v3745 = vadd.f32 %v3743, 1.0
    %v3746 = vrcp.pop %v3744
    %v3747 = vmul.f32 1.0, %v3746
    %v3748 = vrcp.pop %v3745
    %v3749 = vmul.f32 1.0, %v3748
    %v3750 = vtanh.pop %v3720
    %v3751 = vtanh.pop %v3724
    %v3752 = vxor.u32 %v3721, 2147483648
    %v3753 = vxor.u32 %v3725, 2147483648
    %v3754 = vmul.f32 %v3752, 1.442695
    %v3755 = vpow.pop %v3754
    %v3756 = vmul.f32 %v3753, 1.442695
    %v3757 = vpow.pop %v3756
    %v3758 = vadd.f32 %v3755, 1.0
    %v3759 = vadd.f32 %v3757, 1.0
    %v3760 = vrcp.pop %v3758
    %v3761 = vmul.f32 1.0, %v3760
    %v3762 = vrcp.pop %v3759
    %v3763 = vmul.f32 1.0, %v3762
    %v3764 = vmul.f32 %v3747, %v3381
    %v3765 = vmul.f32 %v3749, %v3382
    %v3766 = vmul.f32 %v3735, %v3750
    %v3767 = vmul.f32 %v3737, %v3751
    %v3768 = vadd.f32 %v3764, %v3766
    %v3769 = vadd.f32 %v3765, %v3767
    %v3770 = vtanh.pop %v3768
    %v3771 = vtanh.pop %v3769
    %v3772 = vmul.f32 %v3761, %v3770
    %v3773 = vmul.f32 %v3763, %v3771
    %v3774 = vpack.c.bf16 %v3773, %v3772
    %3775 = vmatprep.subr.bf16.mxu0 %v1236
    %3776 = vmatpush1.bf16.msra.mxu0 %v1235
    %3777 = vmatprep.subr.bf16.mxu0 %v1232
    %3778 = vmatpush1.bf16.msra.mxu0 %v1231
    %3779 = vmatprep.subr.bf16.mxu0 %v1228
    %3780 = vmatpush1.bf16.msra.mxu0 %v1227
    %3781 = vmatprep.subr.bf16.mxu0 %v1224
    %3782 = vmatpush1.bf16.msra.mxu0 %v1223
    %3783 = vmatprep.subr.bf16.mxu0 %v1220
    %3784 = vmatpush1.bf16.msra.mxu0 %v1219
    %3785 = vmatprep.subr.bf16.mxu0 %v1216
    %3786 = vmatpush1.bf16.msra.mxu0 %v1215
    %3787 = vmatprep.subr.bf16.mxu0 %v1212
    %3788 = vmatpush1.bf16.msra.mxu0 %v1211
    %3789 = vmatprep.subr.bf16.mxu0 %v1208
    %3790 = vmatpush1.bf16.msra.mxu0 %v1207
    %3791 = vmatprep.subr.bf16.mxu0 0
    %3792 = vmatpush2.bf16.msra.mxu0 0
    %3793 = vmatprep.subr.bf16.mxu0 0
    %3794 = vmatpush2.bf16.msra.mxu0 0
    %3795 = vmatprep.subr.bf16.mxu0 0
    %3796 = vmatpush2.bf16.msra.mxu0 0
    %3797 = vmatprep.subr.bf16.mxu0 0
    %3798 = vmatpush2.bf16.msra.mxu0 0
    %3799 = vmatprep.subr.bf16.mxu0 0
    %3800 = vmatpush2.bf16.msra.mxu0 0
    %3801 = vmatprep.subr.bf16.mxu0 0
    %3802 = vmatpush2.bf16.msra.mxu0 0
    %3803 = vmatprep.subr.bf16.mxu0 0
    %3804 = vmatpush2.bf16.msra.mxu0 0
    %3805 = vmatprep.subr.bf16.mxu0 0
    %3806 = vmatpush2.bf16.msra.mxu0 0
    %3807 = vmatprep.mubr.bf16.mxu0 0
    %3808 = vmatmul.mubr.bf16.gmra.mxu0 %v3616
    %v3809 = vpop.f32.mrf.mxu0
    %v3810 = vadd.f32 0.0, %v3809
    %v3811 = vpop.f32.mrf.mxu0
    %v3812 = vadd.f32 0.0, %v3811
    %v3813 = vpop.f32.mrf.mxu0
    %v3814 = vadd.f32 0.0, %v3813
    %v3815 = vpop.f32.mrf.mxu0
    %v3816 = vadd.f32 0.0, %v3815
    %3817 = vdwg.mxu0
    %3818 = vmatprep.subr.bf16.mxu0 %v1238
    %3819 = vmatpush1.bf16.msra.mxu0 %v1237
    %3820 = vmatprep.subr.bf16.mxu0 %v1234
    %3821 = vmatpush1.bf16.msra.mxu0 %v1233
    %3822 = vmatprep.subr.bf16.mxu0 %v1230
    %3823 = vmatpush1.bf16.msra.mxu0 %v1229
    %3824 = vmatprep.subr.bf16.mxu0 %v1226
    %3825 = vmatpush1.bf16.msra.mxu0 %v1225
    %3826 = vmatprep.subr.bf16.mxu0 %v1222
    %3827 = vmatpush1.bf16.msra.mxu0 %v1221
    %3828 = vmatprep.subr.bf16.mxu0 %v1218
    %3829 = vmatpush1.bf16.msra.mxu0 %v1217
    %3830 = vmatprep.subr.bf16.mxu0 %v1214
    %3831 = vmatpush1.bf16.msra.mxu0 %v1213
    %3832 = vmatprep.subr.bf16.mxu0 %v1210
    %3833 = vmatpush1.bf16.msra.mxu0 %v1209
    %3834 = vmatprep.subr.bf16.mxu0 0
    %3835 = vmatpush2.bf16.msra.mxu0 0
    %3836 = vmatprep.subr.bf16.mxu0 0
    %3837 = vmatpush2.bf16.msra.mxu0 0
    %3838 = vmatprep.subr.bf16.mxu0 0
    %3839 = vmatpush2.bf16.msra.mxu0 0
    %3840 = vmatprep.subr.bf16.mxu0 0
    %3841 = vmatpush2.bf16.msra.mxu0 0
    %3842 = vmatprep.subr.bf16.mxu0 0
    %3843 = vmatpush2.bf16.msra.mxu0 0
    %3844 = vmatprep.subr.bf16.mxu0 0
    %3845 = vmatpush2.bf16.msra.mxu0 0
    %3846 = vmatprep.subr.bf16.mxu0 0
    %3847 = vmatpush2.bf16.msra.mxu0 0
    %3848 = vmatprep.subr.bf16.mxu0 0
    %3849 = vmatpush2.bf16.msra.mxu0 0
    %3850 = vmatprep.mubr.bf16.mxu0 0
    %3851 = vmatmul.mubr.bf16.gmra.mxu0 %v3616
    %v3852 = vpop.f32.mrf.mxu0
    %v3853 = vadd.f32 0.0, %v3852
    %v3854 = vpop.f32.mrf.mxu0
    %v3855 = vadd.f32 0.0, %v3854
    %v3856 = vpop.f32.mrf.mxu0
    %v3857 = vadd.f32 0.0, %v3856
    %v3858 = vpop.f32.mrf.mxu0
    %v3859 = vadd.f32 0.0, %v3858
    %3860 = vdwg.mxu0
    %3861 = vmatprep.subr.bf16.mxu0 %v1482
    %3862 = vmatpush1.bf16.msra.mxu0 %v1481
    %3863 = vmatprep.subr.bf16.mxu0 %v1478
    %3864 = vmatpush1.bf16.msra.mxu0 %v1477
    %3865 = vmatprep.subr.bf16.mxu0 %v1474
    %3866 = vmatpush1.bf16.msra.mxu0 %v1473
    %3867 = vmatprep.subr.bf16.mxu0 %v1470
    %3868 = vmatpush1.bf16.msra.mxu0 %v1469
    %3869 = vmatprep.subr.bf16.mxu0 %v1466
    %3870 = vmatpush1.bf16.msra.mxu0 %v1465
    %3871 = vmatprep.subr.bf16.mxu0 %v1462
    %3872 = vmatpush1.bf16.msra.mxu0 %v1461
    %3873 = vmatprep.subr.bf16.mxu0 %v1458
    %3874 = vmatpush1.bf16.msra.mxu0 %v1457
    %3875 = vmatprep.subr.bf16.mxu0 %v1454
    %3876 = vmatpush1.bf16.msra.mxu0 %v1453
    %3877 = vmatprep.subr.bf16.mxu0 0
    %3878 = vmatpush2.bf16.msra.mxu0 0
    %3879 = vmatprep.subr.bf16.mxu0 0
    %3880 = vmatpush2.bf16.msra.mxu0 0
    %3881 = vmatprep.subr.bf16.mxu0 0
    %3882 = vmatpush2.bf16.msra.mxu0 0
    %3883 = vmatprep.subr.bf16.mxu0 0
    %3884 = vmatpush2.bf16.msra.mxu0 0
    %3885 = vmatprep.subr.bf16.mxu0 0
    %3886 = vmatpush2.bf16.msra.mxu0 0
    %3887 = vmatprep.subr.bf16.mxu0 0
    %3888 = vmatpush2.bf16.msra.mxu0 0
    %3889 = vmatprep.subr.bf16.mxu0 0
    %3890 = vmatpush2.bf16.msra.mxu0 0
    %3891 = vmatprep.subr.bf16.mxu0 0
    %3892 = vmatpush2.bf16.msra.mxu0 0
    %3893 = vmatprep.mubr.bf16.mxu0 0
    %3894 = vmatmul.mubr.bf16.gmra.mxu0 %v3774
    %v3895 = vpop.f32.mrf.mxu0
    %v3896 = vadd.f32 %v3810, %v3895
    %v3897 = vpop.f32.mrf.mxu0
    %v3898 = vadd.f32 %v3812, %v3897
    %v3899 = vpop.f32.mrf.mxu0
    %v3900 = vadd.f32 %v3814, %v3899
    %v3901 = vpop.f32.mrf.mxu0
    %v3902 = vadd.f32 %v3816, %v3901
    %3903 = vdwg.mxu0
    %3904 = vmatprep.subr.bf16.mxu0 %v1484
    %3905 = vmatpush1.bf16.msra.mxu0 %v1483
    %3906 = vmatprep.subr.bf16.mxu0 %v1480
    %3907 = vmatpush1.bf16.msra.mxu0 %v1479
    %3908 = vmatprep.subr.bf16.mxu0 %v1476
    %3909 = vmatpush1.bf16.msra.mxu0 %v1475
    %3910 = vmatprep.subr.bf16.mxu0 %v1472
    %3911 = vmatpush1.bf16.msra.mxu0 %v1471
    %3912 = vmatprep.subr.bf16.mxu0 %v1468
    %3913 = vmatpush1.bf16.msra.mxu0 %v1467
    %3914 = vmatprep.subr.bf16.mxu0 %v1464
    %3915 = vmatpush1.bf16.msra.mxu0 %v1463
    %3916 = vmatprep.subr.bf16.mxu0 %v1460
    %3917 = vmatpush1.bf16.msra.mxu0 %v1459
    %3918 = vmatprep.subr.bf16.mxu0 %v1456
    %3919 = vmatpush1.bf16.msra.mxu0 %v1455
    %3920 = vmatprep.subr.bf16.mxu0 0
    %3921 = vmatpush2.bf16.msra.mxu0 0
    %3922 = vmatprep.subr.bf16.mxu0 0
    %3923 = vmatpush2.bf16.msra.mxu0 0
    %3924 = vmatprep.subr.bf16.mxu0 0
    %3925 = vmatpush2.bf16.msra.mxu0 0
    %3926 = vmatprep.subr.bf16.mxu0 0
    %3927 = vmatpush2.bf16.msra.mxu0 0
    %3928 = vmatprep.subr.bf16.mxu0 0
    %3929 = vmatpush2.bf16.msra.mxu0 0
    %3930 = vmatprep.subr.bf16.mxu0 0
    %3931 = vmatpush2.bf16.msra.mxu0 0
    %3932 = vmatprep.subr.bf16.mxu0 0
    %3933 = vmatpush2.bf16.msra.mxu0 0
    %3934 = vmatprep.subr.bf16.mxu0 0
    %3935 = vmatpush2.bf16.msra.mxu0 0
    %3936 = vmatprep.mubr.bf16.mxu0 0
    %3937 = vmatmul.mubr.bf16.gmra.mxu0 %v3774
    %v3938 = vpop.f32.mrf.mxu0
    %v3939 = vadd.f32 %v3853, %v3938
    %v3940 = vpop.f32.mrf.mxu0
    %v3941 = vadd.f32 %v3855, %v3940
    %v3942 = vpop.f32.mrf.mxu0
    %v3943 = vadd.f32 %v3857, %v3942
    %v3944 = vpop.f32.mrf.mxu0
    %v3945 = vadd.f32 %v3859, %v3944
    %3946 = vdwg.mxu0
    %v3947 = vadd.f32 %v3896, %v1608
    %v3948 = vadd.f32 %v3898, %v1612
    %v3949 = vadd.f32 %v3939, %v1616
    %v3950 = vadd.f32 %v3941, %v1620
    %v3951 = vadd.f32 %v3900, %v1608
    %v3952 = vadd.f32 %v3902, %v1612
    %v3953 = vadd.f32 %v3943, %v1616
    %v3954 = vadd.f32 %v3945, %v1620
    %v3955 = vxor.u32 %v3947, 2147483648
    %v3956 = vxor.u32 %v3951, 2147483648
    %v3957 = vmul.f32 %v3955, 1.442695
    %v3958 = vpow.pop %v3957
    %v3959 = vmul.f32 %v3956, 1.442695
    %v3960 = vpow.pop %v3959
    %v3961 = vadd.f32 %v3958, 1.0
    %v3962 = vadd.f32 %v3960, 1.0
    %v3963 = vrcp.pop %v3961
    %v3964 = vmul.f32 1.0, %v3963
    %v3965 = vrcp.pop %v3962
    %v3966 = vmul.f32 1.0, %v3965
    %v3967 = vxor.u32 %v3948, 2147483648
    %v3968 = vxor.u32 %v3952, 2147483648
    %v3969 = vmul.f32 %v3967, 1.442695
    %v3970 = vpow.pop %v3969
    %v3971 = vmul.f32 %v3968, 1.442695
    %v3972 = vpow.pop %v3971
    %v3973 = vadd.f32 %v3970, 1.0
    %v3974 = vadd.f32 %v3972, 1.0
    %v3975 = vrcp.pop %v3973
    %v3976 = vmul.f32 1.0, %v3975
    %v3977 = vrcp.pop %v3974
    %v3978 = vmul.f32 1.0, %v3977
    %v3979 = vtanh.pop %v3949
    %v3980 = vtanh.pop %v3953
    %v3981 = vxor.u32 %v3950, 2147483648
    %v3982 = vxor.u32 %v3954, 2147483648
    %v3983 = vmul.f32 %v3981, 1.442695
    %v3984 = vpow.pop %v3983
    %v3985 = vmul.f32 %v3982, 1.442695
    %v3986 = vpow.pop %v3985
    %v3987 = vadd.f32 %v3984, 1.0
    %v3988 = vadd.f32 %v3986, 1.0
    %v3989 = vrcp.pop %v3987
    %v3990 = vmul.f32 1.0, %v3989
    %v3991 = vrcp.pop %v3988
    %v3992 = vmul.f32 1.0, %v3991
    %v3993 = vmul.f32 %v3976, %v3610
    %v3994 = vmul.f32 %v3978, %v3611
    %v3995 = vmul.f32 %v3964, %v3979
    %v3996 = vmul.f32 %v3966, %v3980
    %v3997 = vadd.f32 %v3993, %v3995
    %v3998 = vadd.f32 %v3994, %v3996
    %v3999 = vtanh.pop %v3997
    %v4000 = vtanh.pop %v3998
    %v4001 = vmul.f32 %v3990, %v3999
    %v4002 = vmul.f32 %v3992, %v4000
    %v4003 = vpack.c.bf16 %v4002, %v4001
    %s4004 = smul.u32 14, 4
    %s4005 = smul.addr %s4004, 4
    %s4006 = scalar_lea.vmem [#allocation2], %s4005
    %v4007 = vld [vmem:[%s4006] sm:$0xff]
    %v4008 = vld [vmem:[%s4006 + $0x8] sm:$0xff]
    %v4009 = vld [vmem:[%s4006 + $0x10] sm:$0xff]
    %v4010 = vld [vmem:[%s4006 + $0x18] sm:$0xff]
    %v4011 = vunpack.c.l.bf16 %v4007
    %v4012 = vunpack.c.h.bf16 %v4007
    %v4013 = vunpack.c.l.bf16 %v4008
    %v4014 = vunpack.c.h.bf16 %v4008
    %v4015 = vunpack.c.l.bf16 %v4009
    %v4016 = vunpack.c.h.bf16 %v4009
    %v4017 = vunpack.c.l.bf16 %v4010
    %v4018 = vunpack.c.h.bf16 %v4010
    %4019 = vmatprep.subr.bf16.mxu0 %v863
    %4020 = vmatpush1.bf16.msra.mxu0 %v862
    %4021 = vmatprep.subr.bf16.mxu0 %v859
    %4022 = vmatpush1.bf16.msra.mxu0 %v858
    %4023 = vmatprep.subr.bf16.mxu0 %v855
    %4024 = vmatpush1.bf16.msra.mxu0 %v854
    %4025 = vmatprep.subr.bf16.mxu0 %v851
    %4026 = vmatpush1.bf16.msra.mxu0 %v850
    %4027 = vmatprep.subr.bf16.mxu0 %v847
    %4028 = vmatpush1.bf16.msra.mxu0 %v846
    %4029 = vmatprep.subr.bf16.mxu0 %v843
    %4030 = vmatpush1.bf16.msra.mxu0 %v842
    %4031 = vmatprep.subr.bf16.mxu0 %v839
    %4032 = vmatpush1.bf16.msra.mxu0 %v838
    %4033 = vmatprep.subr.bf16.mxu0 %v835
    %4034 = vmatpush1.bf16.msra.mxu0 %v834
    %4035 = vmatprep.subr.bf16.mxu0 0
    %4036 = vmatpush2.bf16.msra.mxu0 0
    %4037 = vmatprep.subr.bf16.mxu0 0
    %4038 = vmatpush2.bf16.msra.mxu0 0
    %4039 = vmatprep.subr.bf16.mxu0 0
    %4040 = vmatpush2.bf16.msra.mxu0 0
    %4041 = vmatprep.subr.bf16.mxu0 0
    %4042 = vmatpush2.bf16.msra.mxu0 0
    %4043 = vmatprep.subr.bf16.mxu0 0
    %4044 = vmatpush2.bf16.msra.mxu0 0
    %4045 = vmatprep.subr.bf16.mxu0 0
    %4046 = vmatpush2.bf16.msra.mxu0 0
    %4047 = vmatprep.subr.bf16.mxu0 0
    %4048 = vmatpush2.bf16.msra.mxu0 0
    %4049 = vmatprep.subr.bf16.mxu0 0
    %4050 = vmatpush2.bf16.msra.mxu0 0
    %4051 = vmatprep.mubr.bf16.mxu0 0
    %4052 = vmatmul.mubr.bf16.gmra.mxu0 %v3774
    %v4053 = vpop.f32.mrf.mxu0
    %v4054 = vadd.f32 0.0, %v4053
    %v4055 = vpop.f32.mrf.mxu0
    %v4056 = vadd.f32 0.0, %v4055
    %v4057 = vpop.f32.mrf.mxu0
    %v4058 = vadd.f32 0.0, %v4057
    %v4059 = vpop.f32.mrf.mxu0
    %v4060 = vadd.f32 0.0, %v4059
    %4061 = vdwg.mxu0
    %4062 = vmatprep.subr.bf16.mxu0 %v865
    %4063 = vmatpush1.bf16.msra.mxu0 %v864
    %4064 = vmatprep.subr.bf16.mxu0 %v861
    %4065 = vmatpush1.bf16.msra.mxu0 %v860
    %4066 = vmatprep.subr.bf16.mxu0 %v857
    %4067 = vmatpush1.bf16.msra.mxu0 %v856
    %4068 = vmatprep.subr.bf16.mxu0 %v853
    %4069 = vmatpush1.bf16.msra.mxu0 %v852
    %4070 = vmatprep.subr.bf16.mxu0 %v849
    %4071 = vmatpush1.bf16.msra.mxu0 %v848
    %4072 = vmatprep.subr.bf16.mxu0 %v845
    %4073 = vmatpush1.bf16.msra.mxu0 %v844
    %4074 = vmatprep.subr.bf16.mxu0 %v841
    %4075 = vmatpush1.bf16.msra.mxu0 %v840
    %4076 = vmatprep.subr.bf16.mxu0 %v837
    %4077 = vmatpush1.bf16.msra.mxu0 %v836
    %4078 = vmatprep.subr.bf16.mxu0 0
    %4079 = vmatpush2.bf16.msra.mxu0 0
    %4080 = vmatprep.subr.bf16.mxu0 0
    %4081 = vmatpush2.bf16.msra.mxu0 0
    %4082 = vmatprep.subr.bf16.mxu0 0
    %4083 = vmatpush2.bf16.msra.mxu0 0
    %4084 = vmatprep.subr.bf16.mxu0 0
    %4085 = vmatpush2.bf16.msra.mxu0 0
    %4086 = vmatprep.subr.bf16.mxu0 0
    %4087 = vmatpush2.bf16.msra.mxu0 0
    %4088 = vmatprep.subr.bf16.mxu0 0
    %4089 = vmatpush2.bf16.msra.mxu0 0
    %4090 = vmatprep.subr.bf16.mxu0 0
    %4091 = vmatpush2.bf16.msra.mxu0 0
    %4092 = vmatprep.subr.bf16.mxu0 0
    %4093 = vmatpush2.bf16.msra.mxu0 0
    %4094 = vmatprep.mubr.bf16.mxu0 0
    %4095 = vmatmul.mubr.bf16.gmra.mxu0 %v3774
    %v4096 = vpop.f32.mrf.mxu0
    %v4097 = vadd.f32 0.0, %v4096
    %v4098 = vpop.f32.mrf.mxu0
    %v4099 = vadd.f32 0.0, %v4098
    %v4100 = vpop.f32.mrf.mxu0
    %v4101 = vadd.f32 0.0, %v4100
    %v4102 = vpop.f32.mrf.mxu0
    %v4103 = vadd.f32 0.0, %v4102
    %4104 = vdwg.mxu0
    %v4105 = vadd.f32 %v4011, %v4054
    %v4106 = vadd.f32 %v4012, %v4056
    %v4107 = vadd.f32 %v4013, %v4097
    %v4108 = vadd.f32 %v4014, %v4099
    %v4109 = vadd.f32 %v4015, %v4058
    %v4110 = vadd.f32 %v4016, %v4060
    %v4111 = vadd.f32 %v4017, %v4101
    %v4112 = vadd.f32 %v4018, %v4103
    %v4113 = vxor.u32 %v4105, 2147483648
    %v4114 = vxor.u32 %v4109, 2147483648
    %v4115 = vmul.f32 %v4113, 1.442695
    %v4116 = vpow.pop %v4115
    %v4117 = vmul.f32 %v4114, 1.442695
    %v4118 = vpow.pop %v4117
    %v4119 = vadd.f32 %v4116, 1.0
    %v4120 = vadd.f32 %v4118, 1.0
    %v4121 = vrcp.pop %v4119
    %v4122 = vmul.f32 1.0, %v4121
    %v4123 = vrcp.pop %v4120
    %v4124 = vmul.f32 1.0, %v4123
    %v4125 = vxor.u32 %v4106, 2147483648
    %v4126 = vxor.u32 %v4110, 2147483648
    %v4127 = vmul.f32 %v4125, 1.442695
    %v4128 = vpow.pop %v4127
    %v4129 = vmul.f32 %v4126, 1.442695
    %v4130 = vpow.pop %v4129
    %v4131 = vadd.f32 %v4128, 1.0
    %v4132 = vadd.f32 %v4130, 1.0
    %v4133 = vrcp.pop %v4131
    %v4134 = vmul.f32 1.0, %v4133
    %v4135 = vrcp.pop %v4132
    %v4136 = vmul.f32 1.0, %v4135
    %v4137 = vtanh.pop %v4107
    %v4138 = vtanh.pop %v4111
    %v4139 = vxor.u32 %v4108, 2147483648
    %v4140 = vxor.u32 %v4112, 2147483648
    %v4141 = vmul.f32 %v4139, 1.442695
    %v4142 = vpow.pop %v4141
    %v4143 = vmul.f32 %v4140, 1.442695
    %v4144 = vpow.pop %v4143
    %v4145 = vadd.f32 %v4142, 1.0
    %v4146 = vadd.f32 %v4144, 1.0
    %v4147 = vrcp.pop %v4145
    %v4148 = vmul.f32 1.0, %v4147
    %v4149 = vrcp.pop %v4146
    %v4150 = vmul.f32 1.0, %v4149
    %v4151 = vmul.f32 %v4134, %v3768
    %v4152 = vmul.f32 %v4136, %v3769
    %v4153 = vmul.f32 %v4122, %v4137
    %v4154 = vmul.f32 %v4124, %v4138
    %v4155 = vadd.f32 %v4151, %v4153
    %v4156 = vadd.f32 %v4152, %v4154
    %v4157 = vtanh.pop %v4155
    %v4158 = vtanh.pop %v4156
    %v4159 = vmul.f32 %v4148, %v4157
    %v4160 = vmul.f32 %v4150, %v4158
    %v4161 = vpack.c.bf16 %v4160, %v4159
    %4162 = vmatprep.subr.bf16.mxu0 %v1236
    %4163 = vmatpush1.bf16.msra.mxu0 %v1235
    %4164 = vmatprep.subr.bf16.mxu0 %v1232
    %4165 = vmatpush1.bf16.msra.mxu0 %v1231
    %4166 = vmatprep.subr.bf16.mxu0 %v1228
    %4167 = vmatpush1.bf16.msra.mxu0 %v1227
    %4168 = vmatprep.subr.bf16.mxu0 %v1224
    %4169 = vmatpush1.bf16.msra.mxu0 %v1223
    %4170 = vmatprep.subr.bf16.mxu0 %v1220
    %4171 = vmatpush1.bf16.msra.mxu0 %v1219
    %4172 = vmatprep.subr.bf16.mxu0 %v1216
    %4173 = vmatpush1.bf16.msra.mxu0 %v1215
    %4174 = vmatprep.subr.bf16.mxu0 %v1212
    %4175 = vmatpush1.bf16.msra.mxu0 %v1211
    %4176 = vmatprep.subr.bf16.mxu0 %v1208
    %4177 = vmatpush1.bf16.msra.mxu0 %v1207
    %4178 = vmatprep.subr.bf16.mxu0 0
    %4179 = vmatpush2.bf16.msra.mxu0 0
    %4180 = vmatprep.subr.bf16.mxu0 0
    %4181 = vmatpush2.bf16.msra.mxu0 0
    %4182 = vmatprep.subr.bf16.mxu0 0
    %4183 = vmatpush2.bf16.msra.mxu0 0
    %4184 = vmatprep.subr.bf16.mxu0 0
    %4185 = vmatpush2.bf16.msra.mxu0 0
    %4186 = vmatprep.subr.bf16.mxu0 0
    %4187 = vmatpush2.bf16.msra.mxu0 0
    %4188 = vmatprep.subr.bf16.mxu0 0
    %4189 = vmatpush2.bf16.msra.mxu0 0
    %4190 = vmatprep.subr.bf16.mxu0 0
    %4191 = vmatpush2.bf16.msra.mxu0 0
    %4192 = vmatprep.subr.bf16.mxu0 0
    %4193 = vmatpush2.bf16.msra.mxu0 0
    %4194 = vmatprep.mubr.bf16.mxu0 0
    %4195 = vmatmul.mubr.bf16.gmra.mxu0 %v4003
    %v4196 = vpop.f32.mrf.mxu0
    %v4197 = vadd.f32 0.0, %v4196
    %v4198 = vpop.f32.mrf.mxu0
    %v4199 = vadd.f32 0.0, %v4198
    %v4200 = vpop.f32.mrf.mxu0
    %v4201 = vadd.f32 0.0, %v4200
    %v4202 = vpop.f32.mrf.mxu0
    %v4203 = vadd.f32 0.0, %v4202
    %4204 = vdwg.mxu0
    %4205 = vmatprep.subr.bf16.mxu0 %v1238
    %4206 = vmatpush1.bf16.msra.mxu0 %v1237
    %4207 = vmatprep.subr.bf16.mxu0 %v1234
    %4208 = vmatpush1.bf16.msra.mxu0 %v1233
    %4209 = vmatprep.subr.bf16.mxu0 %v1230
    %4210 = vmatpush1.bf16.msra.mxu0 %v1229
    %4211 = vmatprep.subr.bf16.mxu0 %v1226
    %4212 = vmatpush1.bf16.msra.mxu0 %v1225
    %4213 = vmatprep.subr.bf16.mxu0 %v1222
    %4214 = vmatpush1.bf16.msra.mxu0 %v1221
    %4215 = vmatprep.subr.bf16.mxu0 %v1218
    %4216 = vmatpush1.bf16.msra.mxu0 %v1217
    %4217 = vmatprep.subr.bf16.mxu0 %v1214
    %4218 = vmatpush1.bf16.msra.mxu0 %v1213
    %4219 = vmatprep.subr.bf16.mxu0 %v1210
    %4220 = vmatpush1.bf16.msra.mxu0 %v1209
    %4221 = vmatprep.subr.bf16.mxu0 0
    %4222 = vmatpush2.bf16.msra.mxu0 0
    %4223 = vmatprep.subr.bf16.mxu0 0
    %4224 = vmatpush2.bf16.msra.mxu0 0
    %4225 = vmatprep.subr.bf16.mxu0 0
    %4226 = vmatpush2.bf16.msra.mxu0 0
    %4227 = vmatprep.subr.bf16.mxu0 0
    %4228 = vmatpush2.bf16.msra.mxu0 0
    %4229 = vmatprep.subr.bf16.mxu0 0
    %4230 = vmatpush2.bf16.msra.mxu0 0
    %4231 = vmatprep.subr.bf16.mxu0 0
    %4232 = vmatpush2.bf16.msra.mxu0 0
    %4233 = vmatprep.subr.bf16.mxu0 0
    %4234 = vmatpush2.bf16.msra.mxu0 0
    %4235 = vmatprep.subr.bf16.mxu0 0
    %4236 = vmatpush2.bf16.msra.mxu0 0
    %4237 = vmatprep.mubr.bf16.mxu0 0
    %4238 = vmatmul.mubr.bf16.gmra.mxu0 %v4003
    %v4239 = vpop.f32.mrf.mxu0
    %v4240 = vadd.f32 0.0, %v4239
    %v4241 = vpop.f32.mrf.mxu0
    %v4242 = vadd.f32 0.0, %v4241
    %v4243 = vpop.f32.mrf.mxu0
    %v4244 = vadd.f32 0.0, %v4243
    %v4245 = vpop.f32.mrf.mxu0
    %v4246 = vadd.f32 0.0, %v4245
    %4247 = vdwg.mxu0
    %4248 = vmatprep.subr.bf16.mxu0 %v1482
    %4249 = vmatpush1.bf16.msra.mxu0 %v1481
    %4250 = vmatprep.subr.bf16.mxu0 %v1478
    %4251 = vmatpush1.bf16.msra.mxu0 %v1477
    %4252 = vmatprep.subr.bf16.mxu0 %v1474
    %4253 = vmatpush1.bf16.msra.mxu0 %v1473
    %4254 = vmatprep.subr.bf16.mxu0 %v1470
    %4255 = vmatpush1.bf16.msra.mxu0 %v1469
    %4256 = vmatprep.subr.bf16.mxu0 %v1466
    %4257 = vmatpush1.bf16.msra.mxu0 %v1465
    %4258 = vmatprep.subr.bf16.mxu0 %v1462
    %4259 = vmatpush1.bf16.msra.mxu0 %v1461
    %4260 = vmatprep.subr.bf16.mxu0 %v1458
    %4261 = vmatpush1.bf16.msra.mxu0 %v1457
    %4262 = vmatprep.subr.bf16.mxu0 %v1454
    %4263 = vmatpush1.bf16.msra.mxu0 %v1453
    %4264 = vmatprep.subr.bf16.mxu0 0
    %4265 = vmatpush2.bf16.msra.mxu0 0
    %4266 = vmatprep.subr.bf16.mxu0 0
    %4267 = vmatpush2.bf16.msra.mxu0 0
    %4268 = vmatprep.subr.bf16.mxu0 0
    %4269 = vmatpush2.bf16.msra.mxu0 0
    %4270 = vmatprep.subr.bf16.mxu0 0
    %4271 = vmatpush2.bf16.msra.mxu0 0
    %4272 = vmatprep.subr.bf16.mxu0 0
    %4273 = vmatpush2.bf16.msra.mxu0 0
    %4274 = vmatprep.subr.bf16.mxu0 0
    %4275 = vmatpush2.bf16.msra.mxu0 0
    %4276 = vmatprep.subr.bf16.mxu0 0
    %4277 = vmatpush2.bf16.msra.mxu0 0
    %4278 = vmatprep.subr.bf16.mxu0 0
    %4279 = vmatpush2.bf16.msra.mxu0 0
    %4280 = vmatprep.mubr.bf16.mxu0 0
    %4281 = vmatmul.mubr.bf16.gmra.mxu0 %v4161
    %v4282 = vpop.f32.mrf.mxu0
    %v4283 = vadd.f32 %v4197, %v4282
    %v4284 = vpop.f32.mrf.mxu0
    %v4285 = vadd.f32 %v4199, %v4284
    %v4286 = vpop.f32.mrf.mxu0
    %v4287 = vadd.f32 %v4201, %v4286
    %v4288 = vpop.f32.mrf.mxu0
    %v4289 = vadd.f32 %v4203, %v4288
    %4290 = vdwg.mxu0
    %4291 = vmatprep.subr.bf16.mxu0 %v1484
    %4292 = vmatpush1.bf16.msra.mxu0 %v1483
    %4293 = vmatprep.subr.bf16.mxu0 %v1480
    %4294 = vmatpush1.bf16.msra.mxu0 %v1479
    %4295 = vmatprep.subr.bf16.mxu0 %v1476
    %4296 = vmatpush1.bf16.msra.mxu0 %v1475
    %4297 = vmatprep.subr.bf16.mxu0 %v1472
    %4298 = vmatpush1.bf16.msra.mxu0 %v1471
    %4299 = vmatprep.subr.bf16.mxu0 %v1468
    %4300 = vmatpush1.bf16.msra.mxu0 %v1467
    %4301 = vmatprep.subr.bf16.mxu0 %v1464
    %4302 = vmatpush1.bf16.msra.mxu0 %v1463
    %4303 = vmatprep.subr.bf16.mxu0 %v1460
    %4304 = vmatpush1.bf16.msra.mxu0 %v1459
    %4305 = vmatprep.subr.bf16.mxu0 %v1456
    %4306 = vmatpush1.bf16.msra.mxu0 %v1455
    %4307 = vmatprep.subr.bf16.mxu0 0
    %4308 = vmatpush2.bf16.msra.mxu0 0
    %4309 = vmatprep.subr.bf16.mxu0 0
    %4310 = vmatpush2.bf16.msra.mxu0 0
    %4311 = vmatprep.subr.bf16.mxu0 0
    %4312 = vmatpush2.bf16.msra.mxu0 0
    %4313 = vmatprep.subr.bf16.mxu0 0
    %4314 = vmatpush2.bf16.msra.mxu0 0
    %4315 = vmatprep.subr.bf16.mxu0 0
    %4316 = vmatpush2.bf16.msra.mxu0 0
    %4317 = vmatprep.subr.bf16.mxu0 0
    %4318 = vmatpush2.bf16.msra.mxu0 0
    %4319 = vmatprep.subr.bf16.mxu0 0
    %4320 = vmatpush2.bf16.msra.mxu0 0
    %4321 = vmatprep.subr.bf16.mxu0 0
    %4322 = vmatpush2.bf16.msra.mxu0 0
    %4323 = vmatprep.mubr.bf16.mxu0 0
    %4324 = vmatmul.mubr.bf16.gmra.mxu0 %v4161
    %v4325 = vpop.f32.mrf.mxu0
    %v4326 = vadd.f32 %v4240, %v4325
    %v4327 = vpop.f32.mrf.mxu0
    %v4328 = vadd.f32 %v4242, %v4327
    %v4329 = vpop.f32.mrf.mxu0
    %v4330 = vadd.f32 %v4244, %v4329
    %v4331 = vpop.f32.mrf.mxu0
    %v4332 = vadd.f32 %v4246, %v4331
    %4333 = vdwg.mxu0
    %v4334 = vadd.f32 %v4283, %v1608
    %v4335 = vadd.f32 %v4285, %v1612
    %v4336 = vadd.f32 %v4326, %v1616
    %v4337 = vadd.f32 %v4328, %v1620
    %v4338 = vadd.f32 %v4287, %v1608
    %v4339 = vadd.f32 %v4289, %v1612
    %v4340 = vadd.f32 %v4330, %v1616
    %v4341 = vadd.f32 %v4332, %v1620
    %v4342 = vxor.u32 %v4334, 2147483648
    %v4343 = vxor.u32 %v4338, 2147483648
    %v4344 = vmul.f32 %v4342, 1.442695
    %v4345 = vpow.pop %v4344
    %v4346 = vmul.f32 %v4343, 1.442695
    %v4347 = vpow.pop %v4346
    %v4348 = vadd.f32 %v4345, 1.0
    %v4349 = vadd.f32 %v4347, 1.0
    %v4350 = vrcp.pop %v4348
    %v4351 = vmul.f32 1.0, %v4350
    %v4352 = vrcp.pop %v4349
    %v4353 = vmul.f32 1.0, %v4352
    %v4354 = vxor.u32 %v4335, 2147483648
    %v4355 = vxor.u32 %v4339, 2147483648
    %v4356 = vmul.f32 %v4354, 1.442695
    %v4357 = vpow.pop %v4356
    %v4358 = vmul.f32 %v4355, 1.442695
    %v4359 = vpow.pop %v4358
    %v4360 = vadd.f32 %v4357, 1.0
    %v4361 = vadd.f32 %v4359, 1.0
    %v4362 = vrcp.pop %v4360
    %v4363 = vmul.f32 1.0, %v4362
    %v4364 = vrcp.pop %v4361
    %v4365 = vmul.f32 1.0, %v4364
    %v4366 = vtanh.pop %v4336
    %v4367 = vtanh.pop %v4340
    %v4368 = vxor.u32 %v4337, 2147483648
    %v4369 = vxor.u32 %v4341, 2147483648
    %v4370 = vmul.f32 %v4368, 1.442695
    %v4371 = vpow.pop %v4370
    %v4372 = vmul.f32 %v4369, 1.442695
    %v4373 = vpow.pop %v4372
    %v4374 = vadd.f32 %v4371, 1.0
    %v4375 = vadd.f32 %v4373, 1.0
    %v4376 = vrcp.pop %v4374
    %v4377 = vmul.f32 1.0, %v4376
    %v4378 = vrcp.pop %v4375
    %v4379 = vmul.f32 1.0, %v4378
    %v4380 = vmul.f32 %v4363, %v3997
    %v4381 = vmul.f32 %v4365, %v3998
    %v4382 = vmul.f32 %v4351, %v4366
    %v4383 = vmul.f32 %v4353, %v4367
    %v4384 = vadd.f32 %v4380, %v4382
    %v4385 = vadd.f32 %v4381, %v4383
    %v4386 = vtanh.pop %v4384
    %v4387 = vtanh.pop %v4385
    %v4388 = vmul.f32 %v4377, %v4386
    %v4389 = vmul.f32 %v4379, %v4387
    %v4390 = vpack.c.bf16 %v4389, %v4388
    %v4392 = vunpack.c.l.b16 %v4161
    %v4393 = vunpack.c.h.b16 %v4161
    %v4394 = vpack.c.b16 %v4392, %v4392
    %v4395 = vpack.c.b16 %v4393, %v4393
    %4398 = vst [vmem:[#allocation3] sm:$0xf] %v4394
    %4399 = vst [vmem:[#allocation3 + $0x4] sm:$0xf] %v4395
    %4400 = vst [vmem:[#allocation5] sm:$0xff] %v4155
    %4401 = vst [vmem:[#allocation5 + $0x8] sm:$0xff] %v4156
    %v4403 = vunpack.c.l.b16 %v4390
    %v4404 = vunpack.c.h.b16 %v4390
    %v4405 = vpack.c.b16 %v4403, %v4403
    %v4406 = vpack.c.b16 %v4404, %v4404
    %4409 = vst [vmem:[#allocation4] sm:$0xf] %v4405
    %4410 = vst [vmem:[#allocation4 + $0x4] sm:$0xf] %v4406
    %4411 = vst [vmem:[#allocation6] sm:$0xff] %v4384
    %4412 = vst [vmem:[#allocation6 + $0x8] sm:$0xff] %v4385
    // Predicated region
    $region62: #{lstm_forward.1} parent=1 // pred_check
      %p4413 = pneg %p80
    $region63: #{lstm_forward.1} parent=1 // pred_check_branch
      %4415 = sbr.rel (%p4413) target = $region65
    $region64: #{lstm_forward.1} parent=1 // pred_region
      %v4416 = vld [vmem:[%s7] sm:$0xf]
      %v4417 = vld [vmem:[%s7 + $0x4] sm:$0xf]
      %v4418 = vld [vmem:[%s7 + $0x8] sm:$0xf]
      %v4419 = vld [vmem:[%s7 + $0xc] sm:$0xf]
      %v4420 = vld [vmem:[%s7 + $0x10] sm:$0xf]
      %v4421 = vld [vmem:[%s7 + $0x14] sm:$0xf]
      %v4422 = vld [vmem:[%s7 + $0x18] sm:$0xf]
      %v4423 = vld [vmem:[%s7 + $0x1c] sm:$0xf]
      %v4424 = vld [vmem:[%s7 + $0x20] sm:$0xf]
      %v4425 = vld [vmem:[%s7 + $0x24] sm:$0xf]
      %v4426 = vld [vmem:[%s7 + $0x28] sm:$0xf]
      %v4427 = vld [vmem:[%s7 + $0x2c] sm:$0xf]
      %v4428 = vld [vmem:[%s7 + $0x30] sm:$0xf]
      %v4429 = vld [vmem:[%s7 + $0x34] sm:$0xf]
      %v4430 = vld [vmem:[%s7 + $0x38] sm:$0xf]
      %v4431 = vld [vmem:[%s7 + $0x3c] sm:$0xf]
      %v4432 = vld [vmem:[%s8] sm:$0x1]
      %v4434 = vlaneseq
      %v4435 = vshrl.u32 %v4434, 7
      %v4436 = vsub.s32 0, %v4435
      %v4437 = vrot.slane %v4432, %v4436
      %v4455 = vunpack.c.l.b16 %v4416
      %v4456 = vunpack.c.l.b16 %v4417
      %v4457 = vunpack.c.l.b16 %v4418
      %v4458 = vunpack.c.l.b16 %v4419
      %v4459 = vunpack.c.l.b16 %v4420
      %v4460 = vunpack.c.l.b16 %v4421
      %v4461 = vunpack.c.l.b16 %v4422
      %v4462 = vunpack.c.l.b16 %v4423
      %v4463 = vunpack.c.l.b16 %v4424
      %v4464 = vunpack.c.l.b16 %v4425
      %v4465 = vunpack.c.l.b16 %v4426
      %v4466 = vunpack.c.l.b16 %v4427
      %v4467 = vunpack.c.l.b16 %v4428
      %v4468 = vunpack.c.l.b16 %v4429
      %v4469 = vunpack.c.l.b16 %v4430
      %v4470 = vunpack.c.l.b16 %v4431
      %v4471 = vpack.c.b16 %v4456, %v4455
      %v4472 = vpack.c.b16 %v4458, %v4457
      %v4473 = vpack.c.b16 %v4460, %v4459
      %v4474 = vpack.c.b16 %v4462, %v4461
      %v4475 = vpack.c.b16 %v4464, %v4463
      %v4476 = vpack.c.b16 %v4466, %v4465
      %v4477 = vpack.c.b16 %v4468, %v4467
      %v4478 = vpack.c.b16 %v4470, %v4469
      %4487 = vmatprep.subr.bf16.mxu0 0
      %4488 = vmatpush1.bf16.msra.mxu0 %v4478
      %4489 = vmatprep.subr.bf16.mxu0 0
      %4490 = vmatpush1.bf16.msra.mxu0 %v4477
      %4491 = vmatprep.subr.bf16.mxu0 0
      %4492 = vmatpush1.bf16.msra.mxu0 %v4476
      %4493 = vmatprep.subr.bf16.mxu0 0
      %4494 = vmatpush1.bf16.msra.mxu0 %v4475
      %4495 = vmatprep.subr.bf16.mxu0 0
      %4496 = vmatpush1.bf16.msra.mxu0 %v4474
      %4497 = vmatprep.subr.bf16.mxu0 0
      %4498 = vmatpush1.bf16.msra.mxu0 %v4473
      %4499 = vmatprep.subr.bf16.mxu0 0
      %4500 = vmatpush1.bf16.msra.mxu0 %v4472
      %4501 = vmatprep.subr.bf16.mxu0 0
      %4502 = vmatpush1.bf16.msra.mxu0 %v4471
      %4503 = vmatprep.subr.bf16.mxu0 0
      %4504 = vmatpush2.bf16.msra.mxu0 0
      %4505 = vmatprep.subr.bf16.mxu0 0
      %4506 = vmatpush2.bf16.msra.mxu0 0
      %4507 = vmatprep.subr.bf16.mxu0 0
      %4508 = vmatpush2.bf16.msra.mxu0 0
      %4509 = vmatprep.subr.bf16.mxu0 0
      %4510 = vmatpush2.bf16.msra.mxu0 0
      %4511 = vmatprep.subr.bf16.mxu0 0
      %4512 = vmatpush2.bf16.msra.mxu0 0
      %4513 = vmatprep.subr.bf16.mxu0 0
      %4514 = vmatpush2.bf16.msra.mxu0 0
      %4515 = vmatprep.subr.bf16.mxu0 0
      %4516 = vmatpush2.bf16.msra.mxu0 0
      %4517 = vmatprep.subr.bf16.mxu0 0
      %4518 = vmatpush2.bf16.msra.mxu0 0
      %4519 = vmatprep.mubr.bf16.mxu0 0
      %4520 = vmatmul.mubr.bf16.gmra.mxu0 %v4390
      %v4521 = vpop.f32.mrf.mxu0
      %v4522 = vadd.f32 %v4437, %v4521
      %v4523 = vpop.f32.mrf.mxu0
      %v4524 = vpop.f32.mrf.mxu0
      %v4525 = vadd.f32 %v4437, %v4524
      %v4526 = vpop.f32.mrf.mxu0
      %4527 = vdwg.mxu0
      %v4528 = vmax.f32 %v4522, 0.0
      %v4529 = vmax.f32 %v4525, 0.0
      %v4530 = vpack.c.bf16 %v4529, %v4528
      %v4531 = vld [vmem:[%s9] sm:$0xf]
      %v4532 = vld [vmem:[%s9 + $0x4] sm:$0xf]
      %v4533 = vld [vmem:[%s9 + $0x8] sm:$0xf]
      %v4534 = vld [vmem:[%s9 + $0xc] sm:$0xf]
      %v4535 = vld [vmem:[%s9 + $0x10] sm:$0xf]
      %v4536 = vld [vmem:[%s9 + $0x14] sm:$0xf]
      %v4537 = vld [vmem:[%s9 + $0x18] sm:$0xf]
      %v4538 = vld [vmem:[%s9 + $0x1c] sm:$0xf]
      %v4539 = vld [vmem:[%s9 + $0x20] sm:$0xf]
      %v4540 = vld [vmem:[%s9 + $0x24] sm:$0xf]
      %v4541 = vld [vmem:[%s9 + $0x28] sm:$0xf]
      %v4542 = vld [vmem:[%s9 + $0x2c] sm:$0xf]
      %v4543 = vld [vmem:[%s9 + $0x30] sm:$0xf]
      %v4544 = vld [vmem:[%s9 + $0x34] sm:$0xf]
      %v4545 = vld [vmem:[%s9 + $0x38] sm:$0xf]
      %v4546 = vld [vmem:[%s9 + $0x3c] sm:$0xf]
      %v4547 = vld [vmem:[%s10] sm:$0x1]
      %v4549 = vlaneseq
      %v4550 = vshrl.u32 %v4549, 7
      %v4551 = vsub.s32 0, %v4550
      %v4552 = vrot.slane %v4547, %v4551
      %v4570 = vunpack.c.l.b16 %v4531
      %v4571 = vunpack.c.l.b16 %v4532
      %v4572 = vunpack.c.l.b16 %v4533
      %v4573 = vunpack.c.l.b16 %v4534
      %v4574 = vunpack.c.l.b16 %v4535
      %v4575 = vunpack.c.l.b16 %v4536
      %v4576 = vunpack.c.l.b16 %v4537
      %v4577 = vunpack.c.l.b16 %v4538
      %v4578 = vunpack.c.l.b16 %v4539
      %v4579 = vunpack.c.l.b16 %v4540
      %v4580 = vunpack.c.l.b16 %v4541
      %v4581 = vunpack.c.l.b16 %v4542
      %v4582 = vunpack.c.l.b16 %v4543
      %v4583 = vunpack.c.l.b16 %v4544
      %v4584 = vunpack.c.l.b16 %v4545
      %v4585 = vunpack.c.l.b16 %v4546
      %v4586 = vpack.c.b16 %v4571, %v4570
      %v4587 = vpack.c.b16 %v4573, %v4572
      %v4588 = vpack.c.b16 %v4575, %v4574
      %v4589 = vpack.c.b16 %v4577, %v4576
      %v4590 = vpack.c.b16 %v4579, %v4578
      %v4591 = vpack.c.b16 %v4581, %v4580
      %v4592 = vpack.c.b16 %v4583, %v4582
      %v4593 = vpack.c.b16 %v4585, %v4584
      %4602 = vmatprep.subr.bf16.mxu0 0
      %4603 = vmatpush1.bf16.msra.mxu0 %v4593
      %4604 = vmatprep.subr.bf16.mxu0 0
      %4605 = vmatpush1.bf16.msra.mxu0 %v4592
      %4606 = vmatprep.subr.bf16.mxu0 0
      %4607 = vmatpush1.bf16.msra.mxu0 %v4591
      %4608 = vmatprep.subr.bf16.mxu0 0
      %4609 = vmatpush1.bf16.msra.mxu0 %v4590
      %4610 = vmatprep.subr.bf16.mxu0 0
      %4611 = vmatpush1.bf16.msra.mxu0 %v4589
      %4612 = vmatprep.subr.bf16.mxu0 0
      %4613 = vmatpush1.bf16.msra.mxu0 %v4588
      %4614 = vmatprep.subr.bf16.mxu0 0
      %4615 = vmatpush1.bf16.msra.mxu0 %v4587
      %4616 = vmatprep.subr.bf16.mxu0 0
      %4617 = vmatpush1.bf16.msra.mxu0 %v4586
      %4618 = vmatprep.subr.bf16.mxu0 0
      %4619 = vmatpush2.bf16.msra.mxu0 0
      %4620 = vmatprep.subr.bf16.mxu0 0
      %4621 = vmatpush2.bf16.msra.mxu0 0
      %4622 = vmatprep.subr.bf16.mxu0 0
      %4623 = vmatpush2.bf16.msra.mxu0 0
      %4624 = vmatprep.subr.bf16.mxu0 0
      %4625 = vmatpush2.bf16.msra.mxu0 0
      %4626 = vmatprep.subr.bf16.mxu0 0
      %4627 = vmatpush2.bf16.msra.mxu0 0
      %4628 = vmatprep.subr.bf16.mxu0 0
      %4629 = vmatpush2.bf16.msra.mxu0 0
      %4630 = vmatprep.subr.bf16.mxu0 0
      %4631 = vmatpush2.bf16.msra.mxu0 0
      %4632 = vmatprep.subr.bf16.mxu0 0
      %4633 = vmatpush2.bf16.msra.mxu0 0
      %4634 = vmatprep.mubr.bf16.mxu0 0
      %4635 = vmatmul.mubr.bf16.gmra.mxu0 %v4530
      %v4636 = vpop.f32.mrf.mxu0
      %v4637 = vadd.f32 %v4552, %v4636
      %v4638 = vpop.f32.mrf.mxu0
      %v4639 = vpop.f32.mrf.mxu0
      %v4640 = vadd.f32 %v4552, %v4639
      %v4641 = vpop.f32.mrf.mxu0
      %4642 = vdwg.mxu0
      %4643 = vst [vmem:[%s11] sm:$0xff] %v4637
      %4644 = vst [vmem:[%s11 + $0x8] sm:$0xff] %v4640
    $region65: #{lstm_forward.1} parent=1 // pred_fallthru
      _
    // Predicated region
    $region66: #{lstm_forward.1} parent=1 // pred_check
      _
    $region67: #{lstm_forward.1} parent=1 // pred_check_branch
      %4646 = sbr.rel (0) target = $region69
    $region68: #{lstm_forward.1} parent=1 // pred_region
      _
    $region69: #{lstm_forward.1} parent=1 // pred_fallthru
      _
    // Predicated region
    $region70: #{lstm_forward.1} parent=1 // pred_check
      _
    $region71: #{lstm_forward.1} parent=1 // pred_check_branch
      %4648 = sbr.rel (0) target = $region73
    $region72: #{lstm_forward.1} parent=1 // pred_region
      _
    $region73: #{lstm_forward.1} parent=1 // pred_fallthru
      _
    %4649 = vsyncpa [#allocation8], 1
    %4650 = vsyncpa [#allocation10], 1

</llo_original>
